<compile_context>
chip_gen: v6e
topology: v6e:2x2x1
jax: 0.10.0
libtpu: 0.0.40
codegen_flags: <defaults>
</compile_context>

<pallas_src>
import functools

import numpy as np

import jax
import jax.numpy as jnp
from jax.experimental import pallas as pl
from jax.experimental.pallas import tpu as pltpu


VMEM_LIMIT = 48 * 1024 * 1024     # scoped VMEM limit (<= ~48 MiB is safe on v7x)
VMEM_TILE_BUDGET = 40 * 1024 * 1024


def _round_up(x, m):
    return ((x + m - 1) // m) * m


# ----------------------------------------------------------------------------
# Pallas kernels
# ----------------------------------------------------------------------------

def _conv_single_kernel(x_ref, w_ref, b_ref, o_ref, *, slope):
    """Single-K-step im2col matmul: bf16 x bf16 -> f32, fused bias (+LeakyReLU)."""
    acc = jnp.dot(x_ref[...], w_ref[...], preferred_element_type=jnp.float32)
    acc = acc + b_ref[...]                       # (tm, tn) + (1, tn), f32
    if slope is not None:                        # LeakyReLU epilogue in f32
        acc = jnp.where(acc > 0, acc, slope * acc)
    o_ref[...] = acc.astype(o_ref.dtype)


def _conv_mm_tiled_kernel(x_ref, w_ref, b_ref, o_ref, acc_ref, *, slope):
    """Fallback tiled-K matmul with f32 VMEM accumulator (large K only)."""
    @pl.when(pl.program_id(2) == 0)
    def _():
        acc_ref[...] = jnp.zeros_like(acc_ref)

    acc_ref[...] += jnp.dot(x_ref[...], w_ref[...],
                            preferred_element_type=jnp.float32)

    @pl.when(pl.program_id(2) == pl.num_programs(2) - 1)
    def _():
        acc = acc_ref[...] + b_ref[...]
        if slope is not None:
            acc = jnp.where(acc > 0, acc, slope * acc)
        o_ref[...] = acc.astype(o_ref.dtype)


def _pool_scale_kernel(s_ref, invh_ref, invw_ref, o_ref):
    """Scale the 9-tap pooled sum by the factorized 1/valid_count (f32)."""
    o_ref[...] = (s_ref[...] * invh_ref[...] * invw_ref[...]).astype(o_ref.dtype)


# ----------------------------------------------------------------------------
# Conv wrapper (im2col glue + Pallas matmul)
# ----------------------------------------------------------------------------

def _im2col(x, k, stride, pad):
    """x: NHWC -> patches (N*Ho*Wo, k*k*C) in bf16, K ordering (di, dj, c_in)."""
    x = x.astype(jnp.bfloat16)                    # halve gather traffic up front
    N, H, W, C = x.shape
    xp = jnp.pad(x, ((0, 0), (pad, pad), (pad, pad), (0, 0)))
    Ho = (H + 2 * pad - k) // stride + 1
    Wo = (W + 2 * pad - k) // stride + 1
    cols = []
    for di in range(k):
        for dj in range(k):
            cols.append(xp[:, di:di + stride * (Ho - 1) + 1:stride,
                              dj:dj + stride * (Wo - 1) + 1:stride, :])
    patches = jnp.concatenate(cols, axis=-1)      # (N, Ho, Wo, k*k*C)
    # TODO(synk): fuse the tap gather into the matmul kernel (manual DMA over the
    # padded NHWC input with memory_space=pl.ANY) to remove the im2col HBM
    # amplification entirely.
    return patches.reshape(N * Ho * Wo, k * k * C), (N, Ho, Wo)


def conv2d_pallas(x, w_torch, b, *, stride, pad, slope=None,
                  out_dtype=jnp.bfloat16):
    """x: NHWC; w_torch: (Cout, Cin, kh, kw) torch layout; b: (Cout,)."""
    cout, cin, kh, kw = w_torch.shape
    patches, (N, Ho, Wo) = _im2col(x, kh, stride, pad)
    M, K = patches.shape

    # K ordering of patches is (di, dj, c_in) -> transpose weight to match.
    wm = jnp.transpose(w_torch, (2, 3, 1, 0)).reshape(kh * kw * cin, cout)
    wm = wm.astype(jnp.bfloat16)

    # Cout tiling: lane-dense 128/256 for big channel counts, exact (8-aligned)
    # for small Cout so the 1-channel head does not write a 128-wide block.
    if cout >= 256:
        tn = 256
    elif cout >= 128:
        tn = 128
    else:
        tn = _round_up(cout, 8)
    n_pad = _round_up(cout, tn)

    out_bytes = jnp.dtype(out_dtype).itemsize

    # tm: multiple of 16 (bf16 packs two rows per sublane), budget-aware.
    def est_bytes(tm_, tk_):
        # double-buffered inputs + double-buffered output + f32 headroom
        return (2 * (tm_ * tk_ * 2 + tk_ * n_pad * 2)
                + 2 * tm_ * tn * out_bytes + tm_ * tn * 4)

    tm = min(512, _round_up(M, 16))
    while tm > 16 and est_bytes(tm, K) > VMEM_TILE_BUDGET:
        tm = max(16, _round_up(tm // 2, 16))

    b_f32 = b.astype(jnp.float32)

    if est_bytes(tm, K) <= VMEM_TILE_BUDGET:
        # ---- single-K fast path: no accumulator scratch, weight resident ----
        m_pad = _round_up(M, tm)
        patches_p = jnp.pad(patches, ((0, m_pad - M), (0, 0)))
        wm_p = jnp.pad(wm, ((0, 0), (0, n_pad - cout)))
        b_p = jnp.pad(b_f32, (0, n_pad - cout)).reshape(1, n_pad)

        grid = (m_pad // tm, n_pad // tn)
        cost = pl.CostEstimate(
            flops=2 * m_pad * K * n_pad,
            transcendentals=0,
            bytes_accessed=(patches_p.size * 2 + wm_p.size * 2
                            + b_p.size * 4 + m_pad * n_pad * out_bytes))

        out = pl.pallas_call(
            functools.partial(_conv_single_kernel, slope=slope),
            out_shape=jax.ShapeDtypeStruct((m_pad, n_pad), out_dtype),
            grid_spec=pltpu.PrefetchScalarGridSpec(
                num_scalar_prefetch=0,
                grid=grid,
                in_specs=[
                    pl.BlockSpec((tm, K), lambda i, j: (i, 0)),
                    pl.BlockSpec((K, tn), lambda i, j: (0, j)),
                    pl.BlockSpec((1, tn), lambda i, j: (0, j)),
                ],
                out_specs=pl.BlockSpec((tm, tn), lambda i, j: (i, j))),
            compiler_params=pltpu.CompilerParams(
                dimension_semantics=("parallel", "parallel"),
                vmem_limit_bytes=VMEM_LIMIT),
            cost_estimate=cost,
        )(patches_p, wm_p, b_p)
    else:
        # ---- fallback: tiled reduction over K (not hit by this layer plan) ----
        tk = 512
        k_pad = _round_up(K, tk)
        tm_f = min(256, _round_up(M, 16))
        m_pad = _round_up(M, tm_f)
        patches_p = jnp.pad(patches, ((0, m_pad - M), (0, k_pad - K)))
        wm_p = jnp.pad(wm, ((0, k_pad - K), (0, n_pad - cout)))
        b_p = jnp.pad(b_f32, (0, n_pad - cout)).reshape(1, n_pad)

        grid = (m_pad // tm_f, n_pad // tn, k_pad // tk)
        out = pl.pallas_call(
            functools.partial(_conv_mm_tiled_kernel, slope=slope),
            out_shape=jax.ShapeDtypeStruct((m_pad, n_pad), out_dtype),
            grid_spec=pltpu.PrefetchScalarGridSpec(
                num_scalar_prefetch=0,
                grid=grid,
                in_specs=[
                    pl.BlockSpec((tm_f, tk), lambda i, j, k: (i, k)),
                    pl.BlockSpec((tk, tn), lambda i, j, k: (k, j)),
                    pl.BlockSpec((1, tn), lambda i, j, k: (0, j)),
                ],
                out_specs=pl.BlockSpec((tm_f, tn), lambda i, j, k: (i, j)),
                scratch_shapes=[pltpu.VMEM((tm_f, tn), jnp.float32)]),
            compiler_params=pltpu.CompilerParams(
                dimension_semantics=("parallel", "parallel", "arbitrary"),
                vmem_limit_bytes=VMEM_LIMIT),
        )(patches_p, wm_p, b_p)

    return out[:M, :cout].reshape(N, Ho, Wo, cout)


# ----------------------------------------------------------------------------
# AvgPool2d(3, stride=2, padding=1, count_include_pad=False)
# ----------------------------------------------------------------------------

def avgpool_3x3_s2_pallas(x):
    """x: NHWC f32. 9-tap sum via fused XLA slices; Pallas kernel applies the
    statically-computed, factorized 1/valid_count scale."""
    N, H, W, C = x.shape
    k, stride, pad = 3, 2, 1
    Ho = (H + 2 * pad - k) // stride + 1
    Wo = (W + 2 * pad - k) // stride + 1
    xp = jnp.pad(x, ((0, 0), (pad, pad), (pad, pad), (0, 0)))

    s = None
    for di in range(k):
        for dj in range(k):
            tap = xp[:, di:di + stride * (Ho - 1) + 1:stride,
                        dj:dj + stride * (Wo - 1) + 1:stride, :]
            s = tap if s is None else s + tap
    # TODO(synk): fuse the 9-tap strided accumulation into the Pallas kernel via
    # manual halo DMA of the padded rows so `s` never round-trips HBM.
    s = s.astype(jnp.float32).reshape(N, Ho, Wo * C)   # f32 accumulation kept

    # Static valid count (count_include_pad=False) factorizes row x col.
    idx_h = np.arange(Ho) * stride - pad
    cnt_h = np.minimum(idx_h + k, H) - np.maximum(idx_h, 0)
    idx_w = np.arange(Wo) * stride - pad
    cnt_w = np.minimum(idx_w + k, W) - np.maximum(idx_w, 0)
    inv_h = (1.0 / cnt_h).astype(np.float32)                       # (Ho,)
    inv_wc = np.repeat((1.0 / cnt_w).astype(np.float32), C)        # (Wo*C,)

    th = min(256, _round_up(Ho, 8))
    ho_pad = _round_up(Ho, th)
    s_p = jnp.pad(s, ((0, 0), (0, ho_pad - Ho), (0, 0)))
    inv_h_p = np.ones((ho_pad,), np.float32)
    inv_h_p[:Ho] = inv_h
    inv_h_arr = jnp.asarray(inv_h_p).reshape(1, ho_pad, 1)
    inv_w_arr = jnp.asarray(inv_wc).reshape(1, 1, Wo * C)
    WC = Wo * C

    out = pl.pallas_call(
        _pool_scale_kernel,
        out_shape=jax.ShapeDtypeStruct((N, ho_pad, WC), x.dtype),
        grid=(N, ho_pad // th),
        in_specs=[
            pl.BlockSpec((1, th, WC), lambda n, h: (n, h, 0)),
            pl.BlockSpec((1, th, 1), lambda n, h: (0, h, 0)),
            pl.BlockSpec((1, 1, WC), lambda n, h: (0, 0, 0)),
        ],
        out_specs=pl.BlockSpec((1, th, WC), lambda n, h: (n, h, 0)),
        compiler_params=pltpu.CompilerParams(
            dimension_semantics=("parallel", "parallel"),
            vmem_limit_bytes=VMEM_LIMIT),
    )(s_p, inv_h_arr, inv_w_arr)
    return out[:, :Ho, :].reshape(N, Ho, Wo, C)


# ----------------------------------------------------------------------------
# Spectral norm (parameter setup, plain JAX glue)
# ----------------------------------------------------------------------------

def _l2normalize(v, eps=1e-12):
    return v / (jnp.linalg.norm(v) + eps)


def spectral_normalize(w_bar, u, v):
    """One power iteration, as in the forward_pre_hook. w_bar: (Cout, Cin, kh, kw)."""
    # TODO(synk): PyTorch updates the u/v buffers in place each forward; a
    # functional equivalent would return the updated (u, v) and thread them.
    h = w_bar.shape[0]
    wm = w_bar.reshape(h, -1)
    v = _l2normalize(wm.T @ u)
    u = _l2normalize(wm @ v)
    sigma = u @ (wm @ v)
    return w_bar / sigma


# ----------------------------------------------------------------------------
# Model definition / parameter init
# ----------------------------------------------------------------------------

def make_netD_params(key, input_nc, ndf, n_layers):
    """Layer channel plan of NLayerMSDiscriminator (n_layers=3):
       conv(in->ndf, s2) | SN conv(ndf->2ndf, s2) | SN conv(2ndf->4ndf, s2)
       | SN conv(4ndf->8ndf, s1) | SN conv(8ndf->1, s1)   (capped at 512)."""
    kw = 4
    chans = [input_nc, ndf]
    nf = ndf
    for _ in range(1, n_layers):
        nf = min(nf * 2, 512)
        chans.append(nf)
    nf = min(nf * 2, 512)
    chans.append(nf)
    chans.append(1)

    layers = []
    for li in range(len(chans) - 1):
        cin, cout = chans[li], chans[li + 1]
        key, kw_, kb_, ku_, kv_ = jax.random.split(key, 5)
        fan_in = cin * kw * kw
        w = jax.random.normal(kw_, (cout, cin, kw, kw), jnp.float32) / jnp.sqrt(fan_in)
        b = jax.random.normal(kb_, (cout,), jnp.float32) * 0.01
        p = {"w": w, "b": b}
        if li > 0:  # spectral norm applied to all but the first conv
            p["u"] = jax.random.normal(ku_, (cout,), jnp.float32)
            p["v"] = jax.random.normal(kv_, (cin * kw * kw,), jnp.float32)
        layers.append(p)
    return layers, key


def run_netD(params, x_nhwc):
    n = len(params)
    strides = [2] * (n - 2) + [1, 1]
    out = x_nhwc
    for li, p in enumerate(params):
        w = p["w"]
        if "u" in p:
            w = spectral_normalize(w, p["u"], p["v"])
        last = li == n - 1
        slope = None if last else 0.2              # last conv: no activation
        out = conv2d_pallas(out, w, p["b"], stride=strides[li], pad=2, slope=slope,
                            out_dtype=jnp.float32 if last else jnp.bfloat16)
    return out


@jax.jit
def multiscale_discriminator_forward(all_params, x_nchw):
    """Matches MultiscaleDiscriminator.forward: returns list of [out] per scale."""
    num_D = len(all_params)
    x = jnp.transpose(x_nchw, (0, 2, 3, 1))              # NCHW -> NHWC
    result = []
    for i in range(num_D):
        params = all_params[num_D - 1 - i]
        out = run_netD(params, x)
        result.append([jnp.transpose(out, (0, 3, 1, 2))])    # back to NCHW
        if i != num_D - 1:
            x = avgpool_3x3_s2_pallas(x)
    return result


# ----------------------------------------------------------------------------
# Main
# ----------------------------------------------------------------------------

if __name__ == "__main__":
    input_nc, ndf, n_layers, num_D = 4, 8, 3, 3
    key = jax.random.PRNGKey(0)

    all_params = []
    for _ in range(num_D):
        params, key = make_netD_params(key, input_nc, ndf, n_layers)
        all_params.append(params)

    key, kx = jax.random.split(key)
    x = jax.random.normal(kx, (2, input_nc, 16, 16), jnp.float32)   # NCHW input

    result = multiscale_discriminator_forward(all_params, x)
    for scale_out in result:
        for t in scale_out:
            jax.block_until_ready(t)

    # expected per-scale output spatial sizes for 16x16 input: 5x5, 4x4, 4x4
    assert result[0][0].shape == (2, 1, 5, 5)
    assert result[1][0].shape == (2, 1, 4, 4)
    assert result[2][0].shape == (2, 1, 4, 4)
    print("KERNEL_OK")
</pallas_src>

<mosaic_0001>
module attributes {stable_mosaic.version = 11 : i64} {
  func.func @_pool_scale_kernel(%arg0: i32, %arg1: i32, %arg2: memref<1x8x32xf32, #tpu.memory_space<vmem>>, %arg3: memref<1x8x1xf32, #tpu.memory_space<vmem>>, %arg4: memref<1x1x32xf32, #tpu.memory_space<vmem>>, %arg5: memref<1x8x32xf32, #tpu.memory_space<vmem>>) attributes {dimension_semantics = [#tpu.dimension_semantics<parallel>, #tpu.dimension_semantics<parallel>], iteration_bounds = array<i64: 2, 1>, scalar_prefetch = 0 : i64, scratch_operands = 0 : i64, tpu.core_type = #tpu.core_type<tc>, window_params = [{transform_indices = @transform_0, window_bounds = array<i64: 1, 8, 32>}, {transform_indices = @transform_1, window_bounds = array<i64: 1, 8, 1>}, {pipeline_mode = #tpu.pipeline_mode<synchronous>, transform_indices = @transform_2, window_bounds = array<i64: 1, 1, 32>}, {transform_indices = @transform_3, window_bounds = array<i64: 1, 8, 32>}]} {
    %c0 = arith.constant 0 : index
    %c0_0 = arith.constant 0 : index
    %c0_1 = arith.constant 0 : index
    %0 = vector.load %arg2[%c0, %c0_0, %c0_1] : memref<1x8x32xf32, #tpu.memory_space<vmem>>, vector<1x8x32xf32>
    %c0_2 = arith.constant 0 : index
    %c0_3 = arith.constant 0 : index
    %c0_4 = arith.constant 0 : index
    %1 = vector.load %arg3[%c0_2, %c0_3, %c0_4] : memref<1x8x1xf32, #tpu.memory_space<vmem>>, vector<1x8x1xf32>
    %2 = vector.broadcast %1 : vector<1x8x1xf32> to vector<1x8x32xf32>
    %3 = arith.mulf %0, %2 : vector<1x8x32xf32>
    %c0_5 = arith.constant 0 : index
    %c0_6 = arith.constant 0 : index
    %c0_7 = arith.constant 0 : index
    %4 = vector.load %arg4[%c0_5, %c0_6, %c0_7] : memref<1x1x32xf32, #tpu.memory_space<vmem>>, vector<1x1x32xf32>
    %5 = vector.broadcast %4 : vector<1x1x32xf32> to vector<1x8x32xf32>
    %6 = arith.mulf %3, %5 : vector<1x8x32xf32>
    %c0_8 = arith.constant 0 : index
    %c0_9 = arith.constant 0 : index
    %c0_10 = arith.constant 0 : index
    %7 = vector.load %arg5[%c0_8, %c0_9, %c0_10] : memref<1x8x32xf32, #tpu.memory_space<vmem>>, vector<1x8x32xf32>
    tpu.vector_store %arg5[%c0_8, %c0_9, %c0_10], %6 {strides = array<i32>} : memref<1x8x32xf32, #tpu.memory_space<vmem>>, vector<1x8x32xf32>,
    return
  }
  func.func @transform_0(%arg0: i32, %arg1: i32) -> (i32, i32, i32) {
    %c0_i32 = arith.constant 0 : i32
    %c0_i32_0 = arith.constant 0 : i32
    return %arg0, %arg1, %c0_i32 : i32, i32, i32
  }
  func.func @transform_1(%arg0: i32, %arg1: i32) -> (i32, i32, i32) {
    %c0_i32 = arith.constant 0 : i32
    %c0_i32_0 = arith.constant 0 : i32
    %c0_i32_1 = arith.constant 0 : i32
    return %c0_i32, %arg1, %c0_i32_0 : i32, i32, i32
  }
  func.func @transform_2(%arg0: i32, %arg1: i32) -> (i32, i32, i32) {
    %c0_i32 = arith.constant 0 : i32
    %c0_i32_0 = arith.constant 0 : i32
    %c0_i32_1 = arith.constant 0 : i32
    %c0_i32_2 = arith.constant 0 : i32
    return %c0_i32, %c0_i32_0, %c0_i32_1 : i32, i32, i32
  }
  func.func @transform_3(%arg0: i32, %arg1: i32) -> (i32, i32, i32) {
    %c0_i32 = arith.constant 0 : i32
    %c0_i32_0 = arith.constant 0 : i32
    return %arg0, %arg1, %c0_i32 : i32, i32, i32
  }
}

module attributes {stable_mosaic.version = 11 : i64} {
  func.func @_pool_scale_kernel(%arg0: i32, %arg1: i32, %arg2: memref<1x8x16xf32, #tpu.memory_space<vmem>>, %arg3: memref<1x8x1xf32, #tpu.memory_space<vmem>>, %arg4: memref<1x1x16xf32, #tpu.memory_space<vmem>>, %arg5: memref<1x8x16xf32, #tpu.memory_space<vmem>>) attributes {dimension_semantics = [#tpu.dimension_semantics<parallel>, #tpu.dimension_semantics<parallel>], iteration_bounds = array<i64: 2, 1>, scalar_prefetch = 0 : i64, scratch_operands = 0 : i64, tpu.core_type = #tpu.core_type<tc>, window_params = [{transform_indices = @transform_0, window_bounds = array<i64: 1, 8, 16>}, {transform_indices = @transform_1, window_bounds = array<i64: 1, 8, 1>}, {pipeline_mode = #tpu.pipeline_mode<synchronous>, transform_indices = @transform_2, window_bounds = array<i64: 1, 1, 16>}, {transform_indices = @transform_3, window_bounds = array<i64: 1, 8, 16>}]} {
    %c0 = arith.constant 0 : index
    %c0_0 = arith.constant 0 : index
    %c0_1 = arith.constant 0 : index
    %0 = vector.load %arg2[%c0, %c0_0, %c0_1] : memref<1x8x16xf32, #tpu.memory_space<vmem>>, vector<1x8x16xf32>
    %c0_2 = arith.constant 0 : index
    %c0_3 = arith.constant 0 : index
    %c0_4 = arith.constant 0 : index
    %1 = vector.load %arg3[%c0_2, %c0_3, %c0_4] : memref<1x8x1xf32, #tpu.memory_space<vmem>>, vector<1x8x1xf32>
    %2 = vector.broadcast %1 : vector<1x8x1xf32> to vector<1x8x16xf32>
    %3 = arith.mulf %0, %2 : vector<1x8x16xf32>
    %c0_5 = arith.constant 0 : index
    %c0_6 = arith.constant 0 : index
    %c0_7 = arith.constant 0 : index
    %4 = vector.load %arg4[%c0_5, %c0_6, %c0_7] : memref<1x1x16xf32, #tpu.memory_space<vmem>>, vector<1x1x16xf32>
    %5 = vector.broadcast %4 : vector<1x1x16xf32> to vector<1x8x16xf32>
    %6 = arith.mulf %3, %5 : vector<1x8x16xf32>
    %c0_8 = arith.constant 0 : index
    %c0_9 = arith.constant 0 : index
    %c0_10 = arith.constant 0 : index
    %7 = vector.load %arg5[%c0_8, %c0_9, %c0_10] : memref<1x8x16xf32, #tpu.memory_space<vmem>>, vector<1x8x16xf32>
    tpu.vector_store %arg5[%c0_8, %c0_9, %c0_10], %6 {strides = array<i32>} : memref<1x8x16xf32, #tpu.memory_space<vmem>>, vector<1x8x16xf32>,
    return
  }
  func.func @transform_0(%arg0: i32, %arg1: i32) -> (i32, i32, i32) {
    %c0_i32 = arith.constant 0 : i32
    %c0_i32_0 = arith.constant 0 : i32
    return %arg0, %arg1, %c0_i32 : i32, i32, i32
  }
  func.func @transform_1(%arg0: i32, %arg1: i32) -> (i32, i32, i32) {
    %c0_i32 = arith.constant 0 : i32
    %c0_i32_0 = arith.constant 0 : i32
    %c0_i32_1 = arith.constant 0 : i32
    return %c0_i32, %arg1, %c0_i32_0 : i32, i32, i32
  }
  func.func @transform_2(%arg0: i32, %arg1: i32) -> (i32, i32, i32) {
    %c0_i32 = arith.constant 0 : i32
    %c0_i32_0 = arith.constant 0 : i32
    %c0_i32_1 = arith.constant 0 : i32
    %c0_i32_2 = arith.constant 0 : i32
    return %c0_i32, %c0_i32_0, %c0_i32_1 : i32, i32, i32
  }
  func.func @transform_3(%arg0: i32, %arg1: i32) -> (i32, i32, i32) {
    %c0_i32 = arith.constant 0 : i32
    %c0_i32_0 = arith.constant 0 : i32
    return %arg0, %arg1, %c0_i32 : i32, i32, i32
  }
}

module attributes {stable_mosaic.version = 11 : i64} {
  func.func @_conv_single_kernel(%arg0: i32, %arg1: i32, %arg2: memref<32x64xbf16, #tpu.memory_space<vmem>>, %arg3: memref<64x8xbf16, #tpu.memory_space<vmem>>, %arg4: memref<1x8xf32, #tpu.memory_space<vmem>>, %arg5: memref<32x8xbf16, #tpu.memory_space<vmem>>) attributes {dimension_semantics = [#tpu.dimension_semantics<parallel>, #tpu.dimension_semantics<parallel>], iteration_bounds = array<i64: 1, 1>, scalar_prefetch = 0 : i64, scratch_operands = 0 : i64, tpu.core_type = #tpu.core_type<tc>, window_params = [{transform_indices = @transform_0, window_bounds = array<i64: 32, 64>}, {transform_indices = @transform_1, window_bounds = array<i64: 64, 8>}, {transform_indices = @transform_2, window_bounds = array<i64: 1, 8>}, {transform_indices = @transform_3, window_bounds = array<i64: 32, 8>}]} {
    %c0 = arith.constant 0 : index
    %c0_0 = arith.constant 0 : index
    %0 = vector.load %arg2[%c0, %c0_0] : memref<32x64xbf16, #tpu.memory_space<vmem>>, vector<32x64xbf16>
    %c0_1 = arith.constant 0 : index
    %c0_2 = arith.constant 0 : index
    %1 = vector.load %arg3[%c0_1, %c0_2] : memref<64x8xbf16, #tpu.memory_space<vmem>>, vector<64x8xbf16>
    %cst = arith.constant dense<0.000000e+00> : vector<32x8xf32>
    %2 = tpu.matmul %0, %1, %cst {dimension_numbers = #tpu.dot_dimension_numbers<[1], [0], [0], [1], [0, 0, 1, 1], [], []>} : vector<32x64xbf16>, vector<64x8xbf16>, vector<32x8xf32> -> vector<32x8xf32>
    %c0_3 = arith.constant 0 : index
    %c0_4 = arith.constant 0 : index
    %3 = vector.load %arg4[%c0_3, %c0_4] : memref<1x8xf32, #tpu.memory_space<vmem>>, vector<1x8xf32>
    %4 = vector.broadcast %3 : vector<1x8xf32> to vector<32x8xf32>
    %5 = arith.addf %2, %4 : vector<32x8xf32>
    %cst_5 = arith.constant 0.000000e+00 : f32
    %6 = vector.broadcast %cst_5 : f32 to vector<32x8xf32>
    %7 = arith.cmpf ogt, %5, %6 : vector<32x8xf32>
    %cst_6 = arith.constant 2.000000e-01 : f32
    %8 = vector.broadcast %cst_6 : f32 to vector<32x8xf32>
    %9 = arith.mulf %8, %5 : vector<32x8xf32>
    %10 = arith.select %7, %5, %9 : vector<32x8xi1>, vector<32x8xf32>
    %11 = arith.truncf %10 : vector<32x8xf32> to vector<32x8xbf16>
    %c0_7 = arith.constant 0 : index
    %c0_8 = arith.constant 0 : index
    %12 = vector.load %arg5[%c0_7, %c0_8] : memref<32x8xbf16, #tpu.memory_space<vmem>>, vector<32x8xbf16>
    tpu.vector_store %arg5[%c0_7, %c0_8], %11 {strides = array<i32>} : memref<32x8xbf16, #tpu.memory_space<vmem>>, vector<32x8xbf16>,
    return
  }
  func.func @transform_0(%arg0: i32, %arg1: i32) -> (i32, i32) {
    %c0_i32 = arith.constant 0 : i32
    %c0_i32_0 = arith.constant 0 : i32
    return %arg0, %c0_i32 : i32, i32
  }
  func.func @transform_1(%arg0: i32, %arg1: i32) -> (i32, i32) {
    %c0_i32 = arith.constant 0 : i32
    %c0_i32_0 = arith.constant 0 : i32
    return %c0_i32, %arg1 : i32, i32
  }
  func.func @transform_2(%arg0: i32, %arg1: i32) -> (i32, i32) {
    %c0_i32 = arith.constant 0 : i32
    %c0_i32_0 = arith.constant 0 : i32
    return %c0_i32, %arg1 : i32, i32
  }
  func.func @transform_3(%arg0: i32, %arg1: i32) -> (i32, i32) {
    %c0_i32 = arith.constant 0 : i32
    return %arg0, %arg1 : i32, i32
  }
}

module attributes {stable_mosaic.version = 11 : i64} {
  func.func @_conv_single_kernel(%arg0: i32, %arg1: i32, %arg2: memref<16x128xbf16, #tpu.memory_space<vmem>>, %arg3: memref<128x16xbf16, #tpu.memory_space<vmem>>, %arg4: memref<1x16xf32, #tpu.memory_space<vmem>>, %arg5: memref<16x16xbf16, #tpu.memory_space<vmem>>) attributes {dimension_semantics = [#tpu.dimension_semantics<parallel>, #tpu.dimension_semantics<parallel>], iteration_bounds = array<i64: 1, 1>, scalar_prefetch = 0 : i64, scratch_operands = 0 : i64, tpu.core_type = #tpu.core_type<tc>, window_params = [{transform_indices = @transform_0, window_bounds = array<i64: 16, 128>}, {transform_indices = @transform_1, window_bounds = array<i64: 128, 16>}, {transform_indices = @transform_2, window_bounds = array<i64: 1, 16>}, {transform_indices = @transform_3, window_bounds = array<i64: 16, 16>}]} {
    %c0 = arith.constant 0 : index
    %c0_0 = arith.constant 0 : index
    %0 = vector.load %arg2[%c0, %c0_0] : memref<16x128xbf16, #tpu.memory_space<vmem>>, vector<16x128xbf16>
    %c0_1 = arith.constant 0 : index
    %c0_2 = arith.constant 0 : index
    %1 = vector.load %arg3[%c0_1, %c0_2] : memref<128x16xbf16, #tpu.memory_space<vmem>>, vector<128x16xbf16>
    %cst = arith.constant dense<0.000000e+00> : vector<16x16xf32>
    %2 = tpu.matmul %0, %1, %cst {dimension_numbers = #tpu.dot_dimension_numbers<[1], [0], [0], [1], [0, 0, 1, 1], [], []>} : vector<16x128xbf16>, vector<128x16xbf16>, vector<16x16xf32> -> vector<16x16xf32>
    %c0_3 = arith.constant 0 : index
    %c0_4 = arith.constant 0 : index
    %3 = vector.load %arg4[%c0_3, %c0_4] : memref<1x16xf32, #tpu.memory_space<vmem>>, vector<1x16xf32>
    %4 = vector.broadcast %3 : vector<1x16xf32> to vector<16x16xf32>
    %5 = arith.addf %2, %4 : vector<16x16xf32>
    %cst_5 = arith.constant 0.000000e+00 : f32
    %6 = vector.broadcast %cst_5 : f32 to vector<16x16xf32>
    %7 = arith.cmpf ogt, %5, %6 : vector<16x16xf32>
    %cst_6 = arith.constant 2.000000e-01 : f32
    %8 = vector.broadcast %cst_6 : f32 to vector<16x16xf32>
    %9 = arith.mulf %8, %5 : vector<16x16xf32>
    %10 = arith.select %7, %5, %9 : vector<16x16xi1>, vector<16x16xf32>
    %11 = arith.truncf %10 : vector<16x16xf32> to vector<16x16xbf16>
    %c0_7 = arith.constant 0 : index
    %c0_8 = arith.constant 0 : index
    %12 = vector.load %arg5[%c0_7, %c0_8] : memref<16x16xbf16, #tpu.memory_space<vmem>>, vector<16x16xbf16>
    tpu.vector_store %arg5[%c0_7, %c0_8], %11 {strides = array<i32>} : memref<16x16xbf16, #tpu.memory_space<vmem>>, vector<16x16xbf16>,
    return
  }
  func.func @transform_0(%arg0: i32, %arg1: i32) -> (i32, i32) {
    %c0_i32 = arith.constant 0 : i32
    %c0_i32_0 = arith.constant 0 : i32
    return %arg0, %c0_i32 : i32, i32
  }
  func.func @transform_1(%arg0: i32, %arg1: i32) -> (i32, i32) {
    %c0_i32 = arith.constant 0 : i32
    %c0_i32_0 = arith.constant 0 : i32
    return %c0_i32, %arg1 : i32, i32
  }
  func.func @transform_2(%arg0: i32, %arg1: i32) -> (i32, i32) {
    %c0_i32 = arith.constant 0 : i32
    %c0_i32_0 = arith.constant 0 : i32
    return %c0_i32, %arg1 : i32, i32
  }
  func.func @transform_3(%arg0: i32, %arg1: i32) -> (i32, i32) {
    %c0_i32 = arith.constant 0 : i32
    return %arg0, %arg1 : i32, i32
  }
}

module attributes {stable_mosaic.version = 11 : i64} {
  func.func @_conv_single_kernel(%arg0: i32, %arg1: i32, %arg2: memref<16x256xbf16, #tpu.memory_space<vmem>>, %arg3: memref<256x32xbf16, #tpu.memory_space<vmem>>, %arg4: memref<1x32xf32, #tpu.memory_space<vmem>>, %arg5: memref<16x32xbf16, #tpu.memory_space<vmem>>) attributes {dimension_semantics = [#tpu.dimension_semantics<parallel>, #tpu.dimension_semantics<parallel>], iteration_bounds = array<i64: 1, 1>, scalar_prefetch = 0 : i64, scratch_operands = 0 : i64, tpu.core_type = #tpu.core_type<tc>, window_params = [{transform_indices = @transform_0, window_bounds = array<i64: 16, 256>}, {transform_indices = @transform_1, window_bounds = array<i64: 256, 32>}, {transform_indices = @transform_2, window_bounds = array<i64: 1, 32>}, {transform_indices = @transform_3, window_bounds = array<i64: 16, 32>}]} {
    %c0 = arith.constant 0 : index
    %c0_0 = arith.constant 0 : index
    %0 = vector.load %arg2[%c0, %c0_0] : memref<16x256xbf16, #tpu.memory_space<vmem>>, vector<16x256xbf16>
    %c0_1 = arith.constant 0 : index
    %c0_2 = arith.constant 0 : index
    %1 = vector.load %arg3[%c0_1, %c0_2] : memref<256x32xbf16, #tpu.memory_space<vmem>>, vector<256x32xbf16>
    %cst = arith.constant dense<0.000000e+00> : vector<16x32xf32>
    %2 = tpu.matmul %0, %1, %cst {dimension_numbers = #tpu.dot_dimension_numbers<[1], [0], [0], [1], [0, 0, 1, 1], [], []>} : vector<16x256xbf16>, vector<256x32xbf16>, vector<16x32xf32> -> vector<16x32xf32>
    %c0_3 = arith.constant 0 : index
    %c0_4 = arith.constant 0 : index
    %3 = vector.load %arg4[%c0_3, %c0_4] : memref<1x32xf32, #tpu.memory_space<vmem>>, vector<1x32xf32>
    %4 = vector.broadcast %3 : vector<1x32xf32> to vector<16x32xf32>
    %5 = arith.addf %2, %4 : vector<16x32xf32>
    %cst_5 = arith.constant 0.000000e+00 : f32
    %6 = vector.broadcast %cst_5 : f32 to vector<16x32xf32>
    %7 = arith.cmpf ogt, %5, %6 : vector<16x32xf32>
    %cst_6 = arith.constant 2.000000e-01 : f32
    %8 = vector.broadcast %cst_6 : f32 to vector<16x32xf32>
    %9 = arith.mulf %8, %5 : vector<16x32xf32>
    %10 = arith.select %7, %5, %9 : vector<16x32xi1>, vector<16x32xf32>
    %11 = arith.truncf %10 : vector<16x32xf32> to vector<16x32xbf16>
    %c0_7 = arith.constant 0 : index
    %c0_8 = arith.constant 0 : index
    %12 = vector.load %arg5[%c0_7, %c0_8] : memref<16x32xbf16, #tpu.memory_space<vmem>>, vector<16x32xbf16>
    tpu.vector_store %arg5[%c0_7, %c0_8], %11 {strides = array<i32>} : memref<16x32xbf16, #tpu.memory_space<vmem>>, vector<16x32xbf16>,
    return
  }
  func.func @transform_0(%arg0: i32, %arg1: i32) -> (i32, i32) {
    %c0_i32 = arith.constant 0 : i32
    %c0_i32_0 = arith.constant 0 : i32
    return %arg0, %c0_i32 : i32, i32
  }
  func.func @transform_1(%arg0: i32, %arg1: i32) -> (i32, i32) {
    %c0_i32 = arith.constant 0 : i32
    %c0_i32_0 = arith.constant 0 : i32
    return %c0_i32, %arg1 : i32, i32
  }
  func.func @transform_2(%arg0: i32, %arg1: i32) -> (i32, i32) {
    %c0_i32 = arith.constant 0 : i32
    %c0_i32_0 = arith.constant 0 : i32
    return %c0_i32, %arg1 : i32, i32
  }
  func.func @transform_3(%arg0: i32, %arg1: i32) -> (i32, i32) {
    %c0_i32 = arith.constant 0 : i32
    return %arg0, %arg1 : i32, i32
  }
}

module attributes {stable_mosaic.version = 11 : i64} {
  func.func @_conv_single_kernel(%arg0: i32, %arg1: i32, %arg2: memref<32x512xbf16, #tpu.memory_space<vmem>>, %arg3: memref<512x64xbf16, #tpu.memory_space<vmem>>, %arg4: memref<1x64xf32, #tpu.memory_space<vmem>>, %arg5: memref<32x64xbf16, #tpu.memory_space<vmem>>) attributes {dimension_semantics = [#tpu.dimension_semantics<parallel>, #tpu.dimension_semantics<parallel>], iteration_bounds = array<i64: 1, 1>, scalar_prefetch = 0 : i64, scratch_operands = 0 : i64, tpu.core_type = #tpu.core_type<tc>, window_params = [{transform_indices = @transform_0, window_bounds = array<i64: 32, 512>}, {transform_indices = @transform_1, window_bounds = array<i64: 512, 64>}, {transform_indices = @transform_2, window_bounds = array<i64: 1, 64>}, {transform_indices = @transform_3, window_bounds = array<i64: 32, 64>}]} {
    %c0 = arith.constant 0 : index
    %c0_0 = arith.constant 0 : index
    %0 = vector.load %arg2[%c0, %c0_0] : memref<32x512xbf16, #tpu.memory_space<vmem>>, vector<32x512xbf16>
    %c0_1 = arith.constant 0 : index
    %c0_2 = arith.constant 0 : index
    %1 = vector.load %arg3[%c0_1, %c0_2] : memref<512x64xbf16, #tpu.memory_space<vmem>>, vector<512x64xbf16>
    %cst = arith.constant dense<0.000000e+00> : vector<32x64xf32>
    %2 = tpu.matmul %0, %1, %cst {dimension_numbers = #tpu.dot_dimension_numbers<[1], [0], [0], [1], [0, 0, 1, 1], [], []>} : vector<32x512xbf16>, vector<512x64xbf16>, vector<32x64xf32> -> vector<32x64xf32>
    %c0_3 = arith.constant 0 : index
    %c0_4 = arith.constant 0 : index
    %3 = vector.load %arg4[%c0_3, %c0_4] : memref<1x64xf32, #tpu.memory_space<vmem>>, vector<1x64xf32>
    %4 = vector.broadcast %3 : vector<1x64xf32> to vector<32x64xf32>
    %5 = arith.addf %2, %4 : vector<32x64xf32>
    %cst_5 = arith.constant 0.000000e+00 : f32
    %6 = vector.broadcast %cst_5 : f32 to vector<32x64xf32>
    %7 = arith.cmpf ogt, %5, %6 : vector<32x64xf32>
    %cst_6 = arith.constant 2.000000e-01 : f32
    %8 = vector.broadcast %cst_6 : f32 to vector<32x64xf32>
    %9 = arith.mulf %8, %5 : vector<32x64xf32>
    %10 = arith.select %7, %5, %9 : vector<32x64xi1>, vector<32x64xf32>
    %11 = arith.truncf %10 : vector<32x64xf32> to vector<32x64xbf16>
    %c0_7 = arith.constant 0 : index
    %c0_8 = arith.constant 0 : index
    %12 = vector.load %arg5[%c0_7, %c0_8] : memref<32x64xbf16, #tpu.memory_space<vmem>>, vector<32x64xbf16>
    tpu.vector_store %arg5[%c0_7, %c0_8], %11 {strides = array<i32>} : memref<32x64xbf16, #tpu.memory_space<vmem>>, vector<32x64xbf16>,
    return
  }
  func.func @transform_0(%arg0: i32, %arg1: i32) -> (i32, i32) {
    %c0_i32 = arith.constant 0 : i32
    %c0_i32_0 = arith.constant 0 : i32
    return %arg0, %c0_i32 : i32, i32
  }
  func.func @transform_1(%arg0: i32, %arg1: i32) -> (i32, i32) {
    %c0_i32 = arith.constant 0 : i32
    %c0_i32_0 = arith.constant 0 : i32
    return %c0_i32, %arg1 : i32, i32
  }
  func.func @transform_2(%arg0: i32, %arg1: i32) -> (i32, i32) {
    %c0_i32 = arith.constant 0 : i32
    %c0_i32_0 = arith.constant 0 : i32
    return %c0_i32, %arg1 : i32, i32
  }
  func.func @transform_3(%arg0: i32, %arg1: i32) -> (i32, i32) {
    %c0_i32 = arith.constant 0 : i32
    return %arg0, %arg1 : i32, i32
  }
}

module attributes {stable_mosaic.version = 11 : i64} {
  func.func @_conv_single_kernel(%arg0: i32, %arg1: i32, %arg2: memref<32x1024xbf16, #tpu.memory_space<vmem>>, %arg3: memref<1024x8xbf16, #tpu.memory_space<vmem>>, %arg4: memref<1x8xf32, #tpu.memory_space<vmem>>, %arg5: memref<32x8xf32, #tpu.memory_space<vmem>>) attributes {dimension_semantics = [#tpu.dimension_semantics<parallel>, #tpu.dimension_semantics<parallel>], iteration_bounds = array<i64: 1, 1>, scalar_prefetch = 0 : i64, scratch_operands = 0 : i64, tpu.core_type = #tpu.core_type<tc>, window_params = [{transform_indices = @transform_0, window_bounds = array<i64: 32, 1024>}, {transform_indices = @transform_1, window_bounds = array<i64: 1024, 8>}, {transform_indices = @transform_2, window_bounds = array<i64: 1, 8>}, {transform_indices = @transform_3, window_bounds = array<i64: 32, 8>}]} {
    %c0 = arith.constant 0 : index
    %c0_0 = arith.constant 0 : index
    %0 = vector.load %arg2[%c0, %c0_0] : memref<32x1024xbf16, #tpu.memory_space<vmem>>, vector<32x1024xbf16>
    %c0_1 = arith.constant 0 : index
    %c0_2 = arith.constant 0 : index
    %1 = vector.load %arg3[%c0_1, %c0_2] : memref<1024x8xbf16, #tpu.memory_space<vmem>>, vector<1024x8xbf16>
    %cst = arith.constant dense<0.000000e+00> : vector<32x8xf32>
    %2 = tpu.matmul %0, %1, %cst {dimension_numbers = #tpu.dot_dimension_numbers<[1], [0], [0], [1], [0, 0, 1, 1], [], []>} : vector<32x1024xbf16>, vector<1024x8xbf16>, vector<32x8xf32> -> vector<32x8xf32>
    %c0_3 = arith.constant 0 : index
    %c0_4 = arith.constant 0 : index
    %3 = vector.load %arg4[%c0_3, %c0_4] : memref<1x8xf32, #tpu.memory_space<vmem>>, vector<1x8xf32>
    %4 = vector.broadcast %3 : vector<1x8xf32> to vector<32x8xf32>
    %5 = arith.addf %2, %4 : vector<32x8xf32>
    %c0_5 = arith.constant 0 : index
    %c0_6 = arith.constant 0 : index
    %6 = vector.load %arg5[%c0_5, %c0_6] : memref<32x8xf32, #tpu.memory_space<vmem>>, vector<32x8xf32>
    tpu.vector_store %arg5[%c0_5, %c0_6], %5 {strides = array<i32>} : memref<32x8xf32, #tpu.memory_space<vmem>>, vector<32x8xf32>,
    return
  }
  func.func @transform_0(%arg0: i32, %arg1: i32) -> (i32, i32) {
    %c0_i32 = arith.constant 0 : i32
    %c0_i32_0 = arith.constant 0 : i32
    return %arg0, %c0_i32 : i32, i32
  }
  func.func @transform_1(%arg0: i32, %arg1: i32) -> (i32, i32) {
    %c0_i32 = arith.constant 0 : i32
    %c0_i32_0 = arith.constant 0 : i32
    return %c0_i32, %arg1 : i32, i32
  }
  func.func @transform_2(%arg0: i32, %arg1: i32) -> (i32, i32) {
    %c0_i32 = arith.constant 0 : i32
    %c0_i32_0 = arith.constant 0 : i32
    return %c0_i32, %arg1 : i32, i32
  }
  func.func @transform_3(%arg0: i32, %arg1: i32) -> (i32, i32) {
    %c0_i32 = arith.constant 0 : i32
    return %arg0, %arg1 : i32, i32
  }
}

module attributes {stable_mosaic.version = 11 : i64} {
  func.func @_conv_single_kernel(%arg0: i32, %arg1: i32, %arg2: memref<64x64xbf16, #tpu.memory_space<vmem>>, %arg3: memref<64x8xbf16, #tpu.memory_space<vmem>>, %arg4: memref<1x8xf32, #tpu.memory_space<vmem>>, %arg5: memref<64x8xbf16, #tpu.memory_space<vmem>>) attributes {dimension_semantics = [#tpu.dimension_semantics<parallel>, #tpu.dimension_semantics<parallel>], iteration_bounds = array<i64: 1, 1>, scalar_prefetch = 0 : i64, scratch_operands = 0 : i64, tpu.core_type = #tpu.core_type<tc>, window_params = [{transform_indices = @transform_0, window_bounds = array<i64: 64, 64>}, {transform_indices = @transform_1, window_bounds = array<i64: 64, 8>}, {transform_indices = @transform_2, window_bounds = array<i64: 1, 8>}, {transform_indices = @transform_3, window_bounds = array<i64: 64, 8>}]} {
    %c0 = arith.constant 0 : index
    %c0_0 = arith.constant 0 : index
    %0 = vector.load %arg2[%c0, %c0_0] : memref<64x64xbf16, #tpu.memory_space<vmem>>, vector<64x64xbf16>
    %c0_1 = arith.constant 0 : index
    %c0_2 = arith.constant 0 : index
    %1 = vector.load %arg3[%c0_1, %c0_2] : memref<64x8xbf16, #tpu.memory_space<vmem>>, vector<64x8xbf16>
    %cst = arith.constant dense<0.000000e+00> : vector<64x8xf32>
    %2 = tpu.matmul %0, %1, %cst {dimension_numbers = #tpu.dot_dimension_numbers<[1], [0], [0], [1], [0, 0, 1, 1], [], []>} : vector<64x64xbf16>, vector<64x8xbf16>, vector<64x8xf32> -> vector<64x8xf32>
    %c0_3 = arith.constant 0 : index
    %c0_4 = arith.constant 0 : index
    %3 = vector.load %arg4[%c0_3, %c0_4] : memref<1x8xf32, #tpu.memory_space<vmem>>, vector<1x8xf32>
    %4 = vector.broadcast %3 : vector<1x8xf32> to vector<64x8xf32>
    %5 = arith.addf %2, %4 : vector<64x8xf32>
    %cst_5 = arith.constant 0.000000e+00 : f32
    %6 = vector.broadcast %cst_5 : f32 to vector<64x8xf32>
    %7 = arith.cmpf ogt, %5, %6 : vector<64x8xf32>
    %cst_6 = arith.constant 2.000000e-01 : f32
    %8 = vector.broadcast %cst_6 : f32 to vector<64x8xf32>
    %9 = arith.mulf %8, %5 : vector<64x8xf32>
    %10 = arith.select %7, %5, %9 : vector<64x8xi1>, vector<64x8xf32>
    %11 = arith.truncf %10 : vector<64x8xf32> to vector<64x8xbf16>
    %c0_7 = arith.constant 0 : index
    %c0_8 = arith.constant 0 : index
    %12 = vector.load %arg5[%c0_7, %c0_8] : memref<64x8xbf16, #tpu.memory_space<vmem>>, vector<64x8xbf16>
    tpu.vector_store %arg5[%c0_7, %c0_8], %11 {strides = array<i32>} : memref<64x8xbf16, #tpu.memory_space<vmem>>, vector<64x8xbf16>,
    return
  }
  func.func @transform_0(%arg0: i32, %arg1: i32) -> (i32, i32) {
    %c0_i32 = arith.constant 0 : i32
    %c0_i32_0 = arith.constant 0 : i32
    return %arg0, %c0_i32 : i32, i32
  }
  func.func @transform_1(%arg0: i32, %arg1: i32) -> (i32, i32) {
    %c0_i32 = arith.constant 0 : i32
    %c0_i32_0 = arith.constant 0 : i32
    return %c0_i32, %arg1 : i32, i32
  }
  func.func @transform_2(%arg0: i32, %arg1: i32) -> (i32, i32) {
    %c0_i32 = arith.constant 0 : i32
    %c0_i32_0 = arith.constant 0 : i32
    return %c0_i32, %arg1 : i32, i32
  }
  func.func @transform_3(%arg0: i32, %arg1: i32) -> (i32, i32) {
    %c0_i32 = arith.constant 0 : i32
    return %arg0, %arg1 : i32, i32
  }
}

module attributes {stable_mosaic.version = 11 : i64} {
  func.func @_conv_single_kernel(%arg0: i32, %arg1: i32, %arg2: memref<32x128xbf16, #tpu.memory_space<vmem>>, %arg3: memref<128x16xbf16, #tpu.memory_space<vmem>>, %arg4: memref<1x16xf32, #tpu.memory_space<vmem>>, %arg5: memref<32x16xbf16, #tpu.memory_space<vmem>>) attributes {dimension_semantics = [#tpu.dimension_semantics<parallel>, #tpu.dimension_semantics<parallel>], iteration_bounds = array<i64: 1, 1>, scalar_prefetch = 0 : i64, scratch_operands = 0 : i64, tpu.core_type = #tpu.core_type<tc>, window_params = [{transform_indices = @transform_0, window_bounds = array<i64: 32, 128>}, {transform_indices = @transform_1, window_bounds = array<i64: 128, 16>}, {transform_indices = @transform_2, window_bounds = array<i64: 1, 16>}, {transform_indices = @transform_3, window_bounds = array<i64: 32, 16>}]} {
    %c0 = arith.constant 0 : index
    %c0_0 = arith.constant 0 : index
    %0 = vector.load %arg2[%c0, %c0_0] : memref<32x128xbf16, #tpu.memory_space<vmem>>, vector<32x128xbf16>
    %c0_1 = arith.constant 0 : index
    %c0_2 = arith.constant 0 : index
    %1 = vector.load %arg3[%c0_1, %c0_2] : memref<128x16xbf16, #tpu.memory_space<vmem>>, vector<128x16xbf16>
    %cst = arith.constant dense<0.000000e+00> : vector<32x16xf32>
    %2 = tpu.matmul %0, %1, %cst {dimension_numbers = #tpu.dot_dimension_numbers<[1], [0], [0], [1], [0, 0, 1, 1], [], []>} : vector<32x128xbf16>, vector<128x16xbf16>, vector<32x16xf32> -> vector<32x16xf32>
    %c0_3 = arith.constant 0 : index
    %c0_4 = arith.constant 0 : index
    %3 = vector.load %arg4[%c0_3, %c0_4] : memref<1x16xf32, #tpu.memory_space<vmem>>, vector<1x16xf32>
    %4 = vector.broadcast %3 : vector<1x16xf32> to vector<32x16xf32>
    %5 = arith.addf %2, %4 : vector<32x16xf32>
    %cst_5 = arith.constant 0.000000e+00 : f32
    %6 = vector.broadcast %cst_5 : f32 to vector<32x16xf32>
    %7 = arith.cmpf ogt, %5, %6 : vector<32x16xf32>
    %cst_6 = arith.constant 2.000000e-01 : f32
    %8 = vector.broadcast %cst_6 : f32 to vector<32x16xf32>
    %9 = arith.mulf %8, %5 : vector<32x16xf32>
    %10 = arith.select %7, %5, %9 : vector<32x16xi1>, vector<32x16xf32>
    %11 = arith.truncf %10 : vector<32x16xf32> to vector<32x16xbf16>
    %c0_7 = arith.constant 0 : index
    %c0_8 = arith.constant 0 : index
    %12 = vector.load %arg5[%c0_7, %c0_8] : memref<32x16xbf16, #tpu.memory_space<vmem>>, vector<32x16xbf16>
    tpu.vector_store %arg5[%c0_7, %c0_8], %11 {strides = array<i32>} : memref<32x16xbf16, #tpu.memory_space<vmem>>, vector<32x16xbf16>,
    return
  }
  func.func @transform_0(%arg0: i32, %arg1: i32) -> (i32, i32) {
    %c0_i32 = arith.constant 0 : i32
    %c0_i32_0 = arith.constant 0 : i32
    return %arg0, %c0_i32 : i32, i32
  }
  func.func @transform_1(%arg0: i32, %arg1: i32) -> (i32, i32) {
    %c0_i32 = arith.constant 0 : i32
    %c0_i32_0 = arith.constant 0 : i32
    return %c0_i32, %arg1 : i32, i32
  }
  func.func @transform_2(%arg0: i32, %arg1: i32) -> (i32, i32) {
    %c0_i32 = arith.constant 0 : i32
    %c0_i32_0 = arith.constant 0 : i32
    return %c0_i32, %arg1 : i32, i32
  }
  func.func @transform_3(%arg0: i32, %arg1: i32) -> (i32, i32) {
    %c0_i32 = arith.constant 0 : i32
    return %arg0, %arg1 : i32, i32
  }
}

module attributes {stable_mosaic.version = 11 : i64} {
  func.func @_conv_single_kernel(%arg0: i32, %arg1: i32, %arg2: memref<176x64xbf16, #tpu.memory_space<vmem>>, %arg3: memref<64x8xbf16, #tpu.memory_space<vmem>>, %arg4: memref<1x8xf32, #tpu.memory_space<vmem>>, %arg5: memref<176x8xbf16, #tpu.memory_space<vmem>>) attributes {dimension_semantics = [#tpu.dimension_semantics<parallel>, #tpu.dimension_semantics<parallel>], iteration_bounds = array<i64: 1, 1>, scalar_prefetch = 0 : i64, scratch_operands = 0 : i64, tpu.core_type = #tpu.core_type<tc>, window_params = [{transform_indices = @transform_0, window_bounds = array<i64: 176, 64>}, {transform_indices = @transform_1, window_bounds = array<i64: 64, 8>}, {transform_indices = @transform_2, window_bounds = array<i64: 1, 8>}, {transform_indices = @transform_3, window_bounds = array<i64: 176, 8>}]} {
    %c0 = arith.constant 0 : index
    %c0_0 = arith.constant 0 : index
    %0 = vector.load %arg2[%c0, %c0_0] : memref<176x64xbf16, #tpu.memory_space<vmem>>, vector<176x64xbf16>
    %c0_1 = arith.constant 0 : index
    %c0_2 = arith.constant 0 : index
    %1 = vector.load %arg3[%c0_1, %c0_2] : memref<64x8xbf16, #tpu.memory_space<vmem>>, vector<64x8xbf16>
    %cst = arith.constant dense<0.000000e+00> : vector<176x8xf32>
    %2 = tpu.matmul %0, %1, %cst {dimension_numbers = #tpu.dot_dimension_numbers<[1], [0], [0], [1], [0, 0, 1, 1], [], []>} : vector<176x64xbf16>, vector<64x8xbf16>, vector<176x8xf32> -> vector<176x8xf32>
    %c0_3 = arith.constant 0 : index
    %c0_4 = arith.constant 0 : index
    %3 = vector.load %arg4[%c0_3, %c0_4] : memref<1x8xf32, #tpu.memory_space<vmem>>, vector<1x8xf32>
    %4 = vector.broadcast %3 : vector<1x8xf32> to vector<176x8xf32>
    %5 = arith.addf %2, %4 : vector<176x8xf32>
    %cst_5 = arith.constant 0.000000e+00 : f32
    %6 = vector.broadcast %cst_5 : f32 to vector<176x8xf32>
    %7 = arith.cmpf ogt, %5, %6 : vector<176x8xf32>
    %cst_6 = arith.constant 2.000000e-01 : f32
    %8 = vector.broadcast %cst_6 : f32 to vector<176x8xf32>
    %9 = arith.mulf %8, %5 : vector<176x8xf32>
    %10 = arith.select %7, %5, %9 : vector<176x8xi1>, vector<176x8xf32>
    %11 = arith.truncf %10 : vector<176x8xf32> to vector<176x8xbf16>
    %c0_7 = arith.constant 0 : index
    %c0_8 = arith.constant 0 : index
    %12 = vector.load %arg5[%c0_7, %c0_8] : memref<176x8xbf16, #tpu.memory_space<vmem>>, vector<176x8xbf16>
    tpu.vector_store %arg5[%c0_7, %c0_8], %11 {strides = array<i32>} : memref<176x8xbf16, #tpu.memory_space<vmem>>, vector<176x8xbf16>,
    return
  }
  func.func @transform_0(%arg0: i32, %arg1: i32) -> (i32, i32) {
    %c0_i32 = arith.constant 0 : i32
    %c0_i32_0 = arith.constant 0 : i32
    return %arg0, %c0_i32 : i32, i32
  }
  func.func @transform_1(%arg0: i32, %arg1: i32) -> (i32, i32) {
    %c0_i32 = arith.constant 0 : i32
    %c0_i32_0 = arith.constant 0 : i32
    return %c0_i32, %arg1 : i32, i32
  }
  func.func @transform_2(%arg0: i32, %arg1: i32) -> (i32, i32) {
    %c0_i32 = arith.constant 0 : i32
    %c0_i32_0 = arith.constant 0 : i32
    return %c0_i32, %arg1 : i32, i32
  }
  func.func @transform_3(%arg0: i32, %arg1: i32) -> (i32, i32) {
    %c0_i32 = arith.constant 0 : i32
    return %arg0, %arg1 : i32, i32
  }
}

module attributes {stable_mosaic.version = 11 : i64} {
  func.func @_conv_single_kernel(%arg0: i32, %arg1: i32, %arg2: memref<64x128xbf16, #tpu.memory_space<vmem>>, %arg3: memref<128x16xbf16, #tpu.memory_space<vmem>>, %arg4: memref<1x16xf32, #tpu.memory_space<vmem>>, %arg5: memref<64x16xbf16, #tpu.memory_space<vmem>>) attributes {dimension_semantics = [#tpu.dimension_semantics<parallel>, #tpu.dimension_semantics<parallel>], iteration_bounds = array<i64: 1, 1>, scalar_prefetch = 0 : i64, scratch_operands = 0 : i64, tpu.core_type = #tpu.core_type<tc>, window_params = [{transform_indices = @transform_0, window_bounds = array<i64: 64, 128>}, {transform_indices = @transform_1, window_bounds = array<i64: 128, 16>}, {transform_indices = @transform_2, window_bounds = array<i64: 1, 16>}, {transform_indices = @transform_3, window_bounds = array<i64: 64, 16>}]} {
    %c0 = arith.constant 0 : index
    %c0_0 = arith.constant 0 : index
    %0 = vector.load %arg2[%c0, %c0_0] : memref<64x128xbf16, #tpu.memory_space<vmem>>, vector<64x128xbf16>
    %c0_1 = arith.constant 0 : index
    %c0_2 = arith.constant 0 : index
    %1 = vector.load %arg3[%c0_1, %c0_2] : memref<128x16xbf16, #tpu.memory_space<vmem>>, vector<128x16xbf16>
    %cst = arith.constant dense<0.000000e+00> : vector<64x16xf32>
    %2 = tpu.matmul %0, %1, %cst {dimension_numbers = #tpu.dot_dimension_numbers<[1], [0], [0], [1], [0, 0, 1, 1], [], []>} : vector<64x128xbf16>, vector<128x16xbf16>, vector<64x16xf32> -> vector<64x16xf32>
    %c0_3 = arith.constant 0 : index
    %c0_4 = arith.constant 0 : index
    %3 = vector.load %arg4[%c0_3, %c0_4] : memref<1x16xf32, #tpu.memory_space<vmem>>, vector<1x16xf32>
    %4 = vector.broadcast %3 : vector<1x16xf32> to vector<64x16xf32>
    %5 = arith.addf %2, %4 : vector<64x16xf32>
    %cst_5 = arith.constant 0.000000e+00 : f32
    %6 = vector.broadcast %cst_5 : f32 to vector<64x16xf32>
    %7 = arith.cmpf ogt, %5, %6 : vector<64x16xf32>
    %cst_6 = arith.constant 2.000000e-01 : f32
    %8 = vector.broadcast %cst_6 : f32 to vector<64x16xf32>
    %9 = arith.mulf %8, %5 : vector<64x16xf32>
    %10 = arith.select %7, %5, %9 : vector<64x16xi1>, vector<64x16xf32>
    %11 = arith.truncf %10 : vector<64x16xf32> to vector<64x16xbf16>
    %c0_7 = arith.constant 0 : index
    %c0_8 = arith.constant 0 : index
    %12 = vector.load %arg5[%c0_7, %c0_8] : memref<64x16xbf16, #tpu.memory_space<vmem>>, vector<64x16xbf16>
    tpu.vector_store %arg5[%c0_7, %c0_8], %11 {strides = array<i32>} : memref<64x16xbf16, #tpu.memory_space<vmem>>, vector<64x16xbf16>,
    return
  }
  func.func @transform_0(%arg0: i32, %arg1: i32) -> (i32, i32) {
    %c0_i32 = arith.constant 0 : i32
    %c0_i32_0 = arith.constant 0 : i32
    return %arg0, %c0_i32 : i32, i32
  }
  func.func @transform_1(%arg0: i32, %arg1: i32) -> (i32, i32) {
    %c0_i32 = arith.constant 0 : i32
    %c0_i32_0 = arith.constant 0 : i32
    return %c0_i32, %arg1 : i32, i32
  }
  func.func @transform_2(%arg0: i32, %arg1: i32) -> (i32, i32) {
    %c0_i32 = arith.constant 0 : i32
    %c0_i32_0 = arith.constant 0 : i32
    return %c0_i32, %arg1 : i32, i32
  }
  func.func @transform_3(%arg0: i32, %arg1: i32) -> (i32, i32) {
    %c0_i32 = arith.constant 0 : i32
    return %arg0, %arg1 : i32, i32
  }
}

module attributes {stable_mosaic.version = 11 : i64} {
  func.func @_conv_single_kernel(%arg0: i32, %arg1: i32, %arg2: memref<32x256xbf16, #tpu.memory_space<vmem>>, %arg3: memref<256x32xbf16, #tpu.memory_space<vmem>>, %arg4: memref<1x32xf32, #tpu.memory_space<vmem>>, %arg5: memref<32x32xbf16, #tpu.memory_space<vmem>>) attributes {dimension_semantics = [#tpu.dimension_semantics<parallel>, #tpu.dimension_semantics<parallel>], iteration_bounds = array<i64: 1, 1>, scalar_prefetch = 0 : i64, scratch_operands = 0 : i64, tpu.core_type = #tpu.core_type<tc>, window_params = [{transform_indices = @transform_0, window_bounds = array<i64: 32, 256>}, {transform_indices = @transform_1, window_bounds = array<i64: 256, 32>}, {transform_indices = @transform_2, window_bounds = array<i64: 1, 32>}, {transform_indices = @transform_3, window_bounds = array<i64: 32, 32>}]} {
    %c0 = arith.constant 0 : index
    %c0_0 = arith.constant 0 : index
    %0 = vector.load %arg2[%c0, %c0_0] : memref<32x256xbf16, #tpu.memory_space<vmem>>, vector<32x256xbf16>
    %c0_1 = arith.constant 0 : index
    %c0_2 = arith.constant 0 : index
    %1 = vector.load %arg3[%c0_1, %c0_2] : memref<256x32xbf16, #tpu.memory_space<vmem>>, vector<256x32xbf16>
    %cst = arith.constant dense<0.000000e+00> : vector<32x32xf32>
    %2 = tpu.matmul %0, %1, %cst {dimension_numbers = #tpu.dot_dimension_numbers<[1], [0], [0], [1], [0, 0, 1, 1], [], []>} : vector<32x256xbf16>, vector<256x32xbf16>, vector<32x32xf32> -> vector<32x32xf32>
    %c0_3 = arith.constant 0 : index
    %c0_4 = arith.constant 0 : index
    %3 = vector.load %arg4[%c0_3, %c0_4] : memref<1x32xf32, #tpu.memory_space<vmem>>, vector<1x32xf32>
    %4 = vector.broadcast %3 : vector<1x32xf32> to vector<32x32xf32>
    %5 = arith.addf %2, %4 : vector<32x32xf32>
    %cst_5 = arith.constant 0.000000e+00 : f32
    %6 = vector.broadcast %cst_5 : f32 to vector<32x32xf32>
    %7 = arith.cmpf ogt, %5, %6 : vector<32x32xf32>
    %cst_6 = arith.constant 2.000000e-01 : f32
    %8 = vector.broadcast %cst_6 : f32 to vector<32x32xf32>
    %9 = arith.mulf %8, %5 : vector<32x32xf32>
    %10 = arith.select %7, %5, %9 : vector<32x32xi1>, vector<32x32xf32>
    %11 = arith.truncf %10 : vector<32x32xf32> to vector<32x32xbf16>
    %c0_7 = arith.constant 0 : index
    %c0_8 = arith.constant 0 : index
    %12 = vector.load %arg5[%c0_7, %c0_8] : memref<32x32xbf16, #tpu.memory_space<vmem>>, vector<32x32xbf16>
    tpu.vector_store %arg5[%c0_7, %c0_8], %11 {strides = array<i32>} : memref<32x32xbf16, #tpu.memory_space<vmem>>, vector<32x32xbf16>,
    return
  }
  func.func @transform_0(%arg0: i32, %arg1: i32) -> (i32, i32) {
    %c0_i32 = arith.constant 0 : i32
    %c0_i32_0 = arith.constant 0 : i32
    return %arg0, %c0_i32 : i32, i32
  }
  func.func @transform_1(%arg0: i32, %arg1: i32) -> (i32, i32) {
    %c0_i32 = arith.constant 0 : i32
    %c0_i32_0 = arith.constant 0 : i32
    return %c0_i32, %arg1 : i32, i32
  }
  func.func @transform_2(%arg0: i32, %arg1: i32) -> (i32, i32) {
    %c0_i32 = arith.constant 0 : i32
    %c0_i32_0 = arith.constant 0 : i32
    return %c0_i32, %arg1 : i32, i32
  }
  func.func @transform_3(%arg0: i32, %arg1: i32) -> (i32, i32) {
    %c0_i32 = arith.constant 0 : i32
    return %arg0, %arg1 : i32, i32
  }
}

module attributes {stable_mosaic.version = 11 : i64} {
  func.func @_conv_single_kernel(%arg0: i32, %arg1: i32, %arg2: memref<64x1024xbf16, #tpu.memory_space<vmem>>, %arg3: memref<1024x8xbf16, #tpu.memory_space<vmem>>, %arg4: memref<1x8xf32, #tpu.memory_space<vmem>>, %arg5: memref<64x8xf32, #tpu.memory_space<vmem>>) attributes {dimension_semantics = [#tpu.dimension_semantics<parallel>, #tpu.dimension_semantics<parallel>], iteration_bounds = array<i64: 1, 1>, scalar_prefetch = 0 : i64, scratch_operands = 0 : i64, tpu.core_type = #tpu.core_type<tc>, window_params = [{transform_indices = @transform_0, window_bounds = array<i64: 64, 1024>}, {transform_indices = @transform_1, window_bounds = array<i64: 1024, 8>}, {transform_indices = @transform_2, window_bounds = array<i64: 1, 8>}, {transform_indices = @transform_3, window_bounds = array<i64: 64, 8>}]} {
    %c0 = arith.constant 0 : index
    %c0_0 = arith.constant 0 : index
    %0 = vector.load %arg2[%c0, %c0_0] : memref<64x1024xbf16, #tpu.memory_space<vmem>>, vector<64x1024xbf16>
    %c0_1 = arith.constant 0 : index
    %c0_2 = arith.constant 0 : index
    %1 = vector.load %arg3[%c0_1, %c0_2] : memref<1024x8xbf16, #tpu.memory_space<vmem>>, vector<1024x8xbf16>
    %cst = arith.constant dense<0.000000e+00> : vector<64x8xf32>
    %2 = tpu.matmul %0, %1, %cst {dimension_numbers = #tpu.dot_dimension_numbers<[1], [0], [0], [1], [0, 0, 1, 1], [], []>} : vector<64x1024xbf16>, vector<1024x8xbf16>, vector<64x8xf32> -> vector<64x8xf32>
    %c0_3 = arith.constant 0 : index
    %c0_4 = arith.constant 0 : index
    %3 = vector.load %arg4[%c0_3, %c0_4] : memref<1x8xf32, #tpu.memory_space<vmem>>, vector<1x8xf32>
    %4 = vector.broadcast %3 : vector<1x8xf32> to vector<64x8xf32>
    %5 = arith.addf %2, %4 : vector<64x8xf32>
    %c0_5 = arith.constant 0 : index
    %c0_6 = arith.constant 0 : index
    %6 = vector.load %arg5[%c0_5, %c0_6] : memref<64x8xf32, #tpu.memory_space<vmem>>, vector<64x8xf32>
    tpu.vector_store %arg5[%c0_5, %c0_6], %5 {strides = array<i32>} : memref<64x8xf32, #tpu.memory_space<vmem>>, vector<64x8xf32>,
    return
  }
  func.func @transform_0(%arg0: i32, %arg1: i32) -> (i32, i32) {
    %c0_i32 = arith.constant 0 : i32
    %c0_i32_0 = arith.constant 0 : i32
    return %arg0, %c0_i32 : i32, i32
  }
  func.func @transform_1(%arg0: i32, %arg1: i32) -> (i32, i32) {
    %c0_i32 = arith.constant 0 : i32
    %c0_i32_0 = arith.constant 0 : i32
    return %c0_i32, %arg1 : i32, i32
  }
  func.func @transform_2(%arg0: i32, %arg1: i32) -> (i32, i32) {
    %c0_i32 = arith.constant 0 : i32
    %c0_i32_0 = arith.constant 0 : i32
    return %c0_i32, %arg1 : i32, i32
  }
  func.func @transform_3(%arg0: i32, %arg1: i32) -> (i32, i32) {
    %c0_i32 = arith.constant 0 : i32
    return %arg0, %arg1 : i32, i32
  }
}

</mosaic_0001>

<llo_original>
// kernel: multiscale_discriminator_forward.22
$region0: #{multiscale_discriminator_forward.22}
  #allocation0 [shape = 'u32[]', space=smem, size = 0x4, offset = 0x4, fixed_abs, tag = 'smem constant byte address 0x4 - core index']
  #allocation1 [shape = 'u32[144,128]{1,0:T(1,128)}', space=vmem, size = 0x12000, scoped, tag = 'internal scratch']
  %s0 = inlined_call_operand.vmem [shape: f32[2,8,32], index: 0, kind: input, shape index: {}]
  %s1 = inlined_call_operand.vmem [shape: f32[1,8,1], index: 1, kind: input, shape index: {}]
  %s2 = inlined_call_operand.vmem [shape: f32[1,1,32], index: 2, kind: input, shape index: {}]
  %s3 = inlined_call_operand.vmem [shape: f32[2,8,32], index: 3, kind: output, shape index: {}]
  %s4 = sld [smem:[#allocation0]]
  $region45: #{multiscale_discriminator_forward.22} parent=0
    _
  %s6 = ssub.s32 1, %s4
  %s7 = scalar_select 0, %s6, %s4
  loop: start=0, step=1, limit=4
  $region2: #{multiscale_discriminator_forward.22} parent=0 // loop_pre_header
    _
  $region3: #{multiscale_discriminator_forward.22} parent=0 // loop_header
    %s9 = sphi 0, %s13
    %p10 = scmp.ge.s32.totalorder %s9, 4
    %s16 = sphi 0, %s28
    %s17 = sphi 0, %s24
    %s18 = sphi 0, %s16
    %s19 = sphi 0, %s17
    %s20 = sphi 0, %s18
    %s21 = sphi 0, %s19
    %s33 = sphi 0, %s35
    %s36 = sphi 0, %s33
    %s37 = sphi 0, %s36
    %s53 = sphi 0, %s37
    %s59 = sphi 0, %s61
    %s62 = sphi 0, %s59
    %s63 = sphi 0, %s62
    %s79 = sphi 0, %s63
    %s83 = sphi 0, %s83
    %s85 = sphi 0, %s83
    %s86 = sphi 0, %s85
    %s100 = sphi 0, %s86
    %s108 = sphi 0, %s110
    %s111 = sphi 0, %s108
    %s112 = sphi 0, %s111
    %s128 = sphi 0, %s112
  $region4: #{multiscale_discriminator_forward.22} parent=0 // loop_header_branch
    %12 = sbr.rel (%p10) target = $region8
  $region5: #{multiscale_discriminator_forward.22} parent=0 // loop_body
    %s14 = ssub.s32 %s9, 1
    %s15 = ssub.s32 %s9, 2
    %s22 = sadd.s32 1, %s17
    %p23 = scmp.ge.s32.totalorder %s22, 1
    %s24 = scalar_select %p23, 0, %s22
    %s25 = sadd.s32 1, %s16
    %s26 = scalar_select %p23, %s25, %s16
    %p27 = scmp.ge.s32.totalorder %s26, 2
    %s28 = scalar_select %p27, 0, %s26
    %s29 = ssub.s32 %s16, %s28
    %s30 = ssub.s32 %s17, %s24
    %s31 = sor.u32 %s29, %s30
    %p32 = scmp.eq.s32.totalorder %s31, 0
    %s34 = sadd.s32 %s33, 1
    %s35 = scalar_select %p32, %s33, %s34
    %p38 = pneg %p32
    %p39 = scmp.eq.s32.totalorder %s9, 1
    %p40 = por %p38, %p39
    %p41 = scmp.ne.s32.totalorder %s33, %s36
    %p42 = scmp.eq.s32.totalorder %s9, 0
    %p43 = por %p41, %p42
    %p44 = scmp.ne.s32.totalorder %s33, %s36
    %p45 = scmp.eq.s32.totalorder %s14, 1
    %p46 = por %p44, %p45
    %p47 = scmp.ne.s32.totalorder %s36, %s37
    %p48 = scmp.eq.s32.totalorder %s14, 0
    %p49 = por %p47, %p48
    %p50 = scmp.ne.s32.totalorder %s36, %s37
    %p51 = scmp.eq.s32.totalorder %s15, 1
    %p52 = por %p50, %p51
    %p54 = scmp.ne.s32.totalorder %s37, %s53
    %p55 = scmp.eq.s32.totalorder %s15, 0
    %p56 = por %p54, %p55
    %s57 = ssub.s32 %s17, %s24
    %p58 = scmp.eq.s32.totalorder %s57, 0
    %s60 = sadd.s32 %s59, 1
    %s61 = scalar_select %p58, %s59, %s60
    %p64 = pneg %p58
    %p65 = scmp.eq.s32.totalorder %s9, 1
    %p66 = por %p64, %p65
    %p67 = scmp.ne.s32.totalorder %s59, %s62
    %p68 = scmp.eq.s32.totalorder %s9, 0
    %p69 = por %p67, %p68
    %p70 = scmp.ne.s32.totalorder %s59, %s62
    %p71 = scmp.eq.s32.totalorder %s14, 1
    %p72 = por %p70, %p71
    %p73 = scmp.ne.s32.totalorder %s62, %s63
    %p74 = scmp.eq.s32.totalorder %s14, 0
    %p75 = por %p73, %p74
    %p76 = scmp.ne.s32.totalorder %s62, %s63
    %p77 = scmp.eq.s32.totalorder %s15, 1
    %p78 = por %p76, %p77
    %p80 = scmp.ne.s32.totalorder %s63, %s79
    %p81 = scmp.eq.s32.totalorder %s15, 0
    %p82 = por %p80, %p81
    %s84 = sadd.s32 %s83, 1
    %p87 = scmp.eq.s32.totalorder %s9, 1
    %p88 = scmp.ne.s32.totalorder %s83, %s85
    %p89 = scmp.eq.s32.totalorder %s9, 0
    %p90 = por %p88, %p89
    %p91 = scmp.ne.s32.totalorder %s83, %s85
    %p92 = scmp.eq.s32.totalorder %s14, 1
    %p93 = por %p91, %p92
    %p94 = scmp.ne.s32.totalorder %s85, %s86
    %p95 = scmp.eq.s32.totalorder %s14, 0
    %p96 = por %p94, %p95
    %p97 = scmp.ne.s32.totalorder %s85, %s86
    %p98 = scmp.eq.s32.totalorder %s15, 1
    %p99 = por %p97, %p98
    %p101 = scmp.ne.s32.totalorder %s86, %s100
    %p102 = scmp.eq.s32.totalorder %s15, 0
    %p103 = por %p101, %p102
    %s104 = ssub.s32 %s16, %s28
    %s105 = ssub.s32 %s17, %s24
    %s106 = sor.u32 %s104, %s105
    %p107 = scmp.eq.s32.totalorder %s106, 0
    %s109 = sadd.s32 %s108, 1
    %s110 = scalar_select %p107, %s108, %s109
    %p113 = pneg %p107
    %p114 = scmp.eq.s32.totalorder %s9, 1
    %p115 = por %p113, %p114
    %p116 = scmp.ne.s32.totalorder %s108, %s111
    %p117 = scmp.eq.s32.totalorder %s9, 0
    %p118 = por %p116, %p117
    %p119 = scmp.ne.s32.totalorder %s108, %s111
    %p120 = scmp.eq.s32.totalorder %s14, 1
    %p121 = por %p119, %p120
    %p122 = scmp.ne.s32.totalorder %s111, %s112
    %p123 = scmp.eq.s32.totalorder %s14, 0
    %p124 = por %p122, %p123
    %p125 = scmp.ne.s32.totalorder %s111, %s112
    %p126 = scmp.eq.s32.totalorder %s15, 1
    %p127 = por %p125, %p126
    %p129 = scmp.ne.s32.totalorder %s112, %s128
    %p130 = scmp.eq.s32.totalorder %s15, 0
    %p131 = por %p129, %p130
    %p132 = scmp.le.s32.totalorder 1, %s9
    %p133 = scmp.lt.s32.totalorder %s9, 3
    %p134 = pnand %p132, %p133
    %p135 = pneg %p134
    // Predicated region
    $region9: #{multiscale_discriminator_forward.22} parent=5 // pred_check
      _
    $region10: #{multiscale_discriminator_forward.22} parent=5 // pred_check_branch
      %137 = sbr.rel (%p134) target = $region12
    $region11: #{multiscale_discriminator_forward.22} parent=5 // pred_region
      %s138 = ssub.s32 %s9, 1
      // Predicated region
      $region13: #{multiscale_discriminator_forward.22} parent=11 // pred_check
        %p139 = pneg %p75
      $region14: #{multiscale_discriminator_forward.22} parent=11 // pred_check_branch
        %141 = sbr.rel (%p139) target = $region16
      $region15: #{multiscale_discriminator_forward.22} parent=11 // pred_region
        %p142 = scmp.lt.s32.totalorder %s19, 0
        %s143 = scalar_select %p142, %s19, 0
        %s144 = smul.addr %s143, 8
        %s145 = scalar_lea.vmem %s1, %s144
      $region16: #{multiscale_discriminator_forward.22} parent=11 // pred_fallthru
        _
      // Predicated region
      $region17: #{multiscale_discriminator_forward.22} parent=11 // pred_check
        %p146 = pneg %p96
      $region18: #{multiscale_discriminator_forward.22} parent=11 // pred_check_branch
        %148 = sbr.rel (%p146) target = $region20
      $region19: #{multiscale_discriminator_forward.22} parent=11 // pred_region
        _
      $region20: #{multiscale_discriminator_forward.22} parent=11 // pred_fallthru
        _
    $region12: #{multiscale_discriminator_forward.22} parent=5 // pred_fallthru
      _
    %p149 = scmp.lt.s32.totalorder %s9, 2
    // Predicated region
    $region21: #{multiscale_discriminator_forward.22} parent=5 // pred_check
      %p150 = pneg %p149
    $region22: #{multiscale_discriminator_forward.22} parent=5 // pred_check_branch
      %152 = sbr.rel (%p150) target = $region24
    $region23: #{multiscale_discriminator_forward.22} parent=5 // pred_region
      // Predicated region
      $region25: #{multiscale_discriminator_forward.22} parent=23 // pred_check
        %p153 = pneg %p43
      $region26: #{multiscale_discriminator_forward.22} parent=23 // pred_check_branch
        %155 = sbr.rel (%p153) target = $region28
      $region27: #{multiscale_discriminator_forward.22} parent=23 // pred_region
        %p156 = scmp.lt.s32.totalorder %s16, 1
        %s157 = scalar_select %p156, %s16, 1
        %p158 = scmp.lt.s32.totalorder %s17, 0
        %s159 = scalar_select %p158, %s17, 0
        %s160 = sadd.s32 %s159, %s157
        %s161 = smul.addr %s160, 8
        %s162 = scalar_lea.vmem %s0, %s161
      $region28: #{multiscale_discriminator_forward.22} parent=23 // pred_fallthru
        _
    $region24: #{multiscale_discriminator_forward.22} parent=5 // pred_fallthru
      _
    %p163 = scmp.le.s32.totalorder 1, %s9
    %p164 = scmp.lt.s32.totalorder %s9, 3
    %p165 = pnand %p163, %p164
    %p166 = pneg %p165
    // Predicated region
    $region29: #{multiscale_discriminator_forward.22} parent=5 // pred_check
      _
    $region30: #{multiscale_discriminator_forward.22} parent=5 // pred_check_branch
      %168 = sbr.rel (%p165) target = $region32
    $region31: #{multiscale_discriminator_forward.22} parent=5 // pred_region
      %s169 = ssub.s32 %s9, 1
      %p170 = scmp.lt.s32.totalorder %s18, 1
      %s171 = scalar_select %p170, %s18, 1
      %p172 = scmp.lt.s32.totalorder %s19, 0
      %s173 = scalar_select %p172, %s19, 0
      %s174 = sadd.s32 %s173, %s171
      %s175 = smul.addr %s174, 8
      %s176 = scalar_lea.vmem %s0, %s175
      %p177 = pneg %p49
      %p178 = pneg %p46
      %p179 = scmp.lt.s32.totalorder %s19, 0
      %s180 = scalar_select %p179, %s19, 0
      %s181 = smul.addr %s180, 8
      %s182 = scalar_lea.vmem %s1, %s181
      %p183 = pneg %p75
      %p184 = pneg %p72
      %p185 = pneg %p96
      %p186 = pneg %p93
      %p187 = pneg %p124
      %p188 = pneg %p121
      %p189 = scmp.lt.s32.totalorder %s18, 1
      %s190 = scalar_select %p189, %s18, 1
      %p191 = scmp.lt.s32.totalorder %s19, 0
      %s192 = scalar_select %p191, %s19, 0
      %s193 = sadd.s32 %s192, %s190
      %s194 = smul.addr %s193, 8
      %s195 = scalar_lea.vmem %s3, %s194
      %p196 = scmp.lt.s32.totalorder %s18, 1
      %s197 = scalar_select %p196, %s18, 1
      %p198 = scmp.lt.s32.totalorder %s19, 0
      %s199 = scalar_select %p198, %s19, 0
      %s200 = sadd.s32 %s199, %s197
      %s201 = smul.addr %s200, 8
      %s202 = scalar_lea.vmem %s0, %s201
      %p203 = scmp.lt.s32.totalorder %s19, 0
      %s204 = scalar_select %p203, %s19, 0
      %s205 = smul.addr %s204, 8
      %s206 = scalar_lea.vmem %s1, %s205
      %p207 = scmp.lt.s32.totalorder %s18, 1
      %s208 = scalar_select %p207, %s18, 1
      %p209 = scmp.lt.s32.totalorder %s19, 0
      %s210 = scalar_select %p209, %s19, 0
      %s211 = sadd.s32 %s210, %s208
      %s212 = smul.addr %s211, 8
      %s213 = scalar_lea.vmem %s3, %s212
      %v214 = vld [vmem:[%s202] sm:$0xff]
      %v215 = vld [vmem:[%s206] sm:$0xff]
      %217 = vset.pattern.permute.xlu0 0
      %218 = vperm.xlu0 %217, %v215
      %v219 = vpop.permute.xlu0 %218
      %v221 = vmul.f32 %v214, %v219
      %v222 = vld [vmem:[%s2] sm:$0x1]
      %v224 = vlaneseq
      %v225 = vshrl.u32 %v224, 7
      %v226 = vsub.s32 0, %v225
      %v227 = vrot.slane %v222, %v226
      %v229 = vmul.f32 %v221, %v227
      %vm230 = vcmask 261120
      %231 = vst.msk [vmem:[%s213] sm:$0xff] %vm230, %v229
      %p232 = scmp.lt.s32.totalorder %s18, 1
      %s233 = scalar_select %p232, %s18, 1
      %p234 = scmp.lt.s32.totalorder %s19, 0
      %s235 = scalar_select %p234, %s19, 0
      %s236 = sadd.s32 %s235, %s233
      %s237 = smul.addr %s236, 8
      %s238 = scalar_lea.vmem %s3, %s237
      // Predicated region
      $region33: #{multiscale_discriminator_forward.22} parent=31 // pred_check
        %p239 = pneg %p121
      $region34: #{multiscale_discriminator_forward.22} parent=31 // pred_check_branch
        %241 = sbr.rel (%p239) target = $region36
      $region35: #{multiscale_discriminator_forward.22} parent=31 // pred_region
        _
      $region36: #{multiscale_discriminator_forward.22} parent=31 // pred_fallthru
        _
    $region32: #{multiscale_discriminator_forward.22} parent=5 // pred_fallthru
      _
    %p242 = scmp.le.s32.totalorder 2, %s9
    // Predicated region
    $region37: #{multiscale_discriminator_forward.22} parent=5 // pred_check
      %p243 = pneg %p242
    $region38: #{multiscale_discriminator_forward.22} parent=5 // pred_check_branch
      %245 = sbr.rel (%p243) target = $region40
    $region39: #{multiscale_discriminator_forward.22} parent=5 // pred_region
      %s246 = ssub.s32 %s9, 2
      // Predicated region
      $region41: #{multiscale_discriminator_forward.22} parent=39 // pred_check
        %p247 = pneg %p127
      $region42: #{multiscale_discriminator_forward.22} parent=39 // pred_check_branch
        %249 = sbr.rel (%p247) target = $region44
      $region43: #{multiscale_discriminator_forward.22} parent=39 // pred_region
        %p250 = scmp.lt.s32.totalorder %s20, 1
        %s251 = scalar_select %p250, %s20, 1
        %p252 = scmp.lt.s32.totalorder %s21, 0
        %s253 = scalar_select %p252, %s21, 0
        %s254 = sadd.s32 %s253, %s251
        %s255 = smul.addr %s254, 8
        %s256 = scalar_lea.vmem %s3, %s255
      $region44: #{multiscale_discriminator_forward.22} parent=39 // pred_fallthru
        _
    $region40: #{multiscale_discriminator_forward.22} parent=5 // pred_fallthru
      _
  $region6: #{multiscale_discriminator_forward.22} parent=0 // loop_footer
    %s13 = sadd.s32 1, %s9
  $region7: #{multiscale_discriminator_forward.22} parent=0 // loop_footer_branch
    %8 = sbr.rel target = $region3
  $region8: #{multiscale_discriminator_forward.22} parent=0 // loop_exit
    _

// kernel: multiscale_discriminator_forward.28
$region0: #{multiscale_discriminator_forward.28}
  #allocation0 [shape = 'u32[]', space=smem, size = 0x4, offset = 0x4, fixed_abs, tag = 'smem constant byte address 0x4 - core index']
  #allocation1 [shape = 'u32[144,128]{1,0:T(1,128)}', space=vmem, size = 0x12000, scoped, tag = 'internal scratch']
  %s0 = inlined_call_operand.vmem [shape: f32[2,8,16], index: 0, kind: input, shape index: {}]
  %s1 = inlined_call_operand.vmem [shape: f32[1,8,1], index: 1, kind: input, shape index: {}]
  %s2 = inlined_call_operand.vmem [shape: f32[1,1,16], index: 2, kind: input, shape index: {}]
  %s3 = inlined_call_operand.vmem [shape: f32[2,8,16], index: 3, kind: output, shape index: {}]
  %s4 = sld [smem:[#allocation0]]
  $region45: #{multiscale_discriminator_forward.28} parent=0
    _
  %s6 = ssub.s32 1, %s4
  %s7 = scalar_select 0, %s6, %s4
  loop: start=0, step=1, limit=4
  $region2: #{multiscale_discriminator_forward.28} parent=0 // loop_pre_header
    _
  $region3: #{multiscale_discriminator_forward.28} parent=0 // loop_header
    %s9 = sphi 0, %s13
    %p10 = scmp.ge.s32.totalorder %s9, 4
    %s16 = sphi 0, %s28
    %s17 = sphi 0, %s24
    %s18 = sphi 0, %s16
    %s19 = sphi 0, %s17
    %s20 = sphi 0, %s18
    %s21 = sphi 0, %s19
    %s33 = sphi 0, %s35
    %s36 = sphi 0, %s33
    %s37 = sphi 0, %s36
    %s53 = sphi 0, %s37
    %s59 = sphi 0, %s61
    %s62 = sphi 0, %s59
    %s63 = sphi 0, %s62
    %s79 = sphi 0, %s63
    %s83 = sphi 0, %s83
    %s85 = sphi 0, %s83
    %s86 = sphi 0, %s85
    %s100 = sphi 0, %s86
    %s108 = sphi 0, %s110
    %s111 = sphi 0, %s108
    %s112 = sphi 0, %s111
    %s128 = sphi 0, %s112
  $region4: #{multiscale_discriminator_forward.28} parent=0 // loop_header_branch
    %12 = sbr.rel (%p10) target = $region8
  $region5: #{multiscale_discriminator_forward.28} parent=0 // loop_body
    %s14 = ssub.s32 %s9, 1
    %s15 = ssub.s32 %s9, 2
    %s22 = sadd.s32 1, %s17
    %p23 = scmp.ge.s32.totalorder %s22, 1
    %s24 = scalar_select %p23, 0, %s22
    %s25 = sadd.s32 1, %s16
    %s26 = scalar_select %p23, %s25, %s16
    %p27 = scmp.ge.s32.totalorder %s26, 2
    %s28 = scalar_select %p27, 0, %s26
    %s29 = ssub.s32 %s16, %s28
    %s30 = ssub.s32 %s17, %s24
    %s31 = sor.u32 %s29, %s30
    %p32 = scmp.eq.s32.totalorder %s31, 0
    %s34 = sadd.s32 %s33, 1
    %s35 = scalar_select %p32, %s33, %s34
    %p38 = pneg %p32
    %p39 = scmp.eq.s32.totalorder %s9, 1
    %p40 = por %p38, %p39
    %p41 = scmp.ne.s32.totalorder %s33, %s36
    %p42 = scmp.eq.s32.totalorder %s9, 0
    %p43 = por %p41, %p42
    %p44 = scmp.ne.s32.totalorder %s33, %s36
    %p45 = scmp.eq.s32.totalorder %s14, 1
    %p46 = por %p44, %p45
    %p47 = scmp.ne.s32.totalorder %s36, %s37
    %p48 = scmp.eq.s32.totalorder %s14, 0
    %p49 = por %p47, %p48
    %p50 = scmp.ne.s32.totalorder %s36, %s37
    %p51 = scmp.eq.s32.totalorder %s15, 1
    %p52 = por %p50, %p51
    %p54 = scmp.ne.s32.totalorder %s37, %s53
    %p55 = scmp.eq.s32.totalorder %s15, 0
    %p56 = por %p54, %p55
    %s57 = ssub.s32 %s17, %s24
    %p58 = scmp.eq.s32.totalorder %s57, 0
    %s60 = sadd.s32 %s59, 1
    %s61 = scalar_select %p58, %s59, %s60
    %p64 = pneg %p58
    %p65 = scmp.eq.s32.totalorder %s9, 1
    %p66 = por %p64, %p65
    %p67 = scmp.ne.s32.totalorder %s59, %s62
    %p68 = scmp.eq.s32.totalorder %s9, 0
    %p69 = por %p67, %p68
    %p70 = scmp.ne.s32.totalorder %s59, %s62
    %p71 = scmp.eq.s32.totalorder %s14, 1
    %p72 = por %p70, %p71
    %p73 = scmp.ne.s32.totalorder %s62, %s63
    %p74 = scmp.eq.s32.totalorder %s14, 0
    %p75 = por %p73, %p74
    %p76 = scmp.ne.s32.totalorder %s62, %s63
    %p77 = scmp.eq.s32.totalorder %s15, 1
    %p78 = por %p76, %p77
    %p80 = scmp.ne.s32.totalorder %s63, %s79
    %p81 = scmp.eq.s32.totalorder %s15, 0
    %p82 = por %p80, %p81
    %s84 = sadd.s32 %s83, 1
    %p87 = scmp.eq.s32.totalorder %s9, 1
    %p88 = scmp.ne.s32.totalorder %s83, %s85
    %p89 = scmp.eq.s32.totalorder %s9, 0
    %p90 = por %p88, %p89
    %p91 = scmp.ne.s32.totalorder %s83, %s85
    %p92 = scmp.eq.s32.totalorder %s14, 1
    %p93 = por %p91, %p92
    %p94 = scmp.ne.s32.totalorder %s85, %s86
    %p95 = scmp.eq.s32.totalorder %s14, 0
    %p96 = por %p94, %p95
    %p97 = scmp.ne.s32.totalorder %s85, %s86
    %p98 = scmp.eq.s32.totalorder %s15, 1
    %p99 = por %p97, %p98
    %p101 = scmp.ne.s32.totalorder %s86, %s100
    %p102 = scmp.eq.s32.totalorder %s15, 0
    %p103 = por %p101, %p102
    %s104 = ssub.s32 %s16, %s28
    %s105 = ssub.s32 %s17, %s24
    %s106 = sor.u32 %s104, %s105
    %p107 = scmp.eq.s32.totalorder %s106, 0
    %s109 = sadd.s32 %s108, 1
    %s110 = scalar_select %p107, %s108, %s109
    %p113 = pneg %p107
    %p114 = scmp.eq.s32.totalorder %s9, 1
    %p115 = por %p113, %p114
    %p116 = scmp.ne.s32.totalorder %s108, %s111
    %p117 = scmp.eq.s32.totalorder %s9, 0
    %p118 = por %p116, %p117
    %p119 = scmp.ne.s32.totalorder %s108, %s111
    %p120 = scmp.eq.s32.totalorder %s14, 1
    %p121 = por %p119, %p120
    %p122 = scmp.ne.s32.totalorder %s111, %s112
    %p123 = scmp.eq.s32.totalorder %s14, 0
    %p124 = por %p122, %p123
    %p125 = scmp.ne.s32.totalorder %s111, %s112
    %p126 = scmp.eq.s32.totalorder %s15, 1
    %p127 = por %p125, %p126
    %p129 = scmp.ne.s32.totalorder %s112, %s128
    %p130 = scmp.eq.s32.totalorder %s15, 0
    %p131 = por %p129, %p130
    %p132 = scmp.le.s32.totalorder 1, %s9
    %p133 = scmp.lt.s32.totalorder %s9, 3
    %p134 = pnand %p132, %p133
    %p135 = pneg %p134
    // Predicated region
    $region9: #{multiscale_discriminator_forward.28} parent=5 // pred_check
      _
    $region10: #{multiscale_discriminator_forward.28} parent=5 // pred_check_branch
      %137 = sbr.rel (%p134) target = $region12
    $region11: #{multiscale_discriminator_forward.28} parent=5 // pred_region
      %s138 = ssub.s32 %s9, 1
      // Predicated region
      $region13: #{multiscale_discriminator_forward.28} parent=11 // pred_check
        %p139 = pneg %p75
      $region14: #{multiscale_discriminator_forward.28} parent=11 // pred_check_branch
        %141 = sbr.rel (%p139) target = $region16
      $region15: #{multiscale_discriminator_forward.28} parent=11 // pred_region
        %p142 = scmp.lt.s32.totalorder %s19, 0
        %s143 = scalar_select %p142, %s19, 0
        %s144 = smul.addr %s143, 8
        %s145 = scalar_lea.vmem %s1, %s144
      $region16: #{multiscale_discriminator_forward.28} parent=11 // pred_fallthru
        _
      // Predicated region
      $region17: #{multiscale_discriminator_forward.28} parent=11 // pred_check
        %p146 = pneg %p96
      $region18: #{multiscale_discriminator_forward.28} parent=11 // pred_check_branch
        %148 = sbr.rel (%p146) target = $region20
      $region19: #{multiscale_discriminator_forward.28} parent=11 // pred_region
        _
      $region20: #{multiscale_discriminator_forward.28} parent=11 // pred_fallthru
        _
    $region12: #{multiscale_discriminator_forward.28} parent=5 // pred_fallthru
      _
    %p149 = scmp.lt.s32.totalorder %s9, 2
    // Predicated region
    $region21: #{multiscale_discriminator_forward.28} parent=5 // pred_check
      %p150 = pneg %p149
    $region22: #{multiscale_discriminator_forward.28} parent=5 // pred_check_branch
      %152 = sbr.rel (%p150) target = $region24
    $region23: #{multiscale_discriminator_forward.28} parent=5 // pred_region
      // Predicated region
      $region25: #{multiscale_discriminator_forward.28} parent=23 // pred_check
        %p153 = pneg %p43
      $region26: #{multiscale_discriminator_forward.28} parent=23 // pred_check_branch
        %155 = sbr.rel (%p153) target = $region28
      $region27: #{multiscale_discriminator_forward.28} parent=23 // pred_region
        %p156 = scmp.lt.s32.totalorder %s16, 1
        %s157 = scalar_select %p156, %s16, 1
        %p158 = scmp.lt.s32.totalorder %s17, 0
        %s159 = scalar_select %p158, %s17, 0
        %s160 = sadd.s32 %s159, %s157
        %s161 = smul.addr %s160, 8
        %s162 = scalar_lea.vmem %s0, %s161
      $region28: #{multiscale_discriminator_forward.28} parent=23 // pred_fallthru
        _
    $region24: #{multiscale_discriminator_forward.28} parent=5 // pred_fallthru
      _
    %p163 = scmp.le.s32.totalorder 1, %s9
    %p164 = scmp.lt.s32.totalorder %s9, 3
    %p165 = pnand %p163, %p164
    %p166 = pneg %p165
    // Predicated region
    $region29: #{multiscale_discriminator_forward.28} parent=5 // pred_check
      _
    $region30: #{multiscale_discriminator_forward.28} parent=5 // pred_check_branch
      %168 = sbr.rel (%p165) target = $region32
    $region31: #{multiscale_discriminator_forward.28} parent=5 // pred_region
      %s169 = ssub.s32 %s9, 1
      %p170 = scmp.lt.s32.totalorder %s18, 1
      %s171 = scalar_select %p170, %s18, 1
      %p172 = scmp.lt.s32.totalorder %s19, 0
      %s173 = scalar_select %p172, %s19, 0
      %s174 = sadd.s32 %s173, %s171
      %s175 = smul.addr %s174, 8
      %s176 = scalar_lea.vmem %s0, %s175
      %p177 = pneg %p49
      %p178 = pneg %p46
      %p179 = scmp.lt.s32.totalorder %s19, 0
      %s180 = scalar_select %p179, %s19, 0
      %s181 = smul.addr %s180, 8
      %s182 = scalar_lea.vmem %s1, %s181
      %p183 = pneg %p75
      %p184 = pneg %p72
      %p185 = pneg %p96
      %p186 = pneg %p93
      %p187 = pneg %p124
      %p188 = pneg %p121
      %p189 = scmp.lt.s32.totalorder %s18, 1
      %s190 = scalar_select %p189, %s18, 1
      %p191 = scmp.lt.s32.totalorder %s19, 0
      %s192 = scalar_select %p191, %s19, 0
      %s193 = sadd.s32 %s192, %s190
      %s194 = smul.addr %s193, 8
      %s195 = scalar_lea.vmem %s3, %s194
      %p196 = scmp.lt.s32.totalorder %s18, 1
      %s197 = scalar_select %p196, %s18, 1
      %p198 = scmp.lt.s32.totalorder %s19, 0
      %s199 = scalar_select %p198, %s19, 0
      %s200 = sadd.s32 %s199, %s197
      %s201 = smul.addr %s200, 8
      %s202 = scalar_lea.vmem %s0, %s201
      %p203 = scmp.lt.s32.totalorder %s19, 0
      %s204 = scalar_select %p203, %s19, 0
      %s205 = smul.addr %s204, 8
      %s206 = scalar_lea.vmem %s1, %s205
      %p207 = scmp.lt.s32.totalorder %s18, 1
      %s208 = scalar_select %p207, %s18, 1
      %p209 = scmp.lt.s32.totalorder %s19, 0
      %s210 = scalar_select %p209, %s19, 0
      %s211 = sadd.s32 %s210, %s208
      %s212 = smul.addr %s211, 8
      %s213 = scalar_lea.vmem %s3, %s212
      %v214 = vld [vmem:[%s202] sm:$0xff]
      %v215 = vld [vmem:[%s206] sm:$0xff]
      %217 = vset.pattern.permute.xlu0 0
      %218 = vperm.xlu0 %217, %v215
      %v219 = vpop.permute.xlu0 %218
      %v221 = vmul.f32 %v214, %v219
      %v222 = vld [vmem:[%s2] sm:$0x1]
      %v224 = vlaneseq
      %v225 = vshrl.u32 %v224, 7
      %v226 = vsub.s32 0, %v225
      %v227 = vrot.slane %v222, %v226
      %v229 = vmul.f32 %v221, %v227
      %vm230 = vcmask 130048
      %231 = vst.msk [vmem:[%s213] sm:$0xff] %vm230, %v229
      %p232 = scmp.lt.s32.totalorder %s18, 1
      %s233 = scalar_select %p232, %s18, 1
      %p234 = scmp.lt.s32.totalorder %s19, 0
      %s235 = scalar_select %p234, %s19, 0
      %s236 = sadd.s32 %s235, %s233
      %s237 = smul.addr %s236, 8
      %s238 = scalar_lea.vmem %s3, %s237
      // Predicated region
      $region33: #{multiscale_discriminator_forward.28} parent=31 // pred_check
        %p239 = pneg %p121
      $region34: #{multiscale_discriminator_forward.28} parent=31 // pred_check_branch
        %241 = sbr.rel (%p239) target = $region36
      $region35: #{multiscale_discriminator_forward.28} parent=31 // pred_region
        _
      $region36: #{multiscale_discriminator_forward.28} parent=31 // pred_fallthru
        _
    $region32: #{multiscale_discriminator_forward.28} parent=5 // pred_fallthru
      _
    %p242 = scmp.le.s32.totalorder 2, %s9
    // Predicated region
    $region37: #{multiscale_discriminator_forward.28} parent=5 // pred_check
      %p243 = pneg %p242
    $region38: #{multiscale_discriminator_forward.28} parent=5 // pred_check_branch
      %245 = sbr.rel (%p243) target = $region40
    $region39: #{multiscale_discriminator_forward.28} parent=5 // pred_region
      %s246 = ssub.s32 %s9, 2
      // Predicated region
      $region41: #{multiscale_discriminator_forward.28} parent=39 // pred_check
        %p247 = pneg %p127
      $region42: #{multiscale_discriminator_forward.28} parent=39 // pred_check_branch
        %249 = sbr.rel (%p247) target = $region44
      $region43: #{multiscale_discriminator_forward.28} parent=39 // pred_region
        %p250 = scmp.lt.s32.totalorder %s20, 1
        %s251 = scalar_select %p250, %s20, 1
        %p252 = scmp.lt.s32.totalorder %s21, 0
        %s253 = scalar_select %p252, %s21, 0
        %s254 = sadd.s32 %s253, %s251
        %s255 = smul.addr %s254, 8
        %s256 = scalar_lea.vmem %s3, %s255
      $region44: #{multiscale_discriminator_forward.28} parent=39 // pred_fallthru
        _
    $region40: #{multiscale_discriminator_forward.28} parent=5 // pred_fallthru
      _
  $region6: #{multiscale_discriminator_forward.28} parent=0 // loop_footer
    %s13 = sadd.s32 1, %s9
  $region7: #{multiscale_discriminator_forward.28} parent=0 // loop_footer_branch
    %8 = sbr.rel target = $region3
  $region8: #{multiscale_discriminator_forward.28} parent=0 // loop_exit
    _

// kernel: multiscale_discriminator_forward.29
$region0: #{multiscale_discriminator_forward.29}
  #allocation0 [shape = 'u32[]', space=smem, size = 0x4, offset = 0x4, fixed_abs, tag = 'smem constant byte address 0x4 - core index']
  #allocation1 [shape = 'u32[144,128]{1,0:T(1,128)}', space=vmem, size = 0x12000, scoped, tag = 'internal scratch']
  %s0 = inlined_call_operand.vmem [shape: bf16[32,64], index: 0, kind: input, shape index: {}]
  %s1 = inlined_call_operand.vmem [shape: bf16[64,8], index: 1, kind: input, shape index: {}]
  %s2 = inlined_call_operand.vmem [shape: f32[1,8], index: 2, kind: input, shape index: {}]
  %s3 = inlined_call_operand.vmem [shape: bf16[32,8], index: 3, kind: output, shape index: {}]
  %s4 = sld [smem:[#allocation0]]
  $region22: #{multiscale_discriminator_forward.29} parent=0
    _
  %s6 = ssub.s32 1, %s4
  %s7 = scalar_select 0, %s6, %s4
  // Predicated region
  $region2: #{multiscale_discriminator_forward.29} parent=0 // pred_check
    _
  $region3: #{multiscale_discriminator_forward.29} parent=0 // pred_check_branch
    %9 = sbr.rel (0) target = $region5
  $region4: #{multiscale_discriminator_forward.29} parent=0 // pred_region
    _
  $region5: #{multiscale_discriminator_forward.29} parent=0 // pred_fallthru
    _
  // Predicated region
  $region6: #{multiscale_discriminator_forward.29} parent=0 // pred_check
    _
  $region7: #{multiscale_discriminator_forward.29} parent=0 // pred_check_branch
    %11 = sbr.rel (0) target = $region9
  $region8: #{multiscale_discriminator_forward.29} parent=0 // pred_region
    _
  $region9: #{multiscale_discriminator_forward.29} parent=0 // pred_fallthru
    _
  // Predicated region
  $region10: #{multiscale_discriminator_forward.29} parent=0 // pred_check
    _
  $region11: #{multiscale_discriminator_forward.29} parent=0 // pred_check_branch
    %13 = sbr.rel (0) target = $region13
  $region12: #{multiscale_discriminator_forward.29} parent=0 // pred_region
    _
  $region13: #{multiscale_discriminator_forward.29} parent=0 // pred_fallthru
    _
  %v15 = vld [vmem:[%s0] sm:$0xf]
  %v16 = vld [vmem:[%s0 + $0x4] sm:$0xf]
  %v17 = vld [vmem:[%s0 + $0x8] sm:$0xf]
  %v18 = vld [vmem:[%s0 + $0xc] sm:$0xf]
  %v19 = vld [vmem:[%s1] sm:$0xf]
  %v20 = vld [vmem:[%s1 + $0x4] sm:$0xf]
  %v21 = vld [vmem:[%s1 + $0x8] sm:$0xf]
  %v22 = vld [vmem:[%s1 + $0xc] sm:$0xf]
  %v23 = vld [vmem:[%s1 + $0x10] sm:$0xf]
  %v24 = vld [vmem:[%s1 + $0x14] sm:$0xf]
  %v25 = vld [vmem:[%s1 + $0x18] sm:$0xf]
  %v26 = vld [vmem:[%s1 + $0x1c] sm:$0xf]
  %v27 = vld [vmem:[%s2] sm:$0x1]
  %v29 = vlaneseq
  %v30 = vshrl.u32 %v29, 7
  %v31 = vsub.s32 0, %v30
  %v32 = vrot.slane %v27, %v31
  %v38 = vunpack.c.l.b16 %v15
  %v39 = vunpack.c.l.b16 %v16
  %v40 = vunpack.c.l.b16 %v17
  %v41 = vunpack.c.l.b16 %v18
  %v42 = vpack.c.b16 %v39, %v38
  %v43 = vpack.c.b16 %v41, %v40
  %v52 = vunpack.c.l.b16 %v19
  %v53 = vunpack.c.l.b16 %v20
  %v54 = vunpack.c.l.b16 %v21
  %v55 = vunpack.c.l.b16 %v22
  %v56 = vunpack.c.l.b16 %v23
  %v57 = vunpack.c.l.b16 %v24
  %v58 = vunpack.c.l.b16 %v25
  %v59 = vunpack.c.l.b16 %v26
  %v60 = vpack.c.b16 %v53, %v52
  %v61 = vpack.c.b16 %v55, %v54
  %v62 = vpack.c.b16 %v57, %v56
  %v63 = vpack.c.b16 %v59, %v58
  %vm68 = vcmask 523264
  %v70 = vsel %vm68, %v42, 0
  %v73 = vsel %vm68, %v43, 0
  %75 = vmatprep.subr.bf16.mxu0 0
  %76 = vmatpush1.bf16.msra.mxu0 0
  %77 = vmatprep.subr.bf16.mxu0 0
  %78 = vmatpush1.bf16.msra.mxu0 0
  %79 = vmatprep.subr.bf16.mxu0 0
  %80 = vmatpush1.bf16.msra.mxu0 0
  %81 = vmatprep.subr.bf16.mxu0 0
  %82 = vmatpush1.bf16.msra.mxu0 0
  %83 = vmatprep.subr.bf16.mxu0 0
  %84 = vmatpush1.bf16.msra.mxu0 %v63
  %85 = vmatprep.subr.bf16.mxu0 0
  %86 = vmatpush1.bf16.msra.mxu0 %v62
  %87 = vmatprep.subr.bf16.mxu0 0
  %88 = vmatpush1.bf16.msra.mxu0 %v61
  %89 = vmatprep.subr.bf16.mxu0 0
  %90 = vmatpush1.bf16.msra.mxu0 %v60
  %91 = vmatprep.subr.bf16.mxu0 0
  %92 = vmatpush2.bf16.msra.mxu0 0
  %93 = vmatprep.subr.bf16.mxu0 0
  %94 = vmatpush2.bf16.msra.mxu0 0
  %95 = vmatprep.subr.bf16.mxu0 0
  %96 = vmatpush2.bf16.msra.mxu0 0
  %97 = vmatprep.subr.bf16.mxu0 0
  %98 = vmatpush2.bf16.msra.mxu0 0
  %99 = vmatprep.subr.bf16.mxu0 0
  %100 = vmatpush2.bf16.msra.mxu0 0
  %101 = vmatprep.subr.bf16.mxu0 0
  %102 = vmatpush2.bf16.msra.mxu0 0
  %103 = vmatprep.subr.bf16.mxu0 0
  %104 = vmatpush2.bf16.msra.mxu0 0
  %105 = vmatprep.subr.bf16.mxu0 0
  %106 = vmatpush2.bf16.msra.mxu0 0
  %107 = vmatprep.mubr.bf16.mxu0 0
  %108 = vmatmul.mubr.bf16.gmra.mxu0 %v70
  %v109 = vpop.f32.mrf.mxu0
  %v110 = vadd.f32 %v32, %v109
  %v111 = vpop.f32.mrf.mxu0
  %v112 = vpop.f32.mrf.mxu0
  %v113 = vadd.f32 %v32, %v112
  %v114 = vpop.f32.mrf.mxu0
  %115 = vmatprep.mubr.bf16.mxu0 0
  %116 = vmatmul.mubr.bf16.gmra.mxu0 %v73
  %v117 = vpop.f32.mrf.mxu0
  %v118 = vadd.f32 %v32, %v117
  %v119 = vpop.f32.mrf.mxu0
  %v120 = vpop.f32.mrf.mxu0
  %v121 = vadd.f32 %v32, %v120
  %v122 = vpop.f32.mrf.mxu0
  %123 = vdwg.mxu0
  %vm124 = vcmp.gt.f32.partialorder %v110, 0.0
  %vm125 = vcmp.gt.f32.partialorder %v113, 0.0
  %vm126 = vcmp.gt.f32.partialorder %v118, 0.0
  %vm127 = vcmp.gt.f32.partialorder %v121, 0.0
  %v128 = vmul.f32 %v110, 0.2
  %v129 = vmul.f32 %v113, 0.2
  %v130 = vmul.f32 %v118, 0.2
  %v131 = vmul.f32 %v121, 0.2
  %v132 = vsel %vm124, %v110, %v128
  %v133 = vsel %vm125, %v113, %v129
  %v134 = vsel %vm126, %v118, %v130
  %v135 = vsel %vm127, %v121, %v131
  %v136 = vpack.c.bf16 %v133, %v132
  %v137 = vpack.c.bf16 %v135, %v134
  %v140 = vunpack.c.l.b16 %v136
  %v141 = vunpack.c.h.b16 %v136
  %v142 = vunpack.c.l.b16 %v137
  %v143 = vunpack.c.h.b16 %v137
  %v144 = vpack.c.b16 %v140, %v140
  %v145 = vpack.c.b16 %v141, %v141
  %v146 = vpack.c.b16 %v142, %v142
  %v147 = vpack.c.b16 %v143, %v143
  %vm152 = vcmask 60416
  %153 = vst.msk [vmem:[%s3] sm:$0xf] %vm152, %v144
  %154 = vst.msk [vmem:[%s3 + $0x4] sm:$0xf] %vm152, %v145
  %155 = vst.msk [vmem:[%s3 + $0x8] sm:$0xf] %vm152, %v146
  %156 = vst.msk [vmem:[%s3 + $0xc] sm:$0xf] %vm152, %v147
  // Predicated region
  $region14: #{multiscale_discriminator_forward.29} parent=0 // pred_check
    _
  $region15: #{multiscale_discriminator_forward.29} parent=0 // pred_check_branch
    %158 = sbr.rel (0) target = $region17
  $region16: #{multiscale_discriminator_forward.29} parent=0 // pred_region
    _
  $region17: #{multiscale_discriminator_forward.29} parent=0 // pred_fallthru
    _
  // Predicated region
  $region18: #{multiscale_discriminator_forward.29} parent=0 // pred_check
    _
  $region19: #{multiscale_discriminator_forward.29} parent=0 // pred_check_branch
    %160 = sbr.rel (0) target = $region21
  $region20: #{multiscale_discriminator_forward.29} parent=0 // pred_region
    _
  $region21: #{multiscale_discriminator_forward.29} parent=0 // pred_fallthru
    _

// kernel: multiscale_discriminator_forward.30
$region0: #{multiscale_discriminator_forward.30}
  #allocation0 [shape = 'u32[]', space=smem, size = 0x4, offset = 0x4, fixed_abs, tag = 'smem constant byte address 0x4 - core index']
  #allocation1 [shape = 'u32[144,128]{1,0:T(1,128)}', space=vmem, size = 0x12000, scoped, tag = 'internal scratch']
  %s0 = inlined_call_operand.vmem [shape: bf16[16,128], index: 0, kind: input, shape index: {}]
  %s1 = inlined_call_operand.vmem [shape: bf16[128,16], index: 1, kind: input, shape index: {}]
  %s2 = inlined_call_operand.vmem [shape: f32[1,16], index: 2, kind: input, shape index: {}]
  %s3 = inlined_call_operand.vmem [shape: bf16[16,16], index: 3, kind: output, shape index: {}]
  %s4 = sld [smem:[#allocation0]]
  $region22: #{multiscale_discriminator_forward.30} parent=0
    _
  %s6 = ssub.s32 1, %s4
  %s7 = scalar_select 0, %s6, %s4
  // Predicated region
  $region2: #{multiscale_discriminator_forward.30} parent=0 // pred_check
    _
  $region3: #{multiscale_discriminator_forward.30} parent=0 // pred_check_branch
    %9 = sbr.rel (0) target = $region5
  $region4: #{multiscale_discriminator_forward.30} parent=0 // pred_region
    _
  $region5: #{multiscale_discriminator_forward.30} parent=0 // pred_fallthru
    _
  // Predicated region
  $region6: #{multiscale_discriminator_forward.30} parent=0 // pred_check
    _
  $region7: #{multiscale_discriminator_forward.30} parent=0 // pred_check_branch
    %11 = sbr.rel (0) target = $region9
  $region8: #{multiscale_discriminator_forward.30} parent=0 // pred_region
    _
  $region9: #{multiscale_discriminator_forward.30} parent=0 // pred_fallthru
    _
  // Predicated region
  $region10: #{multiscale_discriminator_forward.30} parent=0 // pred_check
    _
  $region11: #{multiscale_discriminator_forward.30} parent=0 // pred_check_branch
    %13 = sbr.rel (0) target = $region13
  $region12: #{multiscale_discriminator_forward.30} parent=0 // pred_region
    _
  $region13: #{multiscale_discriminator_forward.30} parent=0 // pred_fallthru
    _
  %v15 = vld [vmem:[%s0] sm:$0xf]
  %v16 = vld [vmem:[%s0 + $0x4] sm:$0xf]
  %v17 = vld [vmem:[%s1] sm:$0xf]
  %v18 = vld [vmem:[%s1 + $0x4] sm:$0xf]
  %v19 = vld [vmem:[%s1 + $0x8] sm:$0xf]
  %v20 = vld [vmem:[%s1 + $0xc] sm:$0xf]
  %v21 = vld [vmem:[%s1 + $0x10] sm:$0xf]
  %v22 = vld [vmem:[%s1 + $0x14] sm:$0xf]
  %v23 = vld [vmem:[%s1 + $0x18] sm:$0xf]
  %v24 = vld [vmem:[%s1 + $0x1c] sm:$0xf]
  %v25 = vld [vmem:[%s1 + $0x20] sm:$0xf]
  %v26 = vld [vmem:[%s1 + $0x24] sm:$0xf]
  %v27 = vld [vmem:[%s1 + $0x28] sm:$0xf]
  %v28 = vld [vmem:[%s1 + $0x2c] sm:$0xf]
  %v29 = vld [vmem:[%s1 + $0x30] sm:$0xf]
  %v30 = vld [vmem:[%s1 + $0x34] sm:$0xf]
  %v31 = vld [vmem:[%s1 + $0x38] sm:$0xf]
  %v32 = vld [vmem:[%s1 + $0x3c] sm:$0xf]
  %v33 = vld [vmem:[%s2] sm:$0x1]
  %v35 = vlaneseq
  %v36 = vshrl.u32 %v35, 7
  %v37 = vsub.s32 0, %v36
  %v38 = vrot.slane %v33, %v37
  %v42 = vunpack.c.l.b16 %v15
  %v43 = vunpack.c.l.b16 %v16
  %v44 = vpack.c.b16 %v43, %v42
  %v62 = vunpack.c.l.b16 %v17
  %v63 = vunpack.c.l.b16 %v18
  %v64 = vunpack.c.l.b16 %v19
  %v65 = vunpack.c.l.b16 %v20
  %v66 = vunpack.c.l.b16 %v21
  %v67 = vunpack.c.l.b16 %v22
  %v68 = vunpack.c.l.b16 %v23
  %v69 = vunpack.c.l.b16 %v24
  %v70 = vunpack.c.l.b16 %v25
  %v71 = vunpack.c.l.b16 %v26
  %v72 = vunpack.c.l.b16 %v27
  %v73 = vunpack.c.l.b16 %v28
  %v74 = vunpack.c.l.b16 %v29
  %v75 = vunpack.c.l.b16 %v30
  %v76 = vunpack.c.l.b16 %v31
  %v77 = vunpack.c.l.b16 %v32
  %v78 = vpack.c.b16 %v63, %v62
  %v79 = vpack.c.b16 %v65, %v64
  %v80 = vpack.c.b16 %v67, %v66
  %v81 = vpack.c.b16 %v69, %v68
  %v82 = vpack.c.b16 %v71, %v70
  %v83 = vpack.c.b16 %v73, %v72
  %v84 = vpack.c.b16 %v75, %v74
  %v85 = vpack.c.b16 %v77, %v76
  %94 = vmatprep.subr.bf16.mxu0 0
  %95 = vmatpush1.bf16.msra.mxu0 %v85
  %96 = vmatprep.subr.bf16.mxu0 0
  %97 = vmatpush1.bf16.msra.mxu0 %v84
  %98 = vmatprep.subr.bf16.mxu0 0
  %99 = vmatpush1.bf16.msra.mxu0 %v83
  %100 = vmatprep.subr.bf16.mxu0 0
  %101 = vmatpush1.bf16.msra.mxu0 %v82
  %102 = vmatprep.subr.bf16.mxu0 0
  %103 = vmatpush1.bf16.msra.mxu0 %v81
  %104 = vmatprep.subr.bf16.mxu0 0
  %105 = vmatpush1.bf16.msra.mxu0 %v80
  %106 = vmatprep.subr.bf16.mxu0 0
  %107 = vmatpush1.bf16.msra.mxu0 %v79
  %108 = vmatprep.subr.bf16.mxu0 0
  %109 = vmatpush1.bf16.msra.mxu0 %v78
  %110 = vmatprep.subr.bf16.mxu0 0
  %111 = vmatpush2.bf16.msra.mxu0 0
  %112 = vmatprep.subr.bf16.mxu0 0
  %113 = vmatpush2.bf16.msra.mxu0 0
  %114 = vmatprep.subr.bf16.mxu0 0
  %115 = vmatpush2.bf16.msra.mxu0 0
  %116 = vmatprep.subr.bf16.mxu0 0
  %117 = vmatpush2.bf16.msra.mxu0 0
  %118 = vmatprep.subr.bf16.mxu0 0
  %119 = vmatpush2.bf16.msra.mxu0 0
  %120 = vmatprep.subr.bf16.mxu0 0
  %121 = vmatpush2.bf16.msra.mxu0 0
  %122 = vmatprep.subr.bf16.mxu0 0
  %123 = vmatpush2.bf16.msra.mxu0 0
  %124 = vmatprep.subr.bf16.mxu0 0
  %125 = vmatpush2.bf16.msra.mxu0 0
  %126 = vmatprep.mubr.bf16.mxu0 0
  %127 = vmatmul.mubr.bf16.gmra.mxu0 %v44
  %v128 = vpop.f32.mrf.mxu0
  %v129 = vadd.f32 %v38, %v128
  %v130 = vpop.f32.mrf.mxu0
  %v131 = vpop.f32.mrf.mxu0
  %v132 = vadd.f32 %v38, %v131
  %v133 = vpop.f32.mrf.mxu0
  %134 = vdwg.mxu0
  %vm135 = vcmp.gt.f32.partialorder %v129, 0.0
  %vm136 = vcmp.gt.f32.partialorder %v132, 0.0
  %v137 = vmul.f32 %v129, 0.2
  %v138 = vmul.f32 %v132, 0.2
  %v139 = vsel %vm135, %v129, %v137
  %v140 = vsel %vm136, %v132, %v138
  %v141 = vpack.c.bf16 %v140, %v139
  %v143 = vunpack.c.l.b16 %v141
  %v144 = vunpack.c.h.b16 %v141
  %v145 = vpack.c.b16 %v143, %v143
  %v146 = vpack.c.b16 %v144, %v144
  %vm149 = vcmask 125952
  %150 = vst.msk [vmem:[%s3] sm:$0xf] %vm149, %v145
  %151 = vst.msk [vmem:[%s3 + $0x4] sm:$0xf] %vm149, %v146
  // Predicated region
  $region14: #{multiscale_discriminator_forward.30} parent=0 // pred_check
    _
  $region15: #{multiscale_discriminator_forward.30} parent=0 // pred_check_branch
    %153 = sbr.rel (0) target = $region17
  $region16: #{multiscale_discriminator_forward.30} parent=0 // pred_region
    _
  $region17: #{multiscale_discriminator_forward.30} parent=0 // pred_fallthru
    _
  // Predicated region
  $region18: #{multiscale_discriminator_forward.30} parent=0 // pred_check
    _
  $region19: #{multiscale_discriminator_forward.30} parent=0 // pred_check_branch
    %155 = sbr.rel (0) target = $region21
  $region20: #{multiscale_discriminator_forward.30} parent=0 // pred_region
    _
  $region21: #{multiscale_discriminator_forward.30} parent=0 // pred_fallthru
    _

// kernel: multiscale_discriminator_forward.31
$region0: #{multiscale_discriminator_forward.31}
  #allocation0 [shape = 'u32[]', space=smem, size = 0x4, offset = 0x4, fixed_abs, tag = 'smem constant byte address 0x4 - core index']
  #allocation1 [shape = 'u32[144,128]{1,0:T(1,128)}', space=vmem, size = 0x12000, scoped, tag = 'internal scratch']
  %s0 = inlined_call_operand.vmem [shape: bf16[16,256], index: 0, kind: input, shape index: {}]
  %s1 = inlined_call_operand.vmem [shape: bf16[256,32], index: 1, kind: input, shape index: {}]
  %s2 = inlined_call_operand.vmem [shape: f32[1,32], index: 2, kind: input, shape index: {}]
  %s3 = inlined_call_operand.vmem [shape: bf16[16,32], index: 3, kind: output, shape index: {}]
  %s4 = sld [smem:[#allocation0]]
  $region22: #{multiscale_discriminator_forward.31} parent=0
    _
  %s6 = ssub.s32 1, %s4
  %s7 = scalar_select 0, %s6, %s4
  // Predicated region
  $region2: #{multiscale_discriminator_forward.31} parent=0 // pred_check
    _
  $region3: #{multiscale_discriminator_forward.31} parent=0 // pred_check_branch
    %9 = sbr.rel (0) target = $region5
  $region4: #{multiscale_discriminator_forward.31} parent=0 // pred_region
    _
  $region5: #{multiscale_discriminator_forward.31} parent=0 // pred_fallthru
    _
  // Predicated region
  $region6: #{multiscale_discriminator_forward.31} parent=0 // pred_check
    _
  $region7: #{multiscale_discriminator_forward.31} parent=0 // pred_check_branch
    %11 = sbr.rel (0) target = $region9
  $region8: #{multiscale_discriminator_forward.31} parent=0 // pred_region
    _
  $region9: #{multiscale_discriminator_forward.31} parent=0 // pred_fallthru
    _
  // Predicated region
  $region10: #{multiscale_discriminator_forward.31} parent=0 // pred_check
    _
  $region11: #{multiscale_discriminator_forward.31} parent=0 // pred_check_branch
    %13 = sbr.rel (0) target = $region13
  $region12: #{multiscale_discriminator_forward.31} parent=0 // pred_region
    _
  $region13: #{multiscale_discriminator_forward.31} parent=0 // pred_fallthru
    _
  %v15 = vld [vmem:[%s0] sm:$0xff]
  %v16 = vld [vmem:[%s0 + $0x8] sm:$0xff]
  %v17 = vld [vmem:[%s1] sm:$0xf]
  %v18 = vld [vmem:[%s1 + $0x4] sm:$0xf]
  %v19 = vld [vmem:[%s1 + $0x8] sm:$0xf]
  %v20 = vld [vmem:[%s1 + $0xc] sm:$0xf]
  %v21 = vld [vmem:[%s1 + $0x10] sm:$0xf]
  %v22 = vld [vmem:[%s1 + $0x14] sm:$0xf]
  %v23 = vld [vmem:[%s1 + $0x18] sm:$0xf]
  %v24 = vld [vmem:[%s1 + $0x1c] sm:$0xf]
  %v25 = vld [vmem:[%s1 + $0x20] sm:$0xf]
  %v26 = vld [vmem:[%s1 + $0x24] sm:$0xf]
  %v27 = vld [vmem:[%s1 + $0x28] sm:$0xf]
  %v28 = vld [vmem:[%s1 + $0x2c] sm:$0xf]
  %v29 = vld [vmem:[%s1 + $0x30] sm:$0xf]
  %v30 = vld [vmem:[%s1 + $0x34] sm:$0xf]
  %v31 = vld [vmem:[%s1 + $0x38] sm:$0xf]
  %v32 = vld [vmem:[%s1 + $0x3c] sm:$0xf]
  %v33 = vld [vmem:[%s1 + $0x40] sm:$0xf]
  %v34 = vld [vmem:[%s1 + $0x44] sm:$0xf]
  %v35 = vld [vmem:[%s1 + $0x48] sm:$0xf]
  %v36 = vld [vmem:[%s1 + $0x4c] sm:$0xf]
  %v37 = vld [vmem:[%s1 + $0x50] sm:$0xf]
  %v38 = vld [vmem:[%s1 + $0x54] sm:$0xf]
  %v39 = vld [vmem:[%s1 + $0x58] sm:$0xf]
  %v40 = vld [vmem:[%s1 + $0x5c] sm:$0xf]
  %v41 = vld [vmem:[%s1 + $0x60] sm:$0xf]
  %v42 = vld [vmem:[%s1 + $0x64] sm:$0xf]
  %v43 = vld [vmem:[%s1 + $0x68] sm:$0xf]
  %v44 = vld [vmem:[%s1 + $0x6c] sm:$0xf]
  %v45 = vld [vmem:[%s1 + $0x70] sm:$0xf]
  %v46 = vld [vmem:[%s1 + $0x74] sm:$0xf]
  %v47 = vld [vmem:[%s1 + $0x78] sm:$0xf]
  %v48 = vld [vmem:[%s1 + $0x7c] sm:$0xf]
  %v49 = vld [vmem:[%s2] sm:$0x1]
  %v51 = vlaneseq
  %v52 = vshrl.u32 %v51, 7
  %v53 = vsub.s32 0, %v52
  %v54 = vrot.slane %v49, %v53
  %v58 = vunpack.c.l.b16 %v15
  %v59 = vunpack.c.h.b16 %v15
  %v60 = vunpack.c.l.b16 %v16
  %v61 = vunpack.c.h.b16 %v16
  %v62 = vpack.c.b16 %v60, %v58
  %v63 = vpack.c.b16 %v61, %v59
  %v98 = vunpack.c.l.b16 %v17
  %v99 = vunpack.c.l.b16 %v18
  %v100 = vunpack.c.l.b16 %v19
  %v101 = vunpack.c.l.b16 %v20
  %v102 = vunpack.c.l.b16 %v21
  %v103 = vunpack.c.l.b16 %v22
  %v104 = vunpack.c.l.b16 %v23
  %v105 = vunpack.c.l.b16 %v24
  %v106 = vunpack.c.l.b16 %v25
  %v107 = vunpack.c.l.b16 %v26
  %v108 = vunpack.c.l.b16 %v27
  %v109 = vunpack.c.l.b16 %v28
  %v110 = vunpack.c.l.b16 %v29
  %v111 = vunpack.c.l.b16 %v30
  %v112 = vunpack.c.l.b16 %v31
  %v113 = vunpack.c.l.b16 %v32
  %v114 = vunpack.c.l.b16 %v33
  %v115 = vunpack.c.l.b16 %v34
  %v116 = vunpack.c.l.b16 %v35
  %v117 = vunpack.c.l.b16 %v36
  %v118 = vunpack.c.l.b16 %v37
  %v119 = vunpack.c.l.b16 %v38
  %v120 = vunpack.c.l.b16 %v39
  %v121 = vunpack.c.l.b16 %v40
  %v122 = vunpack.c.l.b16 %v41
  %v123 = vunpack.c.l.b16 %v42
  %v124 = vunpack.c.l.b16 %v43
  %v125 = vunpack.c.l.b16 %v44
  %v126 = vunpack.c.l.b16 %v45
  %v127 = vunpack.c.l.b16 %v46
  %v128 = vunpack.c.l.b16 %v47
  %v129 = vunpack.c.l.b16 %v48
  %v130 = vpack.c.b16 %v99, %v98
  %v131 = vpack.c.b16 %v101, %v100
  %v132 = vpack.c.b16 %v103, %v102
  %v133 = vpack.c.b16 %v105, %v104
  %v134 = vpack.c.b16 %v107, %v106
  %v135 = vpack.c.b16 %v109, %v108
  %v136 = vpack.c.b16 %v111, %v110
  %v137 = vpack.c.b16 %v113, %v112
  %v138 = vpack.c.b16 %v115, %v114
  %v139 = vpack.c.b16 %v117, %v116
  %v140 = vpack.c.b16 %v119, %v118
  %v141 = vpack.c.b16 %v121, %v120
  %v142 = vpack.c.b16 %v123, %v122
  %v143 = vpack.c.b16 %v125, %v124
  %v144 = vpack.c.b16 %v127, %v126
  %v145 = vpack.c.b16 %v129, %v128
  %162 = vmatprep.subr.bf16.mxu0 0
  %163 = vmatpush1.bf16.msra.mxu0 %v137
  %164 = vmatprep.subr.bf16.mxu0 0
  %165 = vmatpush1.bf16.msra.mxu0 %v136
  %166 = vmatprep.subr.bf16.mxu0 0
  %167 = vmatpush1.bf16.msra.mxu0 %v135
  %168 = vmatprep.subr.bf16.mxu0 0
  %169 = vmatpush1.bf16.msra.mxu0 %v134
  %170 = vmatprep.subr.bf16.mxu0 0
  %171 = vmatpush1.bf16.msra.mxu0 %v133
  %172 = vmatprep.subr.bf16.mxu0 0
  %173 = vmatpush1.bf16.msra.mxu0 %v132
  %174 = vmatprep.subr.bf16.mxu0 0
  %175 = vmatpush1.bf16.msra.mxu0 %v131
  %176 = vmatprep.subr.bf16.mxu0 0
  %177 = vmatpush1.bf16.msra.mxu0 %v130
  %178 = vmatprep.subr.bf16.mxu0 0
  %179 = vmatpush2.bf16.msra.mxu0 %v145
  %180 = vmatprep.subr.bf16.mxu0 0
  %181 = vmatpush2.bf16.msra.mxu0 %v144
  %182 = vmatprep.subr.bf16.mxu0 0
  %183 = vmatpush2.bf16.msra.mxu0 %v143
  %184 = vmatprep.subr.bf16.mxu0 0
  %185 = vmatpush2.bf16.msra.mxu0 %v142
  %186 = vmatprep.subr.bf16.mxu0 0
  %187 = vmatpush2.bf16.msra.mxu0 %v141
  %188 = vmatprep.subr.bf16.mxu0 0
  %189 = vmatpush2.bf16.msra.mxu0 %v140
  %190 = vmatprep.subr.bf16.mxu0 0
  %191 = vmatpush2.bf16.msra.mxu0 %v139
  %192 = vmatprep.subr.bf16.mxu0 0
  %193 = vmatpush2.bf16.msra.mxu0 %v138
  %194 = vmatprep.mubr.bf16.mxu0 %v63
  %195 = vmatmul.mubr.bf16.gmra.mxu0 %v62
  %v196 = vpop.f32.mrf.mxu0
  %v197 = vadd.f32 %v54, %v196
  %v198 = vpop.f32.mrf.mxu0
  %v199 = vpop.f32.mrf.mxu0
  %v200 = vadd.f32 %v54, %v199
  %v201 = vpop.f32.mrf.mxu0
  %202 = vdwg.mxu0
  %vm203 = vcmp.gt.f32.partialorder %v197, 0.0
  %vm204 = vcmp.gt.f32.partialorder %v200, 0.0
  %v205 = vmul.f32 %v197, 0.2
  %v206 = vmul.f32 %v200, 0.2
  %v207 = vsel %vm203, %v197, %v205
  %v208 = vsel %vm204, %v200, %v206
  %v209 = vpack.c.bf16 %v208, %v207
  %v211 = vunpack.c.l.b16 %v209
  %v212 = vunpack.c.h.b16 %v209
  %v213 = vpack.c.b16 %v211, %v211
  %v214 = vpack.c.b16 %v212, %v212
  %vm217 = vcmask 257024
  %218 = vst.msk [vmem:[%s3] sm:$0xf] %vm217, %v213
  %219 = vst.msk [vmem:[%s3 + $0x4] sm:$0xf] %vm217, %v214
  // Predicated region
  $region14: #{multiscale_discriminator_forward.31} parent=0 // pred_check
    _
  $region15: #{multiscale_discriminator_forward.31} parent=0 // pred_check_branch
    %221 = sbr.rel (0) target = $region17
  $region16: #{multiscale_discriminator_forward.31} parent=0 // pred_region
    _
  $region17: #{multiscale_discriminator_forward.31} parent=0 // pred_fallthru
    _
  // Predicated region
  $region18: #{multiscale_discriminator_forward.31} parent=0 // pred_check
    _
  $region19: #{multiscale_discriminator_forward.31} parent=0 // pred_check_branch
    %223 = sbr.rel (0) target = $region21
  $region20: #{multiscale_discriminator_forward.31} parent=0 // pred_region
    _
  $region21: #{multiscale_discriminator_forward.31} parent=0 // pred_fallthru
    _

// kernel: multiscale_discriminator_forward.32
$region0: #{multiscale_discriminator_forward.32}
  #allocation0 [shape = 'u32[]', space=smem, size = 0x4, offset = 0x4, fixed_abs, tag = 'smem constant byte address 0x4 - core index']
  #allocation1 [shape = 'u32[144,128]{1,0:T(1,128)}', space=vmem, size = 0x12000, scoped, tag = 'internal scratch']
  %s0 = inlined_call_operand.vmem [shape: bf16[32,512], index: 0, kind: input, shape index: {}]
  %s1 = inlined_call_operand.vmem [shape: bf16[512,64], index: 1, kind: input, shape index: {}]
  %s2 = inlined_call_operand.vmem [shape: f32[1,64], index: 2, kind: input, shape index: {}]
  %s3 = inlined_call_operand.vmem [shape: bf16[32,64], index: 3, kind: output, shape index: {}]
  %s4 = sld [smem:[#allocation0]]
  $region22: #{multiscale_discriminator_forward.32} parent=0
    _
  %s6 = ssub.s32 1, %s4
  %s7 = scalar_select 0, %s6, %s4
  // Predicated region
  $region2: #{multiscale_discriminator_forward.32} parent=0 // pred_check
    _
  $region3: #{multiscale_discriminator_forward.32} parent=0 // pred_check_branch
    %9 = sbr.rel (0) target = $region5
  $region4: #{multiscale_discriminator_forward.32} parent=0 // pred_region
    _
  $region5: #{multiscale_discriminator_forward.32} parent=0 // pred_fallthru
    _
  // Predicated region
  $region6: #{multiscale_discriminator_forward.32} parent=0 // pred_check
    _
  $region7: #{multiscale_discriminator_forward.32} parent=0 // pred_check_branch
    %11 = sbr.rel (0) target = $region9
  $region8: #{multiscale_discriminator_forward.32} parent=0 // pred_region
    _
  $region9: #{multiscale_discriminator_forward.32} parent=0 // pred_fallthru
    _
  // Predicated region
  $region10: #{multiscale_discriminator_forward.32} parent=0 // pred_check
    _
  $region11: #{multiscale_discriminator_forward.32} parent=0 // pred_check_branch
    %13 = sbr.rel (0) target = $region13
  $region12: #{multiscale_discriminator_forward.32} parent=0 // pred_region
    _
  $region13: #{multiscale_discriminator_forward.32} parent=0 // pred_fallthru
    _
  %v15 = vld [vmem:[%s0] sm:$0xff]
  %v16 = vld [vmem:[%s0 + $0x8] sm:$0xff]
  %v17 = vld [vmem:[%s0 + $0x10] sm:$0xff]
  %v18 = vld [vmem:[%s0 + $0x18] sm:$0xff]
  %v19 = vld [vmem:[%s0 + $0x20] sm:$0xff]
  %v20 = vld [vmem:[%s0 + $0x28] sm:$0xff]
  %v21 = vld [vmem:[%s0 + $0x30] sm:$0xff]
  %v22 = vld [vmem:[%s0 + $0x38] sm:$0xff]
  %v23 = vld [vmem:[%s1] sm:$0xf]
  %v24 = vld [vmem:[%s1 + $0x4] sm:$0xf]
  %v25 = vld [vmem:[%s1 + $0x8] sm:$0xf]
  %v26 = vld [vmem:[%s1 + $0xc] sm:$0xf]
  %v27 = vld [vmem:[%s1 + $0x10] sm:$0xf]
  %v28 = vld [vmem:[%s1 + $0x14] sm:$0xf]
  %v29 = vld [vmem:[%s1 + $0x18] sm:$0xf]
  %v30 = vld [vmem:[%s1 + $0x1c] sm:$0xf]
  %v31 = vld [vmem:[%s1 + $0x20] sm:$0xf]
  %v32 = vld [vmem:[%s1 + $0x24] sm:$0xf]
  %v33 = vld [vmem:[%s1 + $0x28] sm:$0xf]
  %v34 = vld [vmem:[%s1 + $0x2c] sm:$0xf]
  %v35 = vld [vmem:[%s1 + $0x30] sm:$0xf]
  %v36 = vld [vmem:[%s1 + $0x34] sm:$0xf]
  %v37 = vld [vmem:[%s1 + $0x38] sm:$0xf]
  %v38 = vld [vmem:[%s1 + $0x3c] sm:$0xf]
  %v39 = vld [vmem:[%s1 + $0x40] sm:$0xf]
  %v40 = vld [vmem:[%s1 + $0x44] sm:$0xf]
  %v41 = vld [vmem:[%s1 + $0x48] sm:$0xf]
  %v42 = vld [vmem:[%s1 + $0x4c] sm:$0xf]
  %v43 = vld [vmem:[%s1 + $0x50] sm:$0xf]
  %v44 = vld [vmem:[%s1 + $0x54] sm:$0xf]
  %v45 = vld [vmem:[%s1 + $0x58] sm:$0xf]
  %v46 = vld [vmem:[%s1 + $0x5c] sm:$0xf]
  %v47 = vld [vmem:[%s1 + $0x60] sm:$0xf]
  %v48 = vld [vmem:[%s1 + $0x64] sm:$0xf]
  %v49 = vld [vmem:[%s1 + $0x68] sm:$0xf]
  %v50 = vld [vmem:[%s1 + $0x6c] sm:$0xf]
  %v51 = vld [vmem:[%s1 + $0x70] sm:$0xf]
  %v52 = vld [vmem:[%s1 + $0x74] sm:$0xf]
  %v53 = vld [vmem:[%s1 + $0x78] sm:$0xf]
  %v54 = vld [vmem:[%s1 + $0x7c] sm:$0xf]
  %v55 = vld [vmem:[%s1 + $0x80] sm:$0xf]
  %v56 = vld [vmem:[%s1 + $0x84] sm:$0xf]
  %v57 = vld [vmem:[%s1 + $0x88] sm:$0xf]
  %v58 = vld [vmem:[%s1 + $0x8c] sm:$0xf]
  %v59 = vld [vmem:[%s1 + $0x90] sm:$0xf]
  %v60 = vld [vmem:[%s1 + $0x94] sm:$0xf]
  %v61 = vld [vmem:[%s1 + $0x98] sm:$0xf]
  %v62 = vld [vmem:[%s1 + $0x9c] sm:$0xf]
  %v63 = vld [vmem:[%s1 + $0xa0] sm:$0xf]
  %v64 = vld [vmem:[%s1 + $0xa4] sm:$0xf]
  %v65 = vld [vmem:[%s1 + $0xa8] sm:$0xf]
  %v66 = vld [vmem:[%s1 + $0xac] sm:$0xf]
  %v67 = vld [vmem:[%s1 + $0xb0] sm:$0xf]
  %v68 = vld [vmem:[%s1 + $0xb4] sm:$0xf]
  %v69 = vld [vmem:[%s1 + $0xb8] sm:$0xf]
  %v70 = vld [vmem:[%s1 + $0xbc] sm:$0xf]
  %v71 = vld [vmem:[%s1 + $0xc0] sm:$0xf]
  %v72 = vld [vmem:[%s1 + $0xc4] sm:$0xf]
  %v73 = vld [vmem:[%s1 + $0xc8] sm:$0xf]
  %v74 = vld [vmem:[%s1 + $0xcc] sm:$0xf]
  %v75 = vld [vmem:[%s1 + $0xd0] sm:$0xf]
  %v76 = vld [vmem:[%s1 + $0xd4] sm:$0xf]
  %v77 = vld [vmem:[%s1 + $0xd8] sm:$0xf]
  %v78 = vld [vmem:[%s1 + $0xdc] sm:$0xf]
  %v79 = vld [vmem:[%s1 + $0xe0] sm:$0xf]
  %v80 = vld [vmem:[%s1 + $0xe4] sm:$0xf]
  %v81 = vld [vmem:[%s1 + $0xe8] sm:$0xf]
  %v82 = vld [vmem:[%s1 + $0xec] sm:$0xf]
  %v83 = vld [vmem:[%s1 + $0xf0] sm:$0xf]
  %v84 = vld [vmem:[%s1 + $0xf4] sm:$0xf]
  %v85 = vld [vmem:[%s1 + $0xf8] sm:$0xf]
  %v86 = vld [vmem:[%s1 + $0xfc] sm:$0xf]
  %v87 = vld [vmem:[%s2] sm:$0x1]
  %v89 = vlaneseq
  %v90 = vshrl.u32 %v89, 7
  %v91 = vsub.s32 0, %v90
  %v92 = vrot.slane %v87, %v91
  %v102 = vunpack.c.l.b16 %v15
  %v103 = vunpack.c.h.b16 %v15
  %v104 = vunpack.c.l.b16 %v16
  %v105 = vunpack.c.h.b16 %v16
  %v106 = vunpack.c.l.b16 %v17
  %v107 = vunpack.c.h.b16 %v17
  %v108 = vunpack.c.l.b16 %v18
  %v109 = vunpack.c.h.b16 %v18
  %v110 = vunpack.c.l.b16 %v19
  %v111 = vunpack.c.h.b16 %v19
  %v112 = vunpack.c.l.b16 %v20
  %v113 = vunpack.c.h.b16 %v20
  %v114 = vunpack.c.l.b16 %v21
  %v115 = vunpack.c.h.b16 %v21
  %v116 = vunpack.c.l.b16 %v22
  %v117 = vunpack.c.h.b16 %v22
  %v118 = vpack.c.b16 %v106, %v102
  %v119 = vpack.c.b16 %v107, %v103
  %v120 = vpack.c.b16 %v108, %v104
  %v121 = vpack.c.b16 %v109, %v105
  %v122 = vpack.c.b16 %v114, %v110
  %v123 = vpack.c.b16 %v115, %v111
  %v124 = vpack.c.b16 %v116, %v112
  %v125 = vpack.c.b16 %v117, %v113
  %v198 = vunpack.c.l.b16 %v23
  %v199 = vunpack.c.l.b16 %v24
  %v200 = vunpack.c.l.b16 %v25
  %v201 = vunpack.c.l.b16 %v26
  %v202 = vunpack.c.l.b16 %v27
  %v203 = vunpack.c.l.b16 %v28
  %v204 = vunpack.c.l.b16 %v29
  %v205 = vunpack.c.l.b16 %v30
  %v206 = vunpack.c.l.b16 %v31
  %v207 = vunpack.c.l.b16 %v32
  %v208 = vunpack.c.l.b16 %v33
  %v209 = vunpack.c.l.b16 %v34
  %v210 = vunpack.c.l.b16 %v35
  %v211 = vunpack.c.l.b16 %v36
  %v212 = vunpack.c.l.b16 %v37
  %v213 = vunpack.c.l.b16 %v38
  %v214 = vunpack.c.l.b16 %v39
  %v215 = vunpack.c.l.b16 %v40
  %v216 = vunpack.c.l.b16 %v41
  %v217 = vunpack.c.l.b16 %v42
  %v218 = vunpack.c.l.b16 %v43
  %v219 = vunpack.c.l.b16 %v44
  %v220 = vunpack.c.l.b16 %v45
  %v221 = vunpack.c.l.b16 %v46
  %v222 = vunpack.c.l.b16 %v47
  %v223 = vunpack.c.l.b16 %v48
  %v224 = vunpack.c.l.b16 %v49
  %v225 = vunpack.c.l.b16 %v50
  %v226 = vunpack.c.l.b16 %v51
  %v227 = vunpack.c.l.b16 %v52
  %v228 = vunpack.c.l.b16 %v53
  %v229 = vunpack.c.l.b16 %v54
  %v230 = vunpack.c.l.b16 %v55
  %v231 = vunpack.c.l.b16 %v56
  %v232 = vunpack.c.l.b16 %v57
  %v233 = vunpack.c.l.b16 %v58
  %v234 = vunpack.c.l.b16 %v59
  %v235 = vunpack.c.l.b16 %v60
  %v236 = vunpack.c.l.b16 %v61
  %v237 = vunpack.c.l.b16 %v62
  %v238 = vunpack.c.l.b16 %v63
  %v239 = vunpack.c.l.b16 %v64
  %v240 = vunpack.c.l.b16 %v65
  %v241 = vunpack.c.l.b16 %v66
  %v242 = vunpack.c.l.b16 %v67
  %v243 = vunpack.c.l.b16 %v68
  %v244 = vunpack.c.l.b16 %v69
  %v245 = vunpack.c.l.b16 %v70
  %v246 = vunpack.c.l.b16 %v71
  %v247 = vunpack.c.l.b16 %v72
  %v248 = vunpack.c.l.b16 %v73
  %v249 = vunpack.c.l.b16 %v74
  %v250 = vunpack.c.l.b16 %v75
  %v251 = vunpack.c.l.b16 %v76
  %v252 = vunpack.c.l.b16 %v77
  %v253 = vunpack.c.l.b16 %v78
  %v254 = vunpack.c.l.b16 %v79
  %v255 = vunpack.c.l.b16 %v80
  %v256 = vunpack.c.l.b16 %v81
  %v257 = vunpack.c.l.b16 %v82
  %v258 = vunpack.c.l.b16 %v83
  %v259 = vunpack.c.l.b16 %v84
  %v260 = vunpack.c.l.b16 %v85
  %v261 = vunpack.c.l.b16 %v86
  %v262 = vpack.c.b16 %v199, %v198
  %v263 = vpack.c.b16 %v201, %v200
  %v264 = vpack.c.b16 %v203, %v202
  %v265 = vpack.c.b16 %v205, %v204
  %v266 = vpack.c.b16 %v207, %v206
  %v267 = vpack.c.b16 %v209, %v208
  %v268 = vpack.c.b16 %v211, %v210
  %v269 = vpack.c.b16 %v213, %v212
  %v270 = vpack.c.b16 %v215, %v214
  %v271 = vpack.c.b16 %v217, %v216
  %v272 = vpack.c.b16 %v219, %v218
  %v273 = vpack.c.b16 %v221, %v220
  %v274 = vpack.c.b16 %v223, %v222
  %v275 = vpack.c.b16 %v225, %v224
  %v276 = vpack.c.b16 %v227, %v226
  %v277 = vpack.c.b16 %v229, %v228
  %v278 = vpack.c.b16 %v231, %v230
  %v279 = vpack.c.b16 %v233, %v232
  %v280 = vpack.c.b16 %v235, %v234
  %v281 = vpack.c.b16 %v237, %v236
  %v282 = vpack.c.b16 %v239, %v238
  %v283 = vpack.c.b16 %v241, %v240
  %v284 = vpack.c.b16 %v243, %v242
  %v285 = vpack.c.b16 %v245, %v244
  %v286 = vpack.c.b16 %v247, %v246
  %v287 = vpack.c.b16 %v249, %v248
  %v288 = vpack.c.b16 %v251, %v250
  %v289 = vpack.c.b16 %v253, %v252
  %v290 = vpack.c.b16 %v255, %v254
  %v291 = vpack.c.b16 %v257, %v256
  %v292 = vpack.c.b16 %v259, %v258
  %v293 = vpack.c.b16 %v261, %v260
  %326 = vmatprep.subr.bf16.mxu0 0
  %327 = vmatpush1.bf16.msra.mxu0 %v269
  %328 = vmatprep.subr.bf16.mxu0 0
  %329 = vmatpush1.bf16.msra.mxu0 %v268
  %330 = vmatprep.subr.bf16.mxu0 0
  %331 = vmatpush1.bf16.msra.mxu0 %v267
  %332 = vmatprep.subr.bf16.mxu0 0
  %333 = vmatpush1.bf16.msra.mxu0 %v266
  %334 = vmatprep.subr.bf16.mxu0 0
  %335 = vmatpush1.bf16.msra.mxu0 %v265
  %336 = vmatprep.subr.bf16.mxu0 0
  %337 = vmatpush1.bf16.msra.mxu0 %v264
  %338 = vmatprep.subr.bf16.mxu0 0
  %339 = vmatpush1.bf16.msra.mxu0 %v263
  %340 = vmatprep.subr.bf16.mxu0 0
  %341 = vmatpush1.bf16.msra.mxu0 %v262
  %342 = vmatprep.subr.bf16.mxu0 0
  %343 = vmatpush2.bf16.msra.mxu0 %v277
  %344 = vmatprep.subr.bf16.mxu0 0
  %345 = vmatpush2.bf16.msra.mxu0 %v276
  %346 = vmatprep.subr.bf16.mxu0 0
  %347 = vmatpush2.bf16.msra.mxu0 %v275
  %348 = vmatprep.subr.bf16.mxu0 0
  %349 = vmatpush2.bf16.msra.mxu0 %v274
  %350 = vmatprep.subr.bf16.mxu0 0
  %351 = vmatpush2.bf16.msra.mxu0 %v273
  %352 = vmatprep.subr.bf16.mxu0 0
  %353 = vmatpush2.bf16.msra.mxu0 %v272
  %354 = vmatprep.subr.bf16.mxu0 0
  %355 = vmatpush2.bf16.msra.mxu0 %v271
  %356 = vmatprep.subr.bf16.mxu0 0
  %357 = vmatpush2.bf16.msra.mxu0 %v270
  %358 = vmatprep.mubr.bf16.mxu0 %v119
  %359 = vmatmul.mubr.bf16.gmra.mxu0 %v118
  %v360 = vpop.f32.mrf.mxu0
  %v361 = vadd.f32 %v92, %v360
  %v362 = vpop.f32.mrf.mxu0
  %v363 = vpop.f32.mrf.mxu0
  %v364 = vadd.f32 %v92, %v363
  %v365 = vpop.f32.mrf.mxu0
  %366 = vmatprep.mubr.bf16.mxu0 %v123
  %367 = vmatmul.mubr.bf16.gmra.mxu0 %v122
  %v368 = vpop.f32.mrf.mxu0
  %v369 = vadd.f32 %v92, %v368
  %v370 = vpop.f32.mrf.mxu0
  %v371 = vpop.f32.mrf.mxu0
  %v372 = vadd.f32 %v92, %v371
  %v373 = vpop.f32.mrf.mxu0
  %374 = vdwg.mxu0
  %375 = vmatprep.subr.bf16.mxu0 0
  %376 = vmatpush1.bf16.msra.mxu0 %v285
  %377 = vmatprep.subr.bf16.mxu0 0
  %378 = vmatpush1.bf16.msra.mxu0 %v284
  %379 = vmatprep.subr.bf16.mxu0 0
  %380 = vmatpush1.bf16.msra.mxu0 %v283
  %381 = vmatprep.subr.bf16.mxu0 0
  %382 = vmatpush1.bf16.msra.mxu0 %v282
  %383 = vmatprep.subr.bf16.mxu0 0
  %384 = vmatpush1.bf16.msra.mxu0 %v281
  %385 = vmatprep.subr.bf16.mxu0 0
  %386 = vmatpush1.bf16.msra.mxu0 %v280
  %387 = vmatprep.subr.bf16.mxu0 0
  %388 = vmatpush1.bf16.msra.mxu0 %v279
  %389 = vmatprep.subr.bf16.mxu0 0
  %390 = vmatpush1.bf16.msra.mxu0 %v278
  %391 = vmatprep.subr.bf16.mxu0 0
  %392 = vmatpush2.bf16.msra.mxu0 %v293
  %393 = vmatprep.subr.bf16.mxu0 0
  %394 = vmatpush2.bf16.msra.mxu0 %v292
  %395 = vmatprep.subr.bf16.mxu0 0
  %396 = vmatpush2.bf16.msra.mxu0 %v291
  %397 = vmatprep.subr.bf16.mxu0 0
  %398 = vmatpush2.bf16.msra.mxu0 %v290
  %399 = vmatprep.subr.bf16.mxu0 0
  %400 = vmatpush2.bf16.msra.mxu0 %v289
  %401 = vmatprep.subr.bf16.mxu0 0
  %402 = vmatpush2.bf16.msra.mxu0 %v288
  %403 = vmatprep.subr.bf16.mxu0 0
  %404 = vmatpush2.bf16.msra.mxu0 %v287
  %405 = vmatprep.subr.bf16.mxu0 0
  %406 = vmatpush2.bf16.msra.mxu0 %v286
  %407 = vmatprep.mubr.bf16.mxu0 %v121
  %408 = vmatmul.mubr.bf16.gmra.mxu0 %v120
  %v409 = vpop.f32.mrf.mxu0
  %v410 = vadd.f32 %v361, %v409
  %v411 = vpop.f32.mrf.mxu0
  %v412 = vpop.f32.mrf.mxu0
  %v413 = vadd.f32 %v364, %v412
  %v414 = vpop.f32.mrf.mxu0
  %415 = vmatprep.mubr.bf16.mxu0 %v125
  %416 = vmatmul.mubr.bf16.gmra.mxu0 %v124
  %v417 = vpop.f32.mrf.mxu0
  %v418 = vadd.f32 %v369, %v417
  %v419 = vpop.f32.mrf.mxu0
  %v420 = vpop.f32.mrf.mxu0
  %v421 = vadd.f32 %v372, %v420
  %v422 = vpop.f32.mrf.mxu0
  %423 = vdwg.mxu0
  %vm424 = vcmp.gt.f32.partialorder %v410, 0.0
  %vm425 = vcmp.gt.f32.partialorder %v413, 0.0
  %vm426 = vcmp.gt.f32.partialorder %v418, 0.0
  %vm427 = vcmp.gt.f32.partialorder %v421, 0.0
  %v428 = vmul.f32 %v410, 0.2
  %v429 = vmul.f32 %v413, 0.2
  %v430 = vmul.f32 %v418, 0.2
  %v431 = vmul.f32 %v421, 0.2
  %v432 = vsel %vm424, %v410, %v428
  %v433 = vsel %vm425, %v413, %v429
  %v434 = vsel %vm426, %v418, %v430
  %v435 = vsel %vm427, %v421, %v431
  %v436 = vpack.c.bf16 %v433, %v432
  %v437 = vpack.c.bf16 %v435, %v434
  %v440 = vunpack.c.l.b16 %v436
  %v441 = vunpack.c.h.b16 %v436
  %v442 = vunpack.c.l.b16 %v437
  %v443 = vunpack.c.h.b16 %v437
  %v444 = vpack.c.b16 %v440, %v440
  %v445 = vpack.c.b16 %v441, %v441
  %v446 = vpack.c.b16 %v442, %v442
  %v447 = vpack.c.b16 %v443, %v443
  %vm452 = vcmask 519168
  %453 = vst.msk [vmem:[%s3] sm:$0xf] %vm452, %v444
  %454 = vst.msk [vmem:[%s3 + $0x4] sm:$0xf] %vm452, %v445
  %455 = vst.msk [vmem:[%s3 + $0x8] sm:$0xf] %vm452, %v446
  %456 = vst.msk [vmem:[%s3 + $0xc] sm:$0xf] %vm452, %v447
  // Predicated region
  $region14: #{multiscale_discriminator_forward.32} parent=0 // pred_check
    _
  $region15: #{multiscale_discriminator_forward.32} parent=0 // pred_check_branch
    %458 = sbr.rel (0) target = $region17
  $region16: #{multiscale_discriminator_forward.32} parent=0 // pred_region
    _
  $region17: #{multiscale_discriminator_forward.32} parent=0 // pred_fallthru
    _
  // Predicated region
  $region18: #{multiscale_discriminator_forward.32} parent=0 // pred_check
    _
  $region19: #{multiscale_discriminator_forward.32} parent=0 // pred_check_branch
    %460 = sbr.rel (0) target = $region21
  $region20: #{multiscale_discriminator_forward.32} parent=0 // pred_region
    _
  $region21: #{multiscale_discriminator_forward.32} parent=0 // pred_fallthru
    _

// kernel: multiscale_discriminator_forward.33
$region0: #{multiscale_discriminator_forward.33}
  #allocation0 [shape = 'u32[]', space=smem, size = 0x4, offset = 0x4, fixed_abs, tag = 'smem constant byte address 0x4 - core index']
  #allocation1 [shape = 'u32[144,128]{1,0:T(1,128)}', space=vmem, size = 0x12000, scoped, tag = 'internal scratch']
  %s0 = inlined_call_operand.vmem [shape: bf16[32,1024], index: 0, kind: input, shape index: {}]
  %s1 = inlined_call_operand.vmem [shape: bf16[1024,8], index: 1, kind: input, shape index: {}]
  %s2 = inlined_call_operand.vmem [shape: f32[1,8], index: 2, kind: input, shape index: {}]
  %s3 = inlined_call_operand.vmem [shape: f32[32,8], index: 3, kind: output, shape index: {}]
  %s4 = sld [smem:[#allocation0]]
  $region22: #{multiscale_discriminator_forward.33} parent=0
    _
  %s6 = ssub.s32 1, %s4
  %s7 = scalar_select 0, %s6, %s4
  // Predicated region
  $region2: #{multiscale_discriminator_forward.33} parent=0 // pred_check
    _
  $region3: #{multiscale_discriminator_forward.33} parent=0 // pred_check_branch
    %9 = sbr.rel (0) target = $region5
  $region4: #{multiscale_discriminator_forward.33} parent=0 // pred_region
    _
  $region5: #{multiscale_discriminator_forward.33} parent=0 // pred_fallthru
    _
  // Predicated region
  $region6: #{multiscale_discriminator_forward.33} parent=0 // pred_check
    _
  $region7: #{multiscale_discriminator_forward.33} parent=0 // pred_check_branch
    %11 = sbr.rel (0) target = $region9
  $region8: #{multiscale_discriminator_forward.33} parent=0 // pred_region
    _
  $region9: #{multiscale_discriminator_forward.33} parent=0 // pred_fallthru
    _
  // Predicated region
  $region10: #{multiscale_discriminator_forward.33} parent=0 // pred_check
    _
  $region11: #{multiscale_discriminator_forward.33} parent=0 // pred_check_branch
    %13 = sbr.rel (0) target = $region13
  $region12: #{multiscale_discriminator_forward.33} parent=0 // pred_region
    _
  $region13: #{multiscale_discriminator_forward.33} parent=0 // pred_fallthru
    _
  %v15 = vld [vmem:[%s0] sm:$0xff]
  %v16 = vld [vmem:[%s0 + $0x8] sm:$0xff]
  %v17 = vld [vmem:[%s0 + $0x10] sm:$0xff]
  %v18 = vld [vmem:[%s0 + $0x18] sm:$0xff]
  %v19 = vld [vmem:[%s0 + $0x20] sm:$0xff]
  %v20 = vld [vmem:[%s0 + $0x28] sm:$0xff]
  %v21 = vld [vmem:[%s0 + $0x30] sm:$0xff]
  %v22 = vld [vmem:[%s0 + $0x38] sm:$0xff]
  %v23 = vld [vmem:[%s0 + $0x40] sm:$0xff]
  %v24 = vld [vmem:[%s0 + $0x48] sm:$0xff]
  %v25 = vld [vmem:[%s0 + $0x50] sm:$0xff]
  %v26 = vld [vmem:[%s0 + $0x58] sm:$0xff]
  %v27 = vld [vmem:[%s0 + $0x60] sm:$0xff]
  %v28 = vld [vmem:[%s0 + $0x68] sm:$0xff]
  %v29 = vld [vmem:[%s0 + $0x70] sm:$0xff]
  %v30 = vld [vmem:[%s0 + $0x78] sm:$0xff]
  %v31 = vld [vmem:[%s1] sm:$0xf]
  %v32 = vld [vmem:[%s1 + $0x4] sm:$0xf]
  %v33 = vld [vmem:[%s1 + $0x8] sm:$0xf]
  %v34 = vld [vmem:[%s1 + $0xc] sm:$0xf]
  %v35 = vld [vmem:[%s1 + $0x10] sm:$0xf]
  %v36 = vld [vmem:[%s1 + $0x14] sm:$0xf]
  %v37 = vld [vmem:[%s1 + $0x18] sm:$0xf]
  %v38 = vld [vmem:[%s1 + $0x1c] sm:$0xf]
  %v39 = vld [vmem:[%s1 + $0x20] sm:$0xf]
  %v40 = vld [vmem:[%s1 + $0x24] sm:$0xf]
  %v41 = vld [vmem:[%s1 + $0x28] sm:$0xf]
  %v42 = vld [vmem:[%s1 + $0x2c] sm:$0xf]
  %v43 = vld [vmem:[%s1 + $0x30] sm:$0xf]
  %v44 = vld [vmem:[%s1 + $0x34] sm:$0xf]
  %v45 = vld [vmem:[%s1 + $0x38] sm:$0xf]
  %v46 = vld [vmem:[%s1 + $0x3c] sm:$0xf]
  %v47 = vld [vmem:[%s1 + $0x40] sm:$0xf]
  %v48 = vld [vmem:[%s1 + $0x44] sm:$0xf]
  %v49 = vld [vmem:[%s1 + $0x48] sm:$0xf]
  %v50 = vld [vmem:[%s1 + $0x4c] sm:$0xf]
  %v51 = vld [vmem:[%s1 + $0x50] sm:$0xf]
  %v52 = vld [vmem:[%s1 + $0x54] sm:$0xf]
  %v53 = vld [vmem:[%s1 + $0x58] sm:$0xf]
  %v54 = vld [vmem:[%s1 + $0x5c] sm:$0xf]
  %v55 = vld [vmem:[%s1 + $0x60] sm:$0xf]
  %v56 = vld [vmem:[%s1 + $0x64] sm:$0xf]
  %v57 = vld [vmem:[%s1 + $0x68] sm:$0xf]
  %v58 = vld [vmem:[%s1 + $0x6c] sm:$0xf]
  %v59 = vld [vmem:[%s1 + $0x70] sm:$0xf]
  %v60 = vld [vmem:[%s1 + $0x74] sm:$0xf]
  %v61 = vld [vmem:[%s1 + $0x78] sm:$0xf]
  %v62 = vld [vmem:[%s1 + $0x7c] sm:$0xf]
  %v63 = vld [vmem:[%s1 + $0x80] sm:$0xf]
  %v64 = vld [vmem:[%s1 + $0x84] sm:$0xf]
  %v65 = vld [vmem:[%s1 + $0x88] sm:$0xf]
  %v66 = vld [vmem:[%s1 + $0x8c] sm:$0xf]
  %v67 = vld [vmem:[%s1 + $0x90] sm:$0xf]
  %v68 = vld [vmem:[%s1 + $0x94] sm:$0xf]
  %v69 = vld [vmem:[%s1 + $0x98] sm:$0xf]
  %v70 = vld [vmem:[%s1 + $0x9c] sm:$0xf]
  %v71 = vld [vmem:[%s1 + $0xa0] sm:$0xf]
  %v72 = vld [vmem:[%s1 + $0xa4] sm:$0xf]
  %v73 = vld [vmem:[%s1 + $0xa8] sm:$0xf]
  %v74 = vld [vmem:[%s1 + $0xac] sm:$0xf]
  %v75 = vld [vmem:[%s1 + $0xb0] sm:$0xf]
  %v76 = vld [vmem:[%s1 + $0xb4] sm:$0xf]
  %v77 = vld [vmem:[%s1 + $0xb8] sm:$0xf]
  %v78 = vld [vmem:[%s1 + $0xbc] sm:$0xf]
  %v79 = vld [vmem:[%s1 + $0xc0] sm:$0xf]
  %v80 = vld [vmem:[%s1 + $0xc4] sm:$0xf]
  %v81 = vld [vmem:[%s1 + $0xc8] sm:$0xf]
  %v82 = vld [vmem:[%s1 + $0xcc] sm:$0xf]
  %v83 = vld [vmem:[%s1 + $0xd0] sm:$0xf]
  %v84 = vld [vmem:[%s1 + $0xd4] sm:$0xf]
  %v85 = vld [vmem:[%s1 + $0xd8] sm:$0xf]
  %v86 = vld [vmem:[%s1 + $0xdc] sm:$0xf]
  %v87 = vld [vmem:[%s1 + $0xe0] sm:$0xf]
  %v88 = vld [vmem:[%s1 + $0xe4] sm:$0xf]
  %v89 = vld [vmem:[%s1 + $0xe8] sm:$0xf]
  %v90 = vld [vmem:[%s1 + $0xec] sm:$0xf]
  %v91 = vld [vmem:[%s1 + $0xf0] sm:$0xf]
  %v92 = vld [vmem:[%s1 + $0xf4] sm:$0xf]
  %v93 = vld [vmem:[%s1 + $0xf8] sm:$0xf]
  %v94 = vld [vmem:[%s1 + $0xfc] sm:$0xf]
  %v95 = vld [vmem:[%s1 + $0x100] sm:$0xf]
  %v96 = vld [vmem:[%s1 + $0x104] sm:$0xf]
  %v97 = vld [vmem:[%s1 + $0x108] sm:$0xf]
  %v98 = vld [vmem:[%s1 + $0x10c] sm:$0xf]
  %v99 = vld [vmem:[%s1 + $0x110] sm:$0xf]
  %v100 = vld [vmem:[%s1 + $0x114] sm:$0xf]
  %v101 = vld [vmem:[%s1 + $0x118] sm:$0xf]
  %v102 = vld [vmem:[%s1 + $0x11c] sm:$0xf]
  %v103 = vld [vmem:[%s1 + $0x120] sm:$0xf]
  %v104 = vld [vmem:[%s1 + $0x124] sm:$0xf]
  %v105 = vld [vmem:[%s1 + $0x128] sm:$0xf]
  %v106 = vld [vmem:[%s1 + $0x12c] sm:$0xf]
  %v107 = vld [vmem:[%s1 + $0x130] sm:$0xf]
  %v108 = vld [vmem:[%s1 + $0x134] sm:$0xf]
  %v109 = vld [vmem:[%s1 + $0x138] sm:$0xf]
  %v110 = vld [vmem:[%s1 + $0x13c] sm:$0xf]
  %v111 = vld [vmem:[%s1 + $0x140] sm:$0xf]
  %v112 = vld [vmem:[%s1 + $0x144] sm:$0xf]
  %v113 = vld [vmem:[%s1 + $0x148] sm:$0xf]
  %v114 = vld [vmem:[%s1 + $0x14c] sm:$0xf]
  %v115 = vld [vmem:[%s1 + $0x150] sm:$0xf]
  %v116 = vld [vmem:[%s1 + $0x154] sm:$0xf]
  %v117 = vld [vmem:[%s1 + $0x158] sm:$0xf]
  %v118 = vld [vmem:[%s1 + $0x15c] sm:$0xf]
  %v119 = vld [vmem:[%s1 + $0x160] sm:$0xf]
  %v120 = vld [vmem:[%s1 + $0x164] sm:$0xf]
  %v121 = vld [vmem:[%s1 + $0x168] sm:$0xf]
  %v122 = vld [vmem:[%s1 + $0x16c] sm:$0xf]
  %v123 = vld [vmem:[%s1 + $0x170] sm:$0xf]
  %v124 = vld [vmem:[%s1 + $0x174] sm:$0xf]
  %v125 = vld [vmem:[%s1 + $0x178] sm:$0xf]
  %v126 = vld [vmem:[%s1 + $0x17c] sm:$0xf]
  %v127 = vld [vmem:[%s1 + $0x180] sm:$0xf]
  %v128 = vld [vmem:[%s1 + $0x184] sm:$0xf]
  %v129 = vld [vmem:[%s1 + $0x188] sm:$0xf]
  %v130 = vld [vmem:[%s1 + $0x18c] sm:$0xf]
  %v131 = vld [vmem:[%s1 + $0x190] sm:$0xf]
  %v132 = vld [vmem:[%s1 + $0x194] sm:$0xf]
  %v133 = vld [vmem:[%s1 + $0x198] sm:$0xf]
  %v134 = vld [vmem:[%s1 + $0x19c] sm:$0xf]
  %v135 = vld [vmem:[%s1 + $0x1a0] sm:$0xf]
  %v136 = vld [vmem:[%s1 + $0x1a4] sm:$0xf]
  %v137 = vld [vmem:[%s1 + $0x1a8] sm:$0xf]
  %v138 = vld [vmem:[%s1 + $0x1ac] sm:$0xf]
  %v139 = vld [vmem:[%s1 + $0x1b0] sm:$0xf]
  %v140 = vld [vmem:[%s1 + $0x1b4] sm:$0xf]
  %v141 = vld [vmem:[%s1 + $0x1b8] sm:$0xf]
  %v142 = vld [vmem:[%s1 + $0x1bc] sm:$0xf]
  %v143 = vld [vmem:[%s1 + $0x1c0] sm:$0xf]
  %v144 = vld [vmem:[%s1 + $0x1c4] sm:$0xf]
  %v145 = vld [vmem:[%s1 + $0x1c8] sm:$0xf]
  %v146 = vld [vmem:[%s1 + $0x1cc] sm:$0xf]
  %v147 = vld [vmem:[%s1 + $0x1d0] sm:$0xf]
  %v148 = vld [vmem:[%s1 + $0x1d4] sm:$0xf]
  %v149 = vld [vmem:[%s1 + $0x1d8] sm:$0xf]
  %v150 = vld [vmem:[%s1 + $0x1dc] sm:$0xf]
  %v151 = vld [vmem:[%s1 + $0x1e0] sm:$0xf]
  %v152 = vld [vmem:[%s1 + $0x1e4] sm:$0xf]
  %v153 = vld [vmem:[%s1 + $0x1e8] sm:$0xf]
  %v154 = vld [vmem:[%s1 + $0x1ec] sm:$0xf]
  %v155 = vld [vmem:[%s1 + $0x1f0] sm:$0xf]
  %v156 = vld [vmem:[%s1 + $0x1f4] sm:$0xf]
  %v157 = vld [vmem:[%s1 + $0x1f8] sm:$0xf]
  %v158 = vld [vmem:[%s1 + $0x1fc] sm:$0xf]
  %v159 = vld [vmem:[%s2] sm:$0x1]
  %v161 = vlaneseq
  %v162 = vshrl.u32 %v161, 7
  %v163 = vsub.s32 0, %v162
  %v164 = vrot.slane %v159, %v163
  %v182 = vunpack.c.l.b16 %v15
  %v183 = vunpack.c.h.b16 %v15
  %v184 = vunpack.c.l.b16 %v16
  %v185 = vunpack.c.h.b16 %v16
  %v186 = vunpack.c.l.b16 %v17
  %v187 = vunpack.c.h.b16 %v17
  %v188 = vunpack.c.l.b16 %v18
  %v189 = vunpack.c.h.b16 %v18
  %v190 = vunpack.c.l.b16 %v19
  %v191 = vunpack.c.h.b16 %v19
  %v192 = vunpack.c.l.b16 %v20
  %v193 = vunpack.c.h.b16 %v20
  %v194 = vunpack.c.l.b16 %v21
  %v195 = vunpack.c.h.b16 %v21
  %v196 = vunpack.c.l.b16 %v22
  %v197 = vunpack.c.h.b16 %v22
  %v198 = vunpack.c.l.b16 %v23
  %v199 = vunpack.c.h.b16 %v23
  %v200 = vunpack.c.l.b16 %v24
  %v201 = vunpack.c.h.b16 %v24
  %v202 = vunpack.c.l.b16 %v25
  %v203 = vunpack.c.h.b16 %v25
  %v204 = vunpack.c.l.b16 %v26
  %v205 = vunpack.c.h.b16 %v26
  %v206 = vunpack.c.l.b16 %v27
  %v207 = vunpack.c.h.b16 %v27
  %v208 = vunpack.c.l.b16 %v28
  %v209 = vunpack.c.h.b16 %v28
  %v210 = vunpack.c.l.b16 %v29
  %v211 = vunpack.c.h.b16 %v29
  %v212 = vunpack.c.l.b16 %v30
  %v213 = vunpack.c.h.b16 %v30
  %v214 = vpack.c.b16 %v190, %v182
  %v215 = vpack.c.b16 %v191, %v183
  %v216 = vpack.c.b16 %v192, %v184
  %v217 = vpack.c.b16 %v193, %v185
  %v218 = vpack.c.b16 %v194, %v186
  %v219 = vpack.c.b16 %v195, %v187
  %v220 = vpack.c.b16 %v196, %v188
  %v221 = vpack.c.b16 %v197, %v189
  %v222 = vpack.c.b16 %v206, %v198
  %v223 = vpack.c.b16 %v207, %v199
  %v224 = vpack.c.b16 %v208, %v200
  %v225 = vpack.c.b16 %v209, %v201
  %v226 = vpack.c.b16 %v210, %v202
  %v227 = vpack.c.b16 %v211, %v203
  %v228 = vpack.c.b16 %v212, %v204
  %v229 = vpack.c.b16 %v213, %v205
  %v374 = vunpack.c.l.b16 %v31
  %v375 = vunpack.c.l.b16 %v32
  %v376 = vunpack.c.l.b16 %v33
  %v377 = vunpack.c.l.b16 %v34
  %v378 = vunpack.c.l.b16 %v35
  %v379 = vunpack.c.l.b16 %v36
  %v380 = vunpack.c.l.b16 %v37
  %v381 = vunpack.c.l.b16 %v38
  %v382 = vunpack.c.l.b16 %v39
  %v383 = vunpack.c.l.b16 %v40
  %v384 = vunpack.c.l.b16 %v41
  %v385 = vunpack.c.l.b16 %v42
  %v386 = vunpack.c.l.b16 %v43
  %v387 = vunpack.c.l.b16 %v44
  %v388 = vunpack.c.l.b16 %v45
  %v389 = vunpack.c.l.b16 %v46
  %v390 = vunpack.c.l.b16 %v47
  %v391 = vunpack.c.l.b16 %v48
  %v392 = vunpack.c.l.b16 %v49
  %v393 = vunpack.c.l.b16 %v50
  %v394 = vunpack.c.l.b16 %v51
  %v395 = vunpack.c.l.b16 %v52
  %v396 = vunpack.c.l.b16 %v53
  %v397 = vunpack.c.l.b16 %v54
  %v398 = vunpack.c.l.b16 %v55
  %v399 = vunpack.c.l.b16 %v56
  %v400 = vunpack.c.l.b16 %v57
  %v401 = vunpack.c.l.b16 %v58
  %v402 = vunpack.c.l.b16 %v59
  %v403 = vunpack.c.l.b16 %v60
  %v404 = vunpack.c.l.b16 %v61
  %v405 = vunpack.c.l.b16 %v62
  %v406 = vunpack.c.l.b16 %v63
  %v407 = vunpack.c.l.b16 %v64
  %v408 = vunpack.c.l.b16 %v65
  %v409 = vunpack.c.l.b16 %v66
  %v410 = vunpack.c.l.b16 %v67
  %v411 = vunpack.c.l.b16 %v68
  %v412 = vunpack.c.l.b16 %v69
  %v413 = vunpack.c.l.b16 %v70
  %v414 = vunpack.c.l.b16 %v71
  %v415 = vunpack.c.l.b16 %v72
  %v416 = vunpack.c.l.b16 %v73
  %v417 = vunpack.c.l.b16 %v74
  %v418 = vunpack.c.l.b16 %v75
  %v419 = vunpack.c.l.b16 %v76
  %v420 = vunpack.c.l.b16 %v77
  %v421 = vunpack.c.l.b16 %v78
  %v422 = vunpack.c.l.b16 %v79
  %v423 = vunpack.c.l.b16 %v80
  %v424 = vunpack.c.l.b16 %v81
  %v425 = vunpack.c.l.b16 %v82
  %v426 = vunpack.c.l.b16 %v83
  %v427 = vunpack.c.l.b16 %v84
  %v428 = vunpack.c.l.b16 %v85
  %v429 = vunpack.c.l.b16 %v86
  %v430 = vunpack.c.l.b16 %v87
  %v431 = vunpack.c.l.b16 %v88
  %v432 = vunpack.c.l.b16 %v89
  %v433 = vunpack.c.l.b16 %v90
  %v434 = vunpack.c.l.b16 %v91
  %v435 = vunpack.c.l.b16 %v92
  %v436 = vunpack.c.l.b16 %v93
  %v437 = vunpack.c.l.b16 %v94
  %v438 = vunpack.c.l.b16 %v95
  %v439 = vunpack.c.l.b16 %v96
  %v440 = vunpack.c.l.b16 %v97
  %v441 = vunpack.c.l.b16 %v98
  %v442 = vunpack.c.l.b16 %v99
  %v443 = vunpack.c.l.b16 %v100
  %v444 = vunpack.c.l.b16 %v101
  %v445 = vunpack.c.l.b16 %v102
  %v446 = vunpack.c.l.b16 %v103
  %v447 = vunpack.c.l.b16 %v104
  %v448 = vunpack.c.l.b16 %v105
  %v449 = vunpack.c.l.b16 %v106
  %v450 = vunpack.c.l.b16 %v107
  %v451 = vunpack.c.l.b16 %v108
  %v452 = vunpack.c.l.b16 %v109
  %v453 = vunpack.c.l.b16 %v110
  %v454 = vunpack.c.l.b16 %v111
  %v455 = vunpack.c.l.b16 %v112
  %v456 = vunpack.c.l.b16 %v113
  %v457 = vunpack.c.l.b16 %v114
  %v458 = vunpack.c.l.b16 %v115
  %v459 = vunpack.c.l.b16 %v116
  %v460 = vunpack.c.l.b16 %v117
  %v461 = vunpack.c.l.b16 %v118
  %v462 = vunpack.c.l.b16 %v119
  %v463 = vunpack.c.l.b16 %v120
  %v464 = vunpack.c.l.b16 %v121
  %v465 = vunpack.c.l.b16 %v122
  %v466 = vunpack.c.l.b16 %v123
  %v467 = vunpack.c.l.b16 %v124
  %v468 = vunpack.c.l.b16 %v125
  %v469 = vunpack.c.l.b16 %v126
  %v470 = vunpack.c.l.b16 %v127
  %v471 = vunpack.c.l.b16 %v128
  %v472 = vunpack.c.l.b16 %v129
  %v473 = vunpack.c.l.b16 %v130
  %v474 = vunpack.c.l.b16 %v131
  %v475 = vunpack.c.l.b16 %v132
  %v476 = vunpack.c.l.b16 %v133
  %v477 = vunpack.c.l.b16 %v134
  %v478 = vunpack.c.l.b16 %v135
  %v479 = vunpack.c.l.b16 %v136
  %v480 = vunpack.c.l.b16 %v137
  %v481 = vunpack.c.l.b16 %v138
  %v482 = vunpack.c.l.b16 %v139
  %v483 = vunpack.c.l.b16 %v140
  %v484 = vunpack.c.l.b16 %v141
  %v485 = vunpack.c.l.b16 %v142
  %v486 = vunpack.c.l.b16 %v143
  %v487 = vunpack.c.l.b16 %v144
  %v488 = vunpack.c.l.b16 %v145
  %v489 = vunpack.c.l.b16 %v146
  %v490 = vunpack.c.l.b16 %v147
  %v491 = vunpack.c.l.b16 %v148
  %v492 = vunpack.c.l.b16 %v149
  %v493 = vunpack.c.l.b16 %v150
  %v494 = vunpack.c.l.b16 %v151
  %v495 = vunpack.c.l.b16 %v152
  %v496 = vunpack.c.l.b16 %v153
  %v497 = vunpack.c.l.b16 %v154
  %v498 = vunpack.c.l.b16 %v155
  %v499 = vunpack.c.l.b16 %v156
  %v500 = vunpack.c.l.b16 %v157
  %v501 = vunpack.c.l.b16 %v158
  %v502 = vpack.c.b16 %v375, %v374
  %v503 = vpack.c.b16 %v377, %v376
  %v504 = vpack.c.b16 %v379, %v378
  %v505 = vpack.c.b16 %v381, %v380
  %v506 = vpack.c.b16 %v383, %v382
  %v507 = vpack.c.b16 %v385, %v384
  %v508 = vpack.c.b16 %v387, %v386
  %v509 = vpack.c.b16 %v389, %v388
  %v510 = vpack.c.b16 %v391, %v390
  %v511 = vpack.c.b16 %v393, %v392
  %v512 = vpack.c.b16 %v395, %v394
  %v513 = vpack.c.b16 %v397, %v396
  %v514 = vpack.c.b16 %v399, %v398
  %v515 = vpack.c.b16 %v401, %v400
  %v516 = vpack.c.b16 %v403, %v402
  %v517 = vpack.c.b16 %v405, %v404
  %v518 = vpack.c.b16 %v407, %v406
  %v519 = vpack.c.b16 %v409, %v408
  %v520 = vpack.c.b16 %v411, %v410
  %v521 = vpack.c.b16 %v413, %v412
  %v522 = vpack.c.b16 %v415, %v414
  %v523 = vpack.c.b16 %v417, %v416
  %v524 = vpack.c.b16 %v419, %v418
  %v525 = vpack.c.b16 %v421, %v420
  %v526 = vpack.c.b16 %v423, %v422
  %v527 = vpack.c.b16 %v425, %v424
  %v528 = vpack.c.b16 %v427, %v426
  %v529 = vpack.c.b16 %v429, %v428
  %v530 = vpack.c.b16 %v431, %v430
  %v531 = vpack.c.b16 %v433, %v432
  %v532 = vpack.c.b16 %v435, %v434
  %v533 = vpack.c.b16 %v437, %v436
  %v534 = vpack.c.b16 %v439, %v438
  %v535 = vpack.c.b16 %v441, %v440
  %v536 = vpack.c.b16 %v443, %v442
  %v537 = vpack.c.b16 %v445, %v444
  %v538 = vpack.c.b16 %v447, %v446
  %v539 = vpack.c.b16 %v449, %v448
  %v540 = vpack.c.b16 %v451, %v450
  %v541 = vpack.c.b16 %v453, %v452
  %v542 = vpack.c.b16 %v455, %v454
  %v543 = vpack.c.b16 %v457, %v456
  %v544 = vpack.c.b16 %v459, %v458
  %v545 = vpack.c.b16 %v461, %v460
  %v546 = vpack.c.b16 %v463, %v462
  %v547 = vpack.c.b16 %v465, %v464
  %v548 = vpack.c.b16 %v467, %v466
  %v549 = vpack.c.b16 %v469, %v468
  %v550 = vpack.c.b16 %v471, %v470
  %v551 = vpack.c.b16 %v473, %v472
  %v552 = vpack.c.b16 %v475, %v474
  %v553 = vpack.c.b16 %v477, %v476
  %v554 = vpack.c.b16 %v479, %v478
  %v555 = vpack.c.b16 %v481, %v480
  %v556 = vpack.c.b16 %v483, %v482
  %v557 = vpack.c.b16 %v485, %v484
  %v558 = vpack.c.b16 %v487, %v486
  %v559 = vpack.c.b16 %v489, %v488
  %v560 = vpack.c.b16 %v491, %v490
  %v561 = vpack.c.b16 %v493, %v492
  %v562 = vpack.c.b16 %v495, %v494
  %v563 = vpack.c.b16 %v497, %v496
  %v564 = vpack.c.b16 %v499, %v498
  %v565 = vpack.c.b16 %v501, %v500
  %630 = vmatprep.subr.bf16.mxu0 0
  %631 = vmatpush1.bf16.msra.mxu0 %v509
  %632 = vmatprep.subr.bf16.mxu0 0
  %633 = vmatpush1.bf16.msra.mxu0 %v508
  %634 = vmatprep.subr.bf16.mxu0 0
  %635 = vmatpush1.bf16.msra.mxu0 %v507
  %636 = vmatprep.subr.bf16.mxu0 0
  %637 = vmatpush1.bf16.msra.mxu0 %v506
  %638 = vmatprep.subr.bf16.mxu0 0
  %639 = vmatpush1.bf16.msra.mxu0 %v505
  %640 = vmatprep.subr.bf16.mxu0 0
  %641 = vmatpush1.bf16.msra.mxu0 %v504
  %642 = vmatprep.subr.bf16.mxu0 0
  %643 = vmatpush1.bf16.msra.mxu0 %v503
  %644 = vmatprep.subr.bf16.mxu0 0
  %645 = vmatpush1.bf16.msra.mxu0 %v502
  %646 = vmatprep.subr.bf16.mxu0 0
  %647 = vmatpush2.bf16.msra.mxu0 %v517
  %648 = vmatprep.subr.bf16.mxu0 0
  %649 = vmatpush2.bf16.msra.mxu0 %v516
  %650 = vmatprep.subr.bf16.mxu0 0
  %651 = vmatpush2.bf16.msra.mxu0 %v515
  %652 = vmatprep.subr.bf16.mxu0 0
  %653 = vmatpush2.bf16.msra.mxu0 %v514
  %654 = vmatprep.subr.bf16.mxu0 0
  %655 = vmatpush2.bf16.msra.mxu0 %v513
  %656 = vmatprep.subr.bf16.mxu0 0
  %657 = vmatpush2.bf16.msra.mxu0 %v512
  %658 = vmatprep.subr.bf16.mxu0 0
  %659 = vmatpush2.bf16.msra.mxu0 %v511
  %660 = vmatprep.subr.bf16.mxu0 0
  %661 = vmatpush2.bf16.msra.mxu0 %v510
  %662 = vmatprep.mubr.bf16.mxu0 %v215
  %663 = vmatmul.mubr.bf16.gmra.mxu0 %v214
  %v664 = vpop.f32.mrf.mxu0
  %v665 = vadd.f32 %v164, %v664
  %v666 = vpop.f32.mrf.mxu0
  %v667 = vpop.f32.mrf.mxu0
  %v668 = vadd.f32 %v164, %v667
  %v669 = vpop.f32.mrf.mxu0
  %670 = vmatprep.mubr.bf16.mxu0 %v223
  %671 = vmatmul.mubr.bf16.gmra.mxu0 %v222
  %v672 = vpop.f32.mrf.mxu0
  %v673 = vadd.f32 %v164, %v672
  %v674 = vpop.f32.mrf.mxu0
  %v675 = vpop.f32.mrf.mxu0
  %v676 = vadd.f32 %v164, %v675
  %v677 = vpop.f32.mrf.mxu0
  %678 = vdwg.mxu0
  %679 = vmatprep.subr.bf16.mxu0 0
  %680 = vmatpush1.bf16.msra.mxu0 %v525
  %681 = vmatprep.subr.bf16.mxu0 0
  %682 = vmatpush1.bf16.msra.mxu0 %v524
  %683 = vmatprep.subr.bf16.mxu0 0
  %684 = vmatpush1.bf16.msra.mxu0 %v523
  %685 = vmatprep.subr.bf16.mxu0 0
  %686 = vmatpush1.bf16.msra.mxu0 %v522
  %687 = vmatprep.subr.bf16.mxu0 0
  %688 = vmatpush1.bf16.msra.mxu0 %v521
  %689 = vmatprep.subr.bf16.mxu0 0
  %690 = vmatpush1.bf16.msra.mxu0 %v520
  %691 = vmatprep.subr.bf16.mxu0 0
  %692 = vmatpush1.bf16.msra.mxu0 %v519
  %693 = vmatprep.subr.bf16.mxu0 0
  %694 = vmatpush1.bf16.msra.mxu0 %v518
  %695 = vmatprep.subr.bf16.mxu0 0
  %696 = vmatpush2.bf16.msra.mxu0 %v533
  %697 = vmatprep.subr.bf16.mxu0 0
  %698 = vmatpush2.bf16.msra.mxu0 %v532
  %699 = vmatprep.subr.bf16.mxu0 0
  %700 = vmatpush2.bf16.msra.mxu0 %v531
  %701 = vmatprep.subr.bf16.mxu0 0
  %702 = vmatpush2.bf16.msra.mxu0 %v530
  %703 = vmatprep.subr.bf16.mxu0 0
  %704 = vmatpush2.bf16.msra.mxu0 %v529
  %705 = vmatprep.subr.bf16.mxu0 0
  %706 = vmatpush2.bf16.msra.mxu0 %v528
  %707 = vmatprep.subr.bf16.mxu0 0
  %708 = vmatpush2.bf16.msra.mxu0 %v527
  %709 = vmatprep.subr.bf16.mxu0 0
  %710 = vmatpush2.bf16.msra.mxu0 %v526
  %711 = vmatprep.mubr.bf16.mxu0 %v217
  %712 = vmatmul.mubr.bf16.gmra.mxu0 %v216
  %v713 = vpop.f32.mrf.mxu0
  %v714 = vadd.f32 %v665, %v713
  %v715 = vpop.f32.mrf.mxu0
  %v716 = vpop.f32.mrf.mxu0
  %v717 = vadd.f32 %v668, %v716
  %v718 = vpop.f32.mrf.mxu0
  %719 = vmatprep.mubr.bf16.mxu0 %v225
  %720 = vmatmul.mubr.bf16.gmra.mxu0 %v224
  %v721 = vpop.f32.mrf.mxu0
  %v722 = vadd.f32 %v673, %v721
  %v723 = vpop.f32.mrf.mxu0
  %v724 = vpop.f32.mrf.mxu0
  %v725 = vadd.f32 %v676, %v724
  %v726 = vpop.f32.mrf.mxu0
  %727 = vdwg.mxu0
  %728 = vmatprep.subr.bf16.mxu0 0
  %729 = vmatpush1.bf16.msra.mxu0 %v541
  %730 = vmatprep.subr.bf16.mxu0 0
  %731 = vmatpush1.bf16.msra.mxu0 %v540
  %732 = vmatprep.subr.bf16.mxu0 0
  %733 = vmatpush1.bf16.msra.mxu0 %v539
  %734 = vmatprep.subr.bf16.mxu0 0
  %735 = vmatpush1.bf16.msra.mxu0 %v538
  %736 = vmatprep.subr.bf16.mxu0 0
  %737 = vmatpush1.bf16.msra.mxu0 %v537
  %738 = vmatprep.subr.bf16.mxu0 0
  %739 = vmatpush1.bf16.msra.mxu0 %v536
  %740 = vmatprep.subr.bf16.mxu0 0
  %741 = vmatpush1.bf16.msra.mxu0 %v535
  %742 = vmatprep.subr.bf16.mxu0 0
  %743 = vmatpush1.bf16.msra.mxu0 %v534
  %744 = vmatprep.subr.bf16.mxu0 0
  %745 = vmatpush2.bf16.msra.mxu0 %v549
  %746 = vmatprep.subr.bf16.mxu0 0
  %747 = vmatpush2.bf16.msra.mxu0 %v548
  %748 = vmatprep.subr.bf16.mxu0 0
  %749 = vmatpush2.bf16.msra.mxu0 %v547
  %750 = vmatprep.subr.bf16.mxu0 0
  %751 = vmatpush2.bf16.msra.mxu0 %v546
  %752 = vmatprep.subr.bf16.mxu0 0
  %753 = vmatpush2.bf16.msra.mxu0 %v545
  %754 = vmatprep.subr.bf16.mxu0 0
  %755 = vmatpush2.bf16.msra.mxu0 %v544
  %756 = vmatprep.subr.bf16.mxu0 0
  %757 = vmatpush2.bf16.msra.mxu0 %v543
  %758 = vmatprep.subr.bf16.mxu0 0
  %759 = vmatpush2.bf16.msra.mxu0 %v542
  %760 = vmatprep.mubr.bf16.mxu0 %v219
  %761 = vmatmul.mubr.bf16.gmra.mxu0 %v218
  %v762 = vpop.f32.mrf.mxu0
  %v763 = vadd.f32 %v714, %v762
  %v764 = vpop.f32.mrf.mxu0
  %v765 = vpop.f32.mrf.mxu0
  %v766 = vadd.f32 %v717, %v765
  %v767 = vpop.f32.mrf.mxu0
  %768 = vmatprep.mubr.bf16.mxu0 %v227
  %769 = vmatmul.mubr.bf16.gmra.mxu0 %v226
  %v770 = vpop.f32.mrf.mxu0
  %v771 = vadd.f32 %v722, %v770
  %v772 = vpop.f32.mrf.mxu0
  %v773 = vpop.f32.mrf.mxu0
  %v774 = vadd.f32 %v725, %v773
  %v775 = vpop.f32.mrf.mxu0
  %776 = vdwg.mxu0
  %777 = vmatprep.subr.bf16.mxu0 0
  %778 = vmatpush1.bf16.msra.mxu0 %v557
  %779 = vmatprep.subr.bf16.mxu0 0
  %780 = vmatpush1.bf16.msra.mxu0 %v556
  %781 = vmatprep.subr.bf16.mxu0 0
  %782 = vmatpush1.bf16.msra.mxu0 %v555
  %783 = vmatprep.subr.bf16.mxu0 0
  %784 = vmatpush1.bf16.msra.mxu0 %v554
  %785 = vmatprep.subr.bf16.mxu0 0
  %786 = vmatpush1.bf16.msra.mxu0 %v553
  %787 = vmatprep.subr.bf16.mxu0 0
  %788 = vmatpush1.bf16.msra.mxu0 %v552
  %789 = vmatprep.subr.bf16.mxu0 0
  %790 = vmatpush1.bf16.msra.mxu0 %v551
  %791 = vmatprep.subr.bf16.mxu0 0
  %792 = vmatpush1.bf16.msra.mxu0 %v550
  %793 = vmatprep.subr.bf16.mxu0 0
  %794 = vmatpush2.bf16.msra.mxu0 %v565
  %795 = vmatprep.subr.bf16.mxu0 0
  %796 = vmatpush2.bf16.msra.mxu0 %v564
  %797 = vmatprep.subr.bf16.mxu0 0
  %798 = vmatpush2.bf16.msra.mxu0 %v563
  %799 = vmatprep.subr.bf16.mxu0 0
  %800 = vmatpush2.bf16.msra.mxu0 %v562
  %801 = vmatprep.subr.bf16.mxu0 0
  %802 = vmatpush2.bf16.msra.mxu0 %v561
  %803 = vmatprep.subr.bf16.mxu0 0
  %804 = vmatpush2.bf16.msra.mxu0 %v560
  %805 = vmatprep.subr.bf16.mxu0 0
  %806 = vmatpush2.bf16.msra.mxu0 %v559
  %807 = vmatprep.subr.bf16.mxu0 0
  %808 = vmatpush2.bf16.msra.mxu0 %v558
  %809 = vmatprep.mubr.bf16.mxu0 %v221
  %810 = vmatmul.mubr.bf16.gmra.mxu0 %v220
  %v811 = vpop.f32.mrf.mxu0
  %v812 = vadd.f32 %v763, %v811
  %v813 = vpop.f32.mrf.mxu0
  %v814 = vpop.f32.mrf.mxu0
  %v815 = vadd.f32 %v766, %v814
  %v816 = vpop.f32.mrf.mxu0
  %817 = vmatprep.mubr.bf16.mxu0 %v229
  %818 = vmatmul.mubr.bf16.gmra.mxu0 %v228
  %v819 = vpop.f32.mrf.mxu0
  %v820 = vadd.f32 %v771, %v819
  %v821 = vpop.f32.mrf.mxu0
  %v822 = vpop.f32.mrf.mxu0
  %v823 = vadd.f32 %v774, %v822
  %v824 = vpop.f32.mrf.mxu0
  %825 = vdwg.mxu0
  %vm826 = vcmask 64512
  %827 = vst.msk [vmem:[%s3] sm:$0xff] %vm826, %v812
  %828 = vst.msk [vmem:[%s3 + $0x8] sm:$0xff] %vm826, %v815
  %829 = vst.msk [vmem:[%s3 + $0x10] sm:$0xff] %vm826, %v820
  %830 = vst.msk [vmem:[%s3 + $0x18] sm:$0xff] %vm826, %v823
  // Predicated region
  $region14: #{multiscale_discriminator_forward.33} parent=0 // pred_check
    _
  $region15: #{multiscale_discriminator_forward.33} parent=0 // pred_check_branch
    %832 = sbr.rel (0) target = $region17
  $region16: #{multiscale_discriminator_forward.33} parent=0 // pred_region
    _
  $region17: #{multiscale_discriminator_forward.33} parent=0 // pred_fallthru
    _
  // Predicated region
  $region18: #{multiscale_discriminator_forward.33} parent=0 // pred_check
    _
  $region19: #{multiscale_discriminator_forward.33} parent=0 // pred_check_branch
    %834 = sbr.rel (0) target = $region21
  $region20: #{multiscale_discriminator_forward.33} parent=0 // pred_region
    _
  $region21: #{multiscale_discriminator_forward.33} parent=0 // pred_fallthru
    _

// kernel: multiscale_discriminator_forward.23
$region0: #{multiscale_discriminator_forward.23}
  #allocation0 [shape = 'u32[]', space=smem, size = 0x4, offset = 0x4, fixed_abs, tag = 'smem constant byte address 0x4 - core index']
  #allocation1 [shape = 'u32[144,128]{1,0:T(1,128)}', space=vmem, size = 0x12000, scoped, tag = 'internal scratch']
  %s0 = inlined_call_operand.vmem [shape: bf16[64,64], index: 0, kind: input, shape index: {}]
  %s1 = inlined_call_operand.vmem [shape: bf16[64,8], index: 1, kind: input, shape index: {}]
  %s2 = inlined_call_operand.vmem [shape: f32[1,8], index: 2, kind: input, shape index: {}]
  %s3 = inlined_call_operand.vmem [shape: bf16[64,8], index: 3, kind: output, shape index: {}]
  %s4 = sld [smem:[#allocation0]]
  $region22: #{multiscale_discriminator_forward.23} parent=0
    _
  %s6 = ssub.s32 1, %s4
  %s7 = scalar_select 0, %s6, %s4
  // Predicated region
  $region2: #{multiscale_discriminator_forward.23} parent=0 // pred_check
    _
  $region3: #{multiscale_discriminator_forward.23} parent=0 // pred_check_branch
    %9 = sbr.rel (0) target = $region5
  $region4: #{multiscale_discriminator_forward.23} parent=0 // pred_region
    _
  $region5: #{multiscale_discriminator_forward.23} parent=0 // pred_fallthru
    _
  // Predicated region
  $region6: #{multiscale_discriminator_forward.23} parent=0 // pred_check
    _
  $region7: #{multiscale_discriminator_forward.23} parent=0 // pred_check_branch
    %11 = sbr.rel (0) target = $region9
  $region8: #{multiscale_discriminator_forward.23} parent=0 // pred_region
    _
  $region9: #{multiscale_discriminator_forward.23} parent=0 // pred_fallthru
    _
  // Predicated region
  $region10: #{multiscale_discriminator_forward.23} parent=0 // pred_check
    _
  $region11: #{multiscale_discriminator_forward.23} parent=0 // pred_check_branch
    %13 = sbr.rel (0) target = $region13
  $region12: #{multiscale_discriminator_forward.23} parent=0 // pred_region
    _
  $region13: #{multiscale_discriminator_forward.23} parent=0 // pred_fallthru
    _
  %v15 = vld [vmem:[%s0] sm:$0xf]
  %v16 = vld [vmem:[%s0 + $0x4] sm:$0xf]
  %v17 = vld [vmem:[%s0 + $0x8] sm:$0xf]
  %v18 = vld [vmem:[%s0 + $0xc] sm:$0xf]
  %v19 = vld [vmem:[%s0 + $0x10] sm:$0xf]
  %v20 = vld [vmem:[%s0 + $0x14] sm:$0xf]
  %v21 = vld [vmem:[%s0 + $0x18] sm:$0xf]
  %v22 = vld [vmem:[%s0 + $0x1c] sm:$0xf]
  %v23 = vld [vmem:[%s1] sm:$0xf]
  %v24 = vld [vmem:[%s1 + $0x4] sm:$0xf]
  %v25 = vld [vmem:[%s1 + $0x8] sm:$0xf]
  %v26 = vld [vmem:[%s1 + $0xc] sm:$0xf]
  %v27 = vld [vmem:[%s1 + $0x10] sm:$0xf]
  %v28 = vld [vmem:[%s1 + $0x14] sm:$0xf]
  %v29 = vld [vmem:[%s1 + $0x18] sm:$0xf]
  %v30 = vld [vmem:[%s1 + $0x1c] sm:$0xf]
  %v31 = vld [vmem:[%s2] sm:$0x1]
  %v33 = vlaneseq
  %v34 = vshrl.u32 %v33, 7
  %v35 = vsub.s32 0, %v34
  %v36 = vrot.slane %v31, %v35
  %v46 = vunpack.c.l.b16 %v15
  %v47 = vunpack.c.l.b16 %v16
  %v48 = vunpack.c.l.b16 %v17
  %v49 = vunpack.c.l.b16 %v18
  %v50 = vunpack.c.l.b16 %v19
  %v51 = vunpack.c.l.b16 %v20
  %v52 = vunpack.c.l.b16 %v21
  %v53 = vunpack.c.l.b16 %v22
  %v54 = vpack.c.b16 %v47, %v46
  %v55 = vpack.c.b16 %v49, %v48
  %v56 = vpack.c.b16 %v51, %v50
  %v57 = vpack.c.b16 %v53, %v52
  %v66 = vunpack.c.l.b16 %v23
  %v67 = vunpack.c.l.b16 %v24
  %v68 = vunpack.c.l.b16 %v25
  %v69 = vunpack.c.l.b16 %v26
  %v70 = vunpack.c.l.b16 %v27
  %v71 = vunpack.c.l.b16 %v28
  %v72 = vunpack.c.l.b16 %v29
  %v73 = vunpack.c.l.b16 %v30
  %v74 = vpack.c.b16 %v67, %v66
  %v75 = vpack.c.b16 %v69, %v68
  %v76 = vpack.c.b16 %v71, %v70
  %v77 = vpack.c.b16 %v73, %v72
  %vm82 = vcmask 523264
  %v84 = vsel %vm82, %v54, 0
  %v87 = vsel %vm82, %v55, 0
  %v90 = vsel %vm82, %v56, 0
  %v93 = vsel %vm82, %v57, 0
  %95 = vmatprep.subr.bf16.mxu0 0
  %96 = vmatpush1.bf16.msra.mxu0 0
  %97 = vmatprep.subr.bf16.mxu0 0
  %98 = vmatpush1.bf16.msra.mxu0 0
  %99 = vmatprep.subr.bf16.mxu0 0
  %100 = vmatpush1.bf16.msra.mxu0 0
  %101 = vmatprep.subr.bf16.mxu0 0
  %102 = vmatpush1.bf16.msra.mxu0 0
  %103 = vmatprep.subr.bf16.mxu0 0
  %104 = vmatpush1.bf16.msra.mxu0 %v77
  %105 = vmatprep.subr.bf16.mxu0 0
  %106 = vmatpush1.bf16.msra.mxu0 %v76
  %107 = vmatprep.subr.bf16.mxu0 0
  %108 = vmatpush1.bf16.msra.mxu0 %v75
  %109 = vmatprep.subr.bf16.mxu0 0
  %110 = vmatpush1.bf16.msra.mxu0 %v74
  %111 = vmatprep.subr.bf16.mxu0 0
  %112 = vmatpush2.bf16.msra.mxu0 0
  %113 = vmatprep.subr.bf16.mxu0 0
  %114 = vmatpush2.bf16.msra.mxu0 0
  %115 = vmatprep.subr.bf16.mxu0 0
  %116 = vmatpush2.bf16.msra.mxu0 0
  %117 = vmatprep.subr.bf16.mxu0 0
  %118 = vmatpush2.bf16.msra.mxu0 0
  %119 = vmatprep.subr.bf16.mxu0 0
  %120 = vmatpush2.bf16.msra.mxu0 0
  %121 = vmatprep.subr.bf16.mxu0 0
  %122 = vmatpush2.bf16.msra.mxu0 0
  %123 = vmatprep.subr.bf16.mxu0 0
  %124 = vmatpush2.bf16.msra.mxu0 0
  %125 = vmatprep.subr.bf16.mxu0 0
  %126 = vmatpush2.bf16.msra.mxu0 0
  %127 = vmatprep.mubr.bf16.mxu0 0
  %128 = vmatmul.mubr.bf16.gmra.mxu0 %v84
  %v129 = vpop.f32.mrf.mxu0
  %v130 = vadd.f32 %v36, %v129
  %v131 = vpop.f32.mrf.mxu0
  %v132 = vpop.f32.mrf.mxu0
  %v133 = vadd.f32 %v36, %v132
  %v134 = vpop.f32.mrf.mxu0
  %135 = vmatprep.mubr.bf16.mxu0 0
  %136 = vmatmul.mubr.bf16.gmra.mxu0 %v87
  %v137 = vpop.f32.mrf.mxu0
  %v138 = vadd.f32 %v36, %v137
  %v139 = vpop.f32.mrf.mxu0
  %v140 = vpop.f32.mrf.mxu0
  %v141 = vadd.f32 %v36, %v140
  %v142 = vpop.f32.mrf.mxu0
  %143 = vmatprep.mubr.bf16.mxu0 0
  %144 = vmatmul.mubr.bf16.gmra.mxu0 %v90
  %v145 = vpop.f32.mrf.mxu0
  %v146 = vadd.f32 %v36, %v145
  %v147 = vpop.f32.mrf.mxu0
  %v148 = vpop.f32.mrf.mxu0
  %v149 = vadd.f32 %v36, %v148
  %v150 = vpop.f32.mrf.mxu0
  %151 = vmatprep.mubr.bf16.mxu0 0
  %152 = vmatmul.mubr.bf16.gmra.mxu0 %v93
  %v153 = vpop.f32.mrf.mxu0
  %v154 = vadd.f32 %v36, %v153
  %v155 = vpop.f32.mrf.mxu0
  %v156 = vpop.f32.mrf.mxu0
  %v157 = vadd.f32 %v36, %v156
  %v158 = vpop.f32.mrf.mxu0
  %159 = vdwg.mxu0
  %vm160 = vcmp.gt.f32.partialorder %v130, 0.0
  %vm161 = vcmp.gt.f32.partialorder %v133, 0.0
  %vm162 = vcmp.gt.f32.partialorder %v138, 0.0
  %vm163 = vcmp.gt.f32.partialorder %v141, 0.0
  %vm164 = vcmp.gt.f32.partialorder %v146, 0.0
  %vm165 = vcmp.gt.f32.partialorder %v149, 0.0
  %vm166 = vcmp.gt.f32.partialorder %v154, 0.0
  %vm167 = vcmp.gt.f32.partialorder %v157, 0.0
  %v168 = vmul.f32 %v130, 0.2
  %v169 = vmul.f32 %v133, 0.2
  %v170 = vmul.f32 %v138, 0.2
  %v171 = vmul.f32 %v141, 0.2
  %v172 = vmul.f32 %v146, 0.2
  %v173 = vmul.f32 %v149, 0.2
  %v174 = vmul.f32 %v154, 0.2
  %v175 = vmul.f32 %v157, 0.2
  %v176 = vsel %vm160, %v130, %v168
  %v177 = vsel %vm161, %v133, %v169
  %v178 = vsel %vm162, %v138, %v170
  %v179 = vsel %vm163, %v141, %v171
  %v180 = vsel %vm164, %v146, %v172
  %v181 = vsel %vm165, %v149, %v173
  %v182 = vsel %vm166, %v154, %v174
  %v183 = vsel %vm167, %v157, %v175
  %v184 = vpack.c.bf16 %v177, %v176
  %v185 = vpack.c.bf16 %v179, %v178
  %v186 = vpack.c.bf16 %v181, %v180
  %v187 = vpack.c.bf16 %v183, %v182
  %v192 = vunpack.c.l.b16 %v184
  %v193 = vunpack.c.h.b16 %v184
  %v194 = vunpack.c.l.b16 %v185
  %v195 = vunpack.c.h.b16 %v185
  %v196 = vunpack.c.l.b16 %v186
  %v197 = vunpack.c.h.b16 %v186
  %v198 = vunpack.c.l.b16 %v187
  %v199 = vunpack.c.h.b16 %v187
  %v200 = vpack.c.b16 %v192, %v192
  %v201 = vpack.c.b16 %v193, %v193
  %v202 = vpack.c.b16 %v194, %v194
  %v203 = vpack.c.b16 %v195, %v195
  %v204 = vpack.c.b16 %v196, %v196
  %v205 = vpack.c.b16 %v197, %v197
  %v206 = vpack.c.b16 %v198, %v198
  %v207 = vpack.c.b16 %v199, %v199
  %vm216 = vcmask 60416
  %217 = vst.msk [vmem:[%s3] sm:$0xf] %vm216, %v200
  %218 = vst.msk [vmem:[%s3 + $0x4] sm:$0xf] %vm216, %v201
  %219 = vst.msk [vmem:[%s3 + $0x8] sm:$0xf] %vm216, %v202
  %220 = vst.msk [vmem:[%s3 + $0xc] sm:$0xf] %vm216, %v203
  %221 = vst.msk [vmem:[%s3 + $0x10] sm:$0xf] %vm216, %v204
  %222 = vst.msk [vmem:[%s3 + $0x14] sm:$0xf] %vm216, %v205
  %223 = vst.msk [vmem:[%s3 + $0x18] sm:$0xf] %vm216, %v206
  %224 = vst.msk [vmem:[%s3 + $0x1c] sm:$0xf] %vm216, %v207
  // Predicated region
  $region14: #{multiscale_discriminator_forward.23} parent=0 // pred_check
    _
  $region15: #{multiscale_discriminator_forward.23} parent=0 // pred_check_branch
    %226 = sbr.rel (0) target = $region17
  $region16: #{multiscale_discriminator_forward.23} parent=0 // pred_region
    _
  $region17: #{multiscale_discriminator_forward.23} parent=0 // pred_fallthru
    _
  // Predicated region
  $region18: #{multiscale_discriminator_forward.23} parent=0 // pred_check
    _
  $region19: #{multiscale_discriminator_forward.23} parent=0 // pred_check_branch
    %228 = sbr.rel (0) target = $region21
  $region20: #{multiscale_discriminator_forward.23} parent=0 // pred_region
    _
  $region21: #{multiscale_discriminator_forward.23} parent=0 // pred_fallthru
    _

// kernel: multiscale_discriminator_forward.24
$region0: #{multiscale_discriminator_forward.24}
  #allocation0 [shape = 'u32[]', space=smem, size = 0x4, offset = 0x4, fixed_abs, tag = 'smem constant byte address 0x4 - core index']
  #allocation1 [shape = 'u32[144,128]{1,0:T(1,128)}', space=vmem, size = 0x12000, scoped, tag = 'internal scratch']
  %s0 = inlined_call_operand.vmem [shape: bf16[32,128], index: 0, kind: input, shape index: {}]
  %s1 = inlined_call_operand.vmem [shape: bf16[128,16], index: 1, kind: input, shape index: {}]
  %s2 = inlined_call_operand.vmem [shape: f32[1,16], index: 2, kind: input, shape index: {}]
  %s3 = inlined_call_operand.vmem [shape: bf16[32,16], index: 3, kind: output, shape index: {}]
  %s4 = sld [smem:[#allocation0]]
  $region22: #{multiscale_discriminator_forward.24} parent=0
    _
  %s6 = ssub.s32 1, %s4
  %s7 = scalar_select 0, %s6, %s4
  // Predicated region
  $region2: #{multiscale_discriminator_forward.24} parent=0 // pred_check
    _
  $region3: #{multiscale_discriminator_forward.24} parent=0 // pred_check_branch
    %9 = sbr.rel (0) target = $region5
  $region4: #{multiscale_discriminator_forward.24} parent=0 // pred_region
    _
  $region5: #{multiscale_discriminator_forward.24} parent=0 // pred_fallthru
    _
  // Predicated region
  $region6: #{multiscale_discriminator_forward.24} parent=0 // pred_check
    _
  $region7: #{multiscale_discriminator_forward.24} parent=0 // pred_check_branch
    %11 = sbr.rel (0) target = $region9
  $region8: #{multiscale_discriminator_forward.24} parent=0 // pred_region
    _
  $region9: #{multiscale_discriminator_forward.24} parent=0 // pred_fallthru
    _
  // Predicated region
  $region10: #{multiscale_discriminator_forward.24} parent=0 // pred_check
    _
  $region11: #{multiscale_discriminator_forward.24} parent=0 // pred_check_branch
    %13 = sbr.rel (0) target = $region13
  $region12: #{multiscale_discriminator_forward.24} parent=0 // pred_region
    _
  $region13: #{multiscale_discriminator_forward.24} parent=0 // pred_fallthru
    _
  %v15 = vld [vmem:[%s0] sm:$0xf]
  %v16 = vld [vmem:[%s0 + $0x4] sm:$0xf]
  %v17 = vld [vmem:[%s0 + $0x8] sm:$0xf]
  %v18 = vld [vmem:[%s0 + $0xc] sm:$0xf]
  %v19 = vld [vmem:[%s1] sm:$0xf]
  %v20 = vld [vmem:[%s1 + $0x4] sm:$0xf]
  %v21 = vld [vmem:[%s1 + $0x8] sm:$0xf]
  %v22 = vld [vmem:[%s1 + $0xc] sm:$0xf]
  %v23 = vld [vmem:[%s1 + $0x10] sm:$0xf]
  %v24 = vld [vmem:[%s1 + $0x14] sm:$0xf]
  %v25 = vld [vmem:[%s1 + $0x18] sm:$0xf]
  %v26 = vld [vmem:[%s1 + $0x1c] sm:$0xf]
  %v27 = vld [vmem:[%s1 + $0x20] sm:$0xf]
  %v28 = vld [vmem:[%s1 + $0x24] sm:$0xf]
  %v29 = vld [vmem:[%s1 + $0x28] sm:$0xf]
  %v30 = vld [vmem:[%s1 + $0x2c] sm:$0xf]
  %v31 = vld [vmem:[%s1 + $0x30] sm:$0xf]
  %v32 = vld [vmem:[%s1 + $0x34] sm:$0xf]
  %v33 = vld [vmem:[%s1 + $0x38] sm:$0xf]
  %v34 = vld [vmem:[%s1 + $0x3c] sm:$0xf]
  %v35 = vld [vmem:[%s2] sm:$0x1]
  %v37 = vlaneseq
  %v38 = vshrl.u32 %v37, 7
  %v39 = vsub.s32 0, %v38
  %v40 = vrot.slane %v35, %v39
  %v46 = vunpack.c.l.b16 %v15
  %v47 = vunpack.c.l.b16 %v16
  %v48 = vunpack.c.l.b16 %v17
  %v49 = vunpack.c.l.b16 %v18
  %v50 = vpack.c.b16 %v47, %v46
  %v51 = vpack.c.b16 %v49, %v48
  %v70 = vunpack.c.l.b16 %v19
  %v71 = vunpack.c.l.b16 %v20
  %v72 = vunpack.c.l.b16 %v21
  %v73 = vunpack.c.l.b16 %v22
  %v74 = vunpack.c.l.b16 %v23
  %v75 = vunpack.c.l.b16 %v24
  %v76 = vunpack.c.l.b16 %v25
  %v77 = vunpack.c.l.b16 %v26
  %v78 = vunpack.c.l.b16 %v27
  %v79 = vunpack.c.l.b16 %v28
  %v80 = vunpack.c.l.b16 %v29
  %v81 = vunpack.c.l.b16 %v30
  %v82 = vunpack.c.l.b16 %v31
  %v83 = vunpack.c.l.b16 %v32
  %v84 = vunpack.c.l.b16 %v33
  %v85 = vunpack.c.l.b16 %v34
  %v86 = vpack.c.b16 %v71, %v70
  %v87 = vpack.c.b16 %v73, %v72
  %v88 = vpack.c.b16 %v75, %v74
  %v89 = vpack.c.b16 %v77, %v76
  %v90 = vpack.c.b16 %v79, %v78
  %v91 = vpack.c.b16 %v81, %v80
  %v92 = vpack.c.b16 %v83, %v82
  %v93 = vpack.c.b16 %v85, %v84
  %102 = vmatprep.subr.bf16.mxu0 0
  %103 = vmatpush1.bf16.msra.mxu0 %v93
  %104 = vmatprep.subr.bf16.mxu0 0
  %105 = vmatpush1.bf16.msra.mxu0 %v92
  %106 = vmatprep.subr.bf16.mxu0 0
  %107 = vmatpush1.bf16.msra.mxu0 %v91
  %108 = vmatprep.subr.bf16.mxu0 0
  %109 = vmatpush1.bf16.msra.mxu0 %v90
  %110 = vmatprep.subr.bf16.mxu0 0
  %111 = vmatpush1.bf16.msra.mxu0 %v89
  %112 = vmatprep.subr.bf16.mxu0 0
  %113 = vmatpush1.bf16.msra.mxu0 %v88
  %114 = vmatprep.subr.bf16.mxu0 0
  %115 = vmatpush1.bf16.msra.mxu0 %v87
  %116 = vmatprep.subr.bf16.mxu0 0
  %117 = vmatpush1.bf16.msra.mxu0 %v86
  %118 = vmatprep.subr.bf16.mxu0 0
  %119 = vmatpush2.bf16.msra.mxu0 0
  %120 = vmatprep.subr.bf16.mxu0 0
  %121 = vmatpush2.bf16.msra.mxu0 0
  %122 = vmatprep.subr.bf16.mxu0 0
  %123 = vmatpush2.bf16.msra.mxu0 0
  %124 = vmatprep.subr.bf16.mxu0 0
  %125 = vmatpush2.bf16.msra.mxu0 0
  %126 = vmatprep.subr.bf16.mxu0 0
  %127 = vmatpush2.bf16.msra.mxu0 0
  %128 = vmatprep.subr.bf16.mxu0 0
  %129 = vmatpush2.bf16.msra.mxu0 0
  %130 = vmatprep.subr.bf16.mxu0 0
  %131 = vmatpush2.bf16.msra.mxu0 0
  %132 = vmatprep.subr.bf16.mxu0 0
  %133 = vmatpush2.bf16.msra.mxu0 0
  %134 = vmatprep.mubr.bf16.mxu0 0
  %135 = vmatmul.mubr.bf16.gmra.mxu0 %v50
  %v136 = vpop.f32.mrf.mxu0
  %v137 = vadd.f32 %v40, %v136
  %v138 = vpop.f32.mrf.mxu0
  %v139 = vpop.f32.mrf.mxu0
  %v140 = vadd.f32 %v40, %v139
  %v141 = vpop.f32.mrf.mxu0
  %142 = vmatprep.mubr.bf16.mxu0 0
  %143 = vmatmul.mubr.bf16.gmra.mxu0 %v51
  %v144 = vpop.f32.mrf.mxu0
  %v145 = vadd.f32 %v40, %v144
  %v146 = vpop.f32.mrf.mxu0
  %v147 = vpop.f32.mrf.mxu0
  %v148 = vadd.f32 %v40, %v147
  %v149 = vpop.f32.mrf.mxu0
  %150 = vdwg.mxu0
  %vm151 = vcmp.gt.f32.partialorder %v137, 0.0
  %vm152 = vcmp.gt.f32.partialorder %v140, 0.0
  %vm153 = vcmp.gt.f32.partialorder %v145, 0.0
  %vm154 = vcmp.gt.f32.partialorder %v148, 0.0
  %v155 = vmul.f32 %v137, 0.2
  %v156 = vmul.f32 %v140, 0.2
  %v157 = vmul.f32 %v145, 0.2
  %v158 = vmul.f32 %v148, 0.2
  %v159 = vsel %vm151, %v137, %v155
  %v160 = vsel %vm152, %v140, %v156
  %v161 = vsel %vm153, %v145, %v157
  %v162 = vsel %vm154, %v148, %v158
  %v163 = vpack.c.bf16 %v160, %v159
  %v164 = vpack.c.bf16 %v162, %v161
  %v167 = vunpack.c.l.b16 %v163
  %v168 = vunpack.c.h.b16 %v163
  %v169 = vunpack.c.l.b16 %v164
  %v170 = vunpack.c.h.b16 %v164
  %v171 = vpack.c.b16 %v167, %v167
  %v172 = vpack.c.b16 %v168, %v168
  %v173 = vpack.c.b16 %v169, %v169
  %v174 = vpack.c.b16 %v170, %v170
  %vm179 = vcmask 125952
  %180 = vst.msk [vmem:[%s3] sm:$0xf] %vm179, %v171
  %181 = vst.msk [vmem:[%s3 + $0x4] sm:$0xf] %vm179, %v172
  %182 = vst.msk [vmem:[%s3 + $0x8] sm:$0xf] %vm179, %v173
  %183 = vst.msk [vmem:[%s3 + $0xc] sm:$0xf] %vm179, %v174
  // Predicated region
  $region14: #{multiscale_discriminator_forward.24} parent=0 // pred_check
    _
  $region15: #{multiscale_discriminator_forward.24} parent=0 // pred_check_branch
    %185 = sbr.rel (0) target = $region17
  $region16: #{multiscale_discriminator_forward.24} parent=0 // pred_region
    _
  $region17: #{multiscale_discriminator_forward.24} parent=0 // pred_fallthru
    _
  // Predicated region
  $region18: #{multiscale_discriminator_forward.24} parent=0 // pred_check
    _
  $region19: #{multiscale_discriminator_forward.24} parent=0 // pred_check_branch
    %187 = sbr.rel (0) target = $region21
  $region20: #{multiscale_discriminator_forward.24} parent=0 // pred_region
    _
  $region21: #{multiscale_discriminator_forward.24} parent=0 // pred_fallthru
    _

// kernel: multiscale_discriminator_forward.17
$region0: #{multiscale_discriminator_forward.17}
  #allocation0 [shape = 'u32[]', space=smem, size = 0x4, offset = 0x4, fixed_abs, tag = 'smem constant byte address 0x4 - core index']
  #allocation1 [shape = 'u32[144,128]{1,0:T(1,128)}', space=vmem, size = 0x12000, scoped, tag = 'internal scratch']
  %s0 = inlined_call_operand.vmem [shape: bf16[176,64], index: 0, kind: input, shape index: {}]
  %s1 = inlined_call_operand.vmem [shape: bf16[64,8], index: 1, kind: input, shape index: {}]
  %s2 = inlined_call_operand.vmem [shape: f32[1,8], index: 2, kind: input, shape index: {}]
  %s3 = inlined_call_operand.vmem [shape: bf16[176,8], index: 3, kind: output, shape index: {}]
  %s4 = sld [smem:[#allocation0]]
  $region22: #{multiscale_discriminator_forward.17} parent=0
    _
  %s6 = ssub.s32 1, %s4
  %s7 = scalar_select 0, %s6, %s4
  // Predicated region
  $region2: #{multiscale_discriminator_forward.17} parent=0 // pred_check
    _
  $region3: #{multiscale_discriminator_forward.17} parent=0 // pred_check_branch
    %9 = sbr.rel (0) target = $region5
  $region4: #{multiscale_discriminator_forward.17} parent=0 // pred_region
    _
  $region5: #{multiscale_discriminator_forward.17} parent=0 // pred_fallthru
    _
  // Predicated region
  $region6: #{multiscale_discriminator_forward.17} parent=0 // pred_check
    _
  $region7: #{multiscale_discriminator_forward.17} parent=0 // pred_check_branch
    %11 = sbr.rel (0) target = $region9
  $region8: #{multiscale_discriminator_forward.17} parent=0 // pred_region
    _
  $region9: #{multiscale_discriminator_forward.17} parent=0 // pred_fallthru
    _
  // Predicated region
  $region10: #{multiscale_discriminator_forward.17} parent=0 // pred_check
    _
  $region11: #{multiscale_discriminator_forward.17} parent=0 // pred_check_branch
    %13 = sbr.rel (0) target = $region13
  $region12: #{multiscale_discriminator_forward.17} parent=0 // pred_region
    _
  $region13: #{multiscale_discriminator_forward.17} parent=0 // pred_fallthru
    _
  %v15 = vld [vmem:[%s0] sm:$0xf]
  %v16 = vld [vmem:[%s0 + $0x4] sm:$0xf]
  %v17 = vld [vmem:[%s0 + $0x8] sm:$0xf]
  %v18 = vld [vmem:[%s0 + $0xc] sm:$0xf]
  %v19 = vld [vmem:[%s0 + $0x10] sm:$0xf]
  %v20 = vld [vmem:[%s0 + $0x14] sm:$0xf]
  %v21 = vld [vmem:[%s0 + $0x18] sm:$0xf]
  %v22 = vld [vmem:[%s0 + $0x1c] sm:$0xf]
  %v23 = vld [vmem:[%s0 + $0x20] sm:$0xf]
  %v24 = vld [vmem:[%s0 + $0x24] sm:$0xf]
  %v25 = vld [vmem:[%s0 + $0x28] sm:$0xf]
  %v26 = vld [vmem:[%s0 + $0x2c] sm:$0xf]
  %v27 = vld [vmem:[%s0 + $0x30] sm:$0xf]
  %v28 = vld [vmem:[%s0 + $0x34] sm:$0xf]
  %v29 = vld [vmem:[%s0 + $0x38] sm:$0xf]
  %v30 = vld [vmem:[%s0 + $0x3c] sm:$0xf]
  %v31 = vld [vmem:[%s0 + $0x40] sm:$0xf]
  %v32 = vld [vmem:[%s0 + $0x44] sm:$0xf]
  %v33 = vld [vmem:[%s0 + $0x48] sm:$0xf]
  %v34 = vld [vmem:[%s0 + $0x4c] sm:$0xf]
  %v35 = vld [vmem:[%s0 + $0x50] sm:$0xf]
  %v36 = vld [vmem:[%s0 + $0x54] sm:$0xf]
  %v37 = vld [vmem:[%s1] sm:$0xf]
  %v38 = vld [vmem:[%s1 + $0x4] sm:$0xf]
  %v39 = vld [vmem:[%s1 + $0x8] sm:$0xf]
  %v40 = vld [vmem:[%s1 + $0xc] sm:$0xf]
  %v41 = vld [vmem:[%s1 + $0x10] sm:$0xf]
  %v42 = vld [vmem:[%s1 + $0x14] sm:$0xf]
  %v43 = vld [vmem:[%s1 + $0x18] sm:$0xf]
  %v44 = vld [vmem:[%s1 + $0x1c] sm:$0xf]
  %v45 = vld [vmem:[%s2] sm:$0x1]
  %v47 = vlaneseq
  %v48 = vshrl.u32 %v47, 7
  %v49 = vsub.s32 0, %v48
  %v50 = vrot.slane %v45, %v49
  %v74 = vunpack.c.l.b16 %v15
  %v75 = vunpack.c.l.b16 %v16
  %v76 = vunpack.c.l.b16 %v17
  %v77 = vunpack.c.l.b16 %v18
  %v78 = vunpack.c.l.b16 %v19
  %v79 = vunpack.c.l.b16 %v20
  %v80 = vunpack.c.l.b16 %v21
  %v81 = vunpack.c.l.b16 %v22
  %v82 = vunpack.c.l.b16 %v23
  %v83 = vunpack.c.l.b16 %v24
  %v84 = vunpack.c.l.b16 %v25
  %v85 = vunpack.c.l.b16 %v26
  %v86 = vunpack.c.l.b16 %v27
  %v87 = vunpack.c.l.b16 %v28
  %v88 = vunpack.c.l.b16 %v29
  %v89 = vunpack.c.l.b16 %v30
  %v90 = vunpack.c.l.b16 %v31
  %v91 = vunpack.c.l.b16 %v32
  %v92 = vunpack.c.l.b16 %v33
  %v93 = vunpack.c.l.b16 %v34
  %v94 = vunpack.c.l.b16 %v35
  %v95 = vunpack.c.l.b16 %v36
  %v96 = vpack.c.b16 %v75, %v74
  %v97 = vpack.c.b16 %v77, %v76
  %v98 = vpack.c.b16 %v79, %v78
  %v99 = vpack.c.b16 %v81, %v80
  %v100 = vpack.c.b16 %v83, %v82
  %v101 = vpack.c.b16 %v85, %v84
  %v102 = vpack.c.b16 %v87, %v86
  %v103 = vpack.c.b16 %v89, %v88
  %v104 = vpack.c.b16 %v91, %v90
  %v105 = vpack.c.b16 %v93, %v92
  %v106 = vpack.c.b16 %v95, %v94
  %v115 = vunpack.c.l.b16 %v37
  %v116 = vunpack.c.l.b16 %v38
  %v117 = vunpack.c.l.b16 %v39
  %v118 = vunpack.c.l.b16 %v40
  %v119 = vunpack.c.l.b16 %v41
  %v120 = vunpack.c.l.b16 %v42
  %v121 = vunpack.c.l.b16 %v43
  %v122 = vunpack.c.l.b16 %v44
  %v123 = vpack.c.b16 %v116, %v115
  %v124 = vpack.c.b16 %v118, %v117
  %v125 = vpack.c.b16 %v120, %v119
  %v126 = vpack.c.b16 %v122, %v121
  %vm131 = vcmask 523264
  %v133 = vsel %vm131, %v96, 0
  %v136 = vsel %vm131, %v97, 0
  %v139 = vsel %vm131, %v98, 0
  %v142 = vsel %vm131, %v99, 0
  %v145 = vsel %vm131, %v100, 0
  %v148 = vsel %vm131, %v101, 0
  %v151 = vsel %vm131, %v102, 0
  %v154 = vsel %vm131, %v103, 0
  %v157 = vsel %vm131, %v104, 0
  %v160 = vsel %vm131, %v105, 0
  %v163 = vsel %vm131, %v106, 0
  %165 = vmatprep.subr.bf16.mxu0 0
  %166 = vmatpush1.bf16.msra.mxu0 0
  %167 = vmatprep.subr.bf16.mxu0 0
  %168 = vmatpush1.bf16.msra.mxu0 0
  %169 = vmatprep.subr.bf16.mxu0 0
  %170 = vmatpush1.bf16.msra.mxu0 0
  %171 = vmatprep.subr.bf16.mxu0 0
  %172 = vmatpush1.bf16.msra.mxu0 0
  %173 = vmatprep.subr.bf16.mxu0 0
  %174 = vmatpush1.bf16.msra.mxu0 %v126
  %175 = vmatprep.subr.bf16.mxu0 0
  %176 = vmatpush1.bf16.msra.mxu0 %v125
  %177 = vmatprep.subr.bf16.mxu0 0
  %178 = vmatpush1.bf16.msra.mxu0 %v124
  %179 = vmatprep.subr.bf16.mxu0 0
  %180 = vmatpush1.bf16.msra.mxu0 %v123
  %181 = vmatprep.subr.bf16.mxu0 0
  %182 = vmatpush2.bf16.msra.mxu0 0
  %183 = vmatprep.subr.bf16.mxu0 0
  %184 = vmatpush2.bf16.msra.mxu0 0
  %185 = vmatprep.subr.bf16.mxu0 0
  %186 = vmatpush2.bf16.msra.mxu0 0
  %187 = vmatprep.subr.bf16.mxu0 0
  %188 = vmatpush2.bf16.msra.mxu0 0
  %189 = vmatprep.subr.bf16.mxu0 0
  %190 = vmatpush2.bf16.msra.mxu0 0
  %191 = vmatprep.subr.bf16.mxu0 0
  %192 = vmatpush2.bf16.msra.mxu0 0
  %193 = vmatprep.subr.bf16.mxu0 0
  %194 = vmatpush2.bf16.msra.mxu0 0
  %195 = vmatprep.subr.bf16.mxu0 0
  %196 = vmatpush2.bf16.msra.mxu0 0
  %197 = vmatprep.mubr.bf16.mxu0 0
  %198 = vmatmul.mubr.bf16.gmra.mxu0 %v133
  %v199 = vpop.f32.mrf.mxu0
  %v200 = vadd.f32 %v50, %v199
  %v201 = vpop.f32.mrf.mxu0
  %v202 = vpop.f32.mrf.mxu0
  %v203 = vadd.f32 %v50, %v202
  %v204 = vpop.f32.mrf.mxu0
  %205 = vmatprep.mubr.bf16.mxu0 0
  %206 = vmatmul.mubr.bf16.gmra.mxu0 %v136
  %v207 = vpop.f32.mrf.mxu0
  %v208 = vadd.f32 %v50, %v207
  %v209 = vpop.f32.mrf.mxu0
  %v210 = vpop.f32.mrf.mxu0
  %v211 = vadd.f32 %v50, %v210
  %v212 = vpop.f32.mrf.mxu0
  %213 = vmatprep.mubr.bf16.mxu0 0
  %214 = vmatmul.mubr.bf16.gmra.mxu0 %v139
  %v215 = vpop.f32.mrf.mxu0
  %v216 = vadd.f32 %v50, %v215
  %v217 = vpop.f32.mrf.mxu0
  %v218 = vpop.f32.mrf.mxu0
  %v219 = vadd.f32 %v50, %v218
  %v220 = vpop.f32.mrf.mxu0
  %221 = vmatprep.mubr.bf16.mxu0 0
  %222 = vmatmul.mubr.bf16.gmra.mxu0 %v142
  %v223 = vpop.f32.mrf.mxu0
  %v224 = vadd.f32 %v50, %v223
  %v225 = vpop.f32.mrf.mxu0
  %v226 = vpop.f32.mrf.mxu0
  %v227 = vadd.f32 %v50, %v226
  %v228 = vpop.f32.mrf.mxu0
  %229 = vmatprep.mubr.bf16.mxu0 0
  %230 = vmatmul.mubr.bf16.gmra.mxu0 %v145
  %v231 = vpop.f32.mrf.mxu0
  %v232 = vadd.f32 %v50, %v231
  %v233 = vpop.f32.mrf.mxu0
  %v234 = vpop.f32.mrf.mxu0
  %v235 = vadd.f32 %v50, %v234
  %v236 = vpop.f32.mrf.mxu0
  %237 = vmatprep.mubr.bf16.mxu0 0
  %238 = vmatmul.mubr.bf16.gmra.mxu0 %v148
  %v239 = vpop.f32.mrf.mxu0
  %v240 = vadd.f32 %v50, %v239
  %v241 = vpop.f32.mrf.mxu0
  %v242 = vpop.f32.mrf.mxu0
  %v243 = vadd.f32 %v50, %v242
  %v244 = vpop.f32.mrf.mxu0
  %245 = vmatprep.mubr.bf16.mxu0 0
  %246 = vmatmul.mubr.bf16.gmra.mxu0 %v151
  %v247 = vpop.f32.mrf.mxu0
  %v248 = vadd.f32 %v50, %v247
  %v249 = vpop.f32.mrf.mxu0
  %v250 = vpop.f32.mrf.mxu0
  %v251 = vadd.f32 %v50, %v250
  %v252 = vpop.f32.mrf.mxu0
  %253 = vmatprep.mubr.bf16.mxu0 0
  %254 = vmatmul.mubr.bf16.gmra.mxu0 %v154
  %v255 = vpop.f32.mrf.mxu0
  %v256 = vadd.f32 %v50, %v255
  %v257 = vpop.f32.mrf.mxu0
  %v258 = vpop.f32.mrf.mxu0
  %v259 = vadd.f32 %v50, %v258
  %v260 = vpop.f32.mrf.mxu0
  %261 = vmatprep.mubr.bf16.mxu0 0
  %262 = vmatmul.mubr.bf16.gmra.mxu0 %v157
  %v263 = vpop.f32.mrf.mxu0
  %v264 = vadd.f32 %v50, %v263
  %v265 = vpop.f32.mrf.mxu0
  %v266 = vpop.f32.mrf.mxu0
  %v267 = vadd.f32 %v50, %v266
  %v268 = vpop.f32.mrf.mxu0
  %269 = vmatprep.mubr.bf16.mxu0 0
  %270 = vmatmul.mubr.bf16.gmra.mxu0 %v160
  %v271 = vpop.f32.mrf.mxu0
  %v272 = vadd.f32 %v50, %v271
  %v273 = vpop.f32.mrf.mxu0
  %v274 = vpop.f32.mrf.mxu0
  %v275 = vadd.f32 %v50, %v274
  %v276 = vpop.f32.mrf.mxu0
  %277 = vmatprep.mubr.bf16.mxu0 0
  %278 = vmatmul.mubr.bf16.gmra.mxu0 %v163
  %v279 = vpop.f32.mrf.mxu0
  %v280 = vadd.f32 %v50, %v279
  %v281 = vpop.f32.mrf.mxu0
  %v282 = vpop.f32.mrf.mxu0
  %v283 = vadd.f32 %v50, %v282
  %v284 = vpop.f32.mrf.mxu0
  %285 = vdwg.mxu0
  %vm286 = vcmp.gt.f32.partialorder %v200, 0.0
  %vm287 = vcmp.gt.f32.partialorder %v203, 0.0
  %vm288 = vcmp.gt.f32.partialorder %v208, 0.0
  %vm289 = vcmp.gt.f32.partialorder %v211, 0.0
  %vm290 = vcmp.gt.f32.partialorder %v216, 0.0
  %vm291 = vcmp.gt.f32.partialorder %v219, 0.0
  %vm292 = vcmp.gt.f32.partialorder %v224, 0.0
  %vm293 = vcmp.gt.f32.partialorder %v227, 0.0
  %vm294 = vcmp.gt.f32.partialorder %v232, 0.0
  %vm295 = vcmp.gt.f32.partialorder %v235, 0.0
  %vm296 = vcmp.gt.f32.partialorder %v240, 0.0
  %vm297 = vcmp.gt.f32.partialorder %v243, 0.0
  %vm298 = vcmp.gt.f32.partialorder %v248, 0.0
  %vm299 = vcmp.gt.f32.partialorder %v251, 0.0
  %vm300 = vcmp.gt.f32.partialorder %v256, 0.0
  %vm301 = vcmp.gt.f32.partialorder %v259, 0.0
  %vm302 = vcmp.gt.f32.partialorder %v264, 0.0
  %vm303 = vcmp.gt.f32.partialorder %v267, 0.0
  %vm304 = vcmp.gt.f32.partialorder %v272, 0.0
  %vm305 = vcmp.gt.f32.partialorder %v275, 0.0
  %vm306 = vcmp.gt.f32.partialorder %v280, 0.0
  %vm307 = vcmp.gt.f32.partialorder %v283, 0.0
  %v308 = vmul.f32 %v200, 0.2
  %v309 = vmul.f32 %v203, 0.2
  %v310 = vmul.f32 %v208, 0.2
  %v311 = vmul.f32 %v211, 0.2
  %v312 = vmul.f32 %v216, 0.2
  %v313 = vmul.f32 %v219, 0.2
  %v314 = vmul.f32 %v224, 0.2
  %v315 = vmul.f32 %v227, 0.2
  %v316 = vmul.f32 %v232, 0.2
  %v317 = vmul.f32 %v235, 0.2
  %v318 = vmul.f32 %v240, 0.2
  %v319 = vmul.f32 %v243, 0.2
  %v320 = vmul.f32 %v248, 0.2
  %v321 = vmul.f32 %v251, 0.2
  %v322 = vmul.f32 %v256, 0.2
  %v323 = vmul.f32 %v259, 0.2
  %v324 = vmul.f32 %v264, 0.2
  %v325 = vmul.f32 %v267, 0.2
  %v326 = vmul.f32 %v272, 0.2
  %v327 = vmul.f32 %v275, 0.2
  %v328 = vmul.f32 %v280, 0.2
  %v329 = vmul.f32 %v283, 0.2
  %v330 = vsel %vm286, %v200, %v308
  %v331 = vsel %vm287, %v203, %v309
  %v332 = vsel %vm288, %v208, %v310
  %v333 = vsel %vm289, %v211, %v311
  %v334 = vsel %vm290, %v216, %v312
  %v335 = vsel %vm291, %v219, %v313
  %v336 = vsel %vm292, %v224, %v314
  %v337 = vsel %vm293, %v227, %v315
  %v338 = vsel %vm294, %v232, %v316
  %v339 = vsel %vm295, %v235, %v317
  %v340 = vsel %vm296, %v240, %v318
  %v341 = vsel %vm297, %v243, %v319
  %v342 = vsel %vm298, %v248, %v320
  %v343 = vsel %vm299, %v251, %v321
  %v344 = vsel %vm300, %v256, %v322
  %v345 = vsel %vm301, %v259, %v323
  %v346 = vsel %vm302, %v264, %v324
  %v347 = vsel %vm303, %v267, %v325
  %v348 = vsel %vm304, %v272, %v326
  %v349 = vsel %vm305, %v275, %v327
  %v350 = vsel %vm306, %v280, %v328
  %v351 = vsel %vm307, %v283, %v329
  %v352 = vpack.c.bf16 %v331, %v330
  %v353 = vpack.c.bf16 %v333, %v332
  %v354 = vpack.c.bf16 %v335, %v334
  %v355 = vpack.c.bf16 %v337, %v336
  %v356 = vpack.c.bf16 %v339, %v338
  %v357 = vpack.c.bf16 %v341, %v340
  %v358 = vpack.c.bf16 %v343, %v342
  %v359 = vpack.c.bf16 %v345, %v344
  %v360 = vpack.c.bf16 %v347, %v346
  %v361 = vpack.c.bf16 %v349, %v348
  %v362 = vpack.c.bf16 %v351, %v350
  %v374 = vunpack.c.l.b16 %v352
  %v375 = vunpack.c.h.b16 %v352
  %v376 = vunpack.c.l.b16 %v353
  %v377 = vunpack.c.h.b16 %v353
  %v378 = vunpack.c.l.b16 %v354
  %v379 = vunpack.c.h.b16 %v354
  %v380 = vunpack.c.l.b16 %v355
  %v381 = vunpack.c.h.b16 %v355
  %v382 = vunpack.c.l.b16 %v356
  %v383 = vunpack.c.h.b16 %v356
  %v384 = vunpack.c.l.b16 %v357
  %v385 = vunpack.c.h.b16 %v357
  %v386 = vunpack.c.l.b16 %v358
  %v387 = vunpack.c.h.b16 %v358
  %v388 = vunpack.c.l.b16 %v359
  %v389 = vunpack.c.h.b16 %v359
  %v390 = vunpack.c.l.b16 %v360
  %v391 = vunpack.c.h.b16 %v360
  %v392 = vunpack.c.l.b16 %v361
  %v393 = vunpack.c.h.b16 %v361
  %v394 = vunpack.c.l.b16 %v362
  %v395 = vunpack.c.h.b16 %v362
  %v396 = vpack.c.b16 %v374, %v374
  %v397 = vpack.c.b16 %v375, %v375
  %v398 = vpack.c.b16 %v376, %v376
  %v399 = vpack.c.b16 %v377, %v377
  %v400 = vpack.c.b16 %v378, %v378
  %v401 = vpack.c.b16 %v379, %v379
  %v402 = vpack.c.b16 %v380, %v380
  %v403 = vpack.c.b16 %v381, %v381
  %v404 = vpack.c.b16 %v382, %v382
  %v405 = vpack.c.b16 %v383, %v383
  %v406 = vpack.c.b16 %v384, %v384
  %v407 = vpack.c.b16 %v385, %v385
  %v408 = vpack.c.b16 %v386, %v386
  %v409 = vpack.c.b16 %v387, %v387
  %v410 = vpack.c.b16 %v388, %v388
  %v411 = vpack.c.b16 %v389, %v389
  %v412 = vpack.c.b16 %v390, %v390
  %v413 = vpack.c.b16 %v391, %v391
  %v414 = vpack.c.b16 %v392, %v392
  %v415 = vpack.c.b16 %v393, %v393
  %v416 = vpack.c.b16 %v394, %v394
  %v417 = vpack.c.b16 %v395, %v395
  %vm440 = vcmask 60416
  %441 = vst.msk [vmem:[%s3] sm:$0xf] %vm440, %v396
  %442 = vst.msk [vmem:[%s3 + $0x4] sm:$0xf] %vm440, %v397
  %443 = vst.msk [vmem:[%s3 + $0x8] sm:$0xf] %vm440, %v398
  %444 = vst.msk [vmem:[%s3 + $0xc] sm:$0xf] %vm440, %v399
  %445 = vst.msk [vmem:[%s3 + $0x10] sm:$0xf] %vm440, %v400
  %446 = vst.msk [vmem:[%s3 + $0x14] sm:$0xf] %vm440, %v401
  %447 = vst.msk [vmem:[%s3 + $0x18] sm:$0xf] %vm440, %v402
  %448 = vst.msk [vmem:[%s3 + $0x1c] sm:$0xf] %vm440, %v403
  %449 = vst.msk [vmem:[%s3 + $0x20] sm:$0xf] %vm440, %v404
  %450 = vst.msk [vmem:[%s3 + $0x24] sm:$0xf] %vm440, %v405
  %451 = vst.msk [vmem:[%s3 + $0x28] sm:$0xf] %vm440, %v406
  %452 = vst.msk [vmem:[%s3 + $0x2c] sm:$0xf] %vm440, %v407
  %453 = vst.msk [vmem:[%s3 + $0x30] sm:$0xf] %vm440, %v408
  %454 = vst.msk [vmem:[%s3 + $0x34] sm:$0xf] %vm440, %v409
  %455 = vst.msk [vmem:[%s3 + $0x38] sm:$0xf] %vm440, %v410
  %456 = vst.msk [vmem:[%s3 + $0x3c] sm:$0xf] %vm440, %v411
  %457 = vst.msk [vmem:[%s3 + $0x40] sm:$0xf] %vm440, %v412
  %458 = vst.msk [vmem:[%s3 + $0x44] sm:$0xf] %vm440, %v413
  %459 = vst.msk [vmem:[%s3 + $0x48] sm:$0xf] %vm440, %v414
  %460 = vst.msk [vmem:[%s3 + $0x4c] sm:$0xf] %vm440, %v415
  %461 = vst.msk [vmem:[%s3 + $0x50] sm:$0xf] %vm440, %v416
  %462 = vst.msk [vmem:[%s3 + $0x54] sm:$0xf] %vm440, %v417
  // Predicated region
  $region14: #{multiscale_discriminator_forward.17} parent=0 // pred_check
    _
  $region15: #{multiscale_discriminator_forward.17} parent=0 // pred_check_branch
    %464 = sbr.rel (0) target = $region17
  $region16: #{multiscale_discriminator_forward.17} parent=0 // pred_region
    _
  $region17: #{multiscale_discriminator_forward.17} parent=0 // pred_fallthru
    _
  // Predicated region
  $region18: #{multiscale_discriminator_forward.17} parent=0 // pred_check
    _
  $region19: #{multiscale_discriminator_forward.17} parent=0 // pred_check_branch
    %466 = sbr.rel (0) target = $region21
  $region20: #{multiscale_discriminator_forward.17} parent=0 // pred_region
    _
  $region21: #{multiscale_discriminator_forward.17} parent=0 // pred_fallthru
    _

// kernel: multiscale_discriminator_forward.18
$region0: #{multiscale_discriminator_forward.18}
  #allocation0 [shape = 'u32[]', space=smem, size = 0x4, offset = 0x4, fixed_abs, tag = 'smem constant byte address 0x4 - core index']
  #allocation1 [shape = 'u32[144,128]{1,0:T(1,128)}', space=vmem, size = 0x12000, scoped, tag = 'internal scratch']
  %s0 = inlined_call_operand.vmem [shape: bf16[64,128], index: 0, kind: input, shape index: {}]
  %s1 = inlined_call_operand.vmem [shape: bf16[128,16], index: 1, kind: input, shape index: {}]
  %s2 = inlined_call_operand.vmem [shape: f32[1,16], index: 2, kind: input, shape index: {}]
  %s3 = inlined_call_operand.vmem [shape: bf16[64,16], index: 3, kind: output, shape index: {}]
  %s4 = sld [smem:[#allocation0]]
  $region22: #{multiscale_discriminator_forward.18} parent=0
    _
  %s6 = ssub.s32 1, %s4
  %s7 = scalar_select 0, %s6, %s4
  // Predicated region
  $region2: #{multiscale_discriminator_forward.18} parent=0 // pred_check
    _
  $region3: #{multiscale_discriminator_forward.18} parent=0 // pred_check_branch
    %9 = sbr.rel (0) target = $region5
  $region4: #{multiscale_discriminator_forward.18} parent=0 // pred_region
    _
  $region5: #{multiscale_discriminator_forward.18} parent=0 // pred_fallthru
    _
  // Predicated region
  $region6: #{multiscale_discriminator_forward.18} parent=0 // pred_check
    _
  $region7: #{multiscale_discriminator_forward.18} parent=0 // pred_check_branch
    %11 = sbr.rel (0) target = $region9
  $region8: #{multiscale_discriminator_forward.18} parent=0 // pred_region
    _
  $region9: #{multiscale_discriminator_forward.18} parent=0 // pred_fallthru
    _
  // Predicated region
  $region10: #{multiscale_discriminator_forward.18} parent=0 // pred_check
    _
  $region11: #{multiscale_discriminator_forward.18} parent=0 // pred_check_branch
    %13 = sbr.rel (0) target = $region13
  $region12: #{multiscale_discriminator_forward.18} parent=0 // pred_region
    _
  $region13: #{multiscale_discriminator_forward.18} parent=0 // pred_fallthru
    _
  %v15 = vld [vmem:[%s0] sm:$0xf]
  %v16 = vld [vmem:[%s0 + $0x4] sm:$0xf]
  %v17 = vld [vmem:[%s0 + $0x8] sm:$0xf]
  %v18 = vld [vmem:[%s0 + $0xc] sm:$0xf]
  %v19 = vld [vmem:[%s0 + $0x10] sm:$0xf]
  %v20 = vld [vmem:[%s0 + $0x14] sm:$0xf]
  %v21 = vld [vmem:[%s0 + $0x18] sm:$0xf]
  %v22 = vld [vmem:[%s0 + $0x1c] sm:$0xf]
  %v23 = vld [vmem:[%s1] sm:$0xf]
  %v24 = vld [vmem:[%s1 + $0x4] sm:$0xf]
  %v25 = vld [vmem:[%s1 + $0x8] sm:$0xf]
  %v26 = vld [vmem:[%s1 + $0xc] sm:$0xf]
  %v27 = vld [vmem:[%s1 + $0x10] sm:$0xf]
  %v28 = vld [vmem:[%s1 + $0x14] sm:$0xf]
  %v29 = vld [vmem:[%s1 + $0x18] sm:$0xf]
  %v30 = vld [vmem:[%s1 + $0x1c] sm:$0xf]
  %v31 = vld [vmem:[%s1 + $0x20] sm:$0xf]
  %v32 = vld [vmem:[%s1 + $0x24] sm:$0xf]
  %v33 = vld [vmem:[%s1 + $0x28] sm:$0xf]
  %v34 = vld [vmem:[%s1 + $0x2c] sm:$0xf]
  %v35 = vld [vmem:[%s1 + $0x30] sm:$0xf]
  %v36 = vld [vmem:[%s1 + $0x34] sm:$0xf]
  %v37 = vld [vmem:[%s1 + $0x38] sm:$0xf]
  %v38 = vld [vmem:[%s1 + $0x3c] sm:$0xf]
  %v39 = vld [vmem:[%s2] sm:$0x1]
  %v41 = vlaneseq
  %v42 = vshrl.u32 %v41, 7
  %v43 = vsub.s32 0, %v42
  %v44 = vrot.slane %v39, %v43
  %v54 = vunpack.c.l.b16 %v15
  %v55 = vunpack.c.l.b16 %v16
  %v56 = vunpack.c.l.b16 %v17
  %v57 = vunpack.c.l.b16 %v18
  %v58 = vunpack.c.l.b16 %v19
  %v59 = vunpack.c.l.b16 %v20
  %v60 = vunpack.c.l.b16 %v21
  %v61 = vunpack.c.l.b16 %v22
  %v62 = vpack.c.b16 %v55, %v54
  %v63 = vpack.c.b16 %v57, %v56
  %v64 = vpack.c.b16 %v59, %v58
  %v65 = vpack.c.b16 %v61, %v60
  %v86 = vunpack.c.l.b16 %v23
  %v87 = vunpack.c.l.b16 %v24
  %v88 = vunpack.c.l.b16 %v25
  %v89 = vunpack.c.l.b16 %v26
  %v90 = vunpack.c.l.b16 %v27
  %v91 = vunpack.c.l.b16 %v28
  %v92 = vunpack.c.l.b16 %v29
  %v93 = vunpack.c.l.b16 %v30
  %v94 = vunpack.c.l.b16 %v31
  %v95 = vunpack.c.l.b16 %v32
  %v96 = vunpack.c.l.b16 %v33
  %v97 = vunpack.c.l.b16 %v34
  %v98 = vunpack.c.l.b16 %v35
  %v99 = vunpack.c.l.b16 %v36
  %v100 = vunpack.c.l.b16 %v37
  %v101 = vunpack.c.l.b16 %v38
  %v102 = vpack.c.b16 %v87, %v86
  %v103 = vpack.c.b16 %v89, %v88
  %v104 = vpack.c.b16 %v91, %v90
  %v105 = vpack.c.b16 %v93, %v92
  %v106 = vpack.c.b16 %v95, %v94
  %v107 = vpack.c.b16 %v97, %v96
  %v108 = vpack.c.b16 %v99, %v98
  %v109 = vpack.c.b16 %v101, %v100
  %118 = vmatprep.subr.bf16.mxu0 0
  %119 = vmatpush1.bf16.msra.mxu0 %v109
  %120 = vmatprep.subr.bf16.mxu0 0
  %121 = vmatpush1.bf16.msra.mxu0 %v108
  %122 = vmatprep.subr.bf16.mxu0 0
  %123 = vmatpush1.bf16.msra.mxu0 %v107
  %124 = vmatprep.subr.bf16.mxu0 0
  %125 = vmatpush1.bf16.msra.mxu0 %v106
  %126 = vmatprep.subr.bf16.mxu0 0
  %127 = vmatpush1.bf16.msra.mxu0 %v105
  %128 = vmatprep.subr.bf16.mxu0 0
  %129 = vmatpush1.bf16.msra.mxu0 %v104
  %130 = vmatprep.subr.bf16.mxu0 0
  %131 = vmatpush1.bf16.msra.mxu0 %v103
  %132 = vmatprep.subr.bf16.mxu0 0
  %133 = vmatpush1.bf16.msra.mxu0 %v102
  %134 = vmatprep.subr.bf16.mxu0 0
  %135 = vmatpush2.bf16.msra.mxu0 0
  %136 = vmatprep.subr.bf16.mxu0 0
  %137 = vmatpush2.bf16.msra.mxu0 0
  %138 = vmatprep.subr.bf16.mxu0 0
  %139 = vmatpush2.bf16.msra.mxu0 0
  %140 = vmatprep.subr.bf16.mxu0 0
  %141 = vmatpush2.bf16.msra.mxu0 0
  %142 = vmatprep.subr.bf16.mxu0 0
  %143 = vmatpush2.bf16.msra.mxu0 0
  %144 = vmatprep.subr.bf16.mxu0 0
  %145 = vmatpush2.bf16.msra.mxu0 0
  %146 = vmatprep.subr.bf16.mxu0 0
  %147 = vmatpush2.bf16.msra.mxu0 0
  %148 = vmatprep.subr.bf16.mxu0 0
  %149 = vmatpush2.bf16.msra.mxu0 0
  %150 = vmatprep.mubr.bf16.mxu0 0
  %151 = vmatmul.mubr.bf16.gmra.mxu0 %v62
  %v152 = vpop.f32.mrf.mxu0
  %v153 = vadd.f32 %v44, %v152
  %v154 = vpop.f32.mrf.mxu0
  %v155 = vpop.f32.mrf.mxu0
  %v156 = vadd.f32 %v44, %v155
  %v157 = vpop.f32.mrf.mxu0
  %158 = vmatprep.mubr.bf16.mxu0 0
  %159 = vmatmul.mubr.bf16.gmra.mxu0 %v63
  %v160 = vpop.f32.mrf.mxu0
  %v161 = vadd.f32 %v44, %v160
  %v162 = vpop.f32.mrf.mxu0
  %v163 = vpop.f32.mrf.mxu0
  %v164 = vadd.f32 %v44, %v163
  %v165 = vpop.f32.mrf.mxu0
  %166 = vmatprep.mubr.bf16.mxu0 0
  %167 = vmatmul.mubr.bf16.gmra.mxu0 %v64
  %v168 = vpop.f32.mrf.mxu0
  %v169 = vadd.f32 %v44, %v168
  %v170 = vpop.f32.mrf.mxu0
  %v171 = vpop.f32.mrf.mxu0
  %v172 = vadd.f32 %v44, %v171
  %v173 = vpop.f32.mrf.mxu0
  %174 = vmatprep.mubr.bf16.mxu0 0
  %175 = vmatmul.mubr.bf16.gmra.mxu0 %v65
  %v176 = vpop.f32.mrf.mxu0
  %v177 = vadd.f32 %v44, %v176
  %v178 = vpop.f32.mrf.mxu0
  %v179 = vpop.f32.mrf.mxu0
  %v180 = vadd.f32 %v44, %v179
  %v181 = vpop.f32.mrf.mxu0
  %182 = vdwg.mxu0
  %vm183 = vcmp.gt.f32.partialorder %v153, 0.0
  %vm184 = vcmp.gt.f32.partialorder %v156, 0.0
  %vm185 = vcmp.gt.f32.partialorder %v161, 0.0
  %vm186 = vcmp.gt.f32.partialorder %v164, 0.0
  %vm187 = vcmp.gt.f32.partialorder %v169, 0.0
  %vm188 = vcmp.gt.f32.partialorder %v172, 0.0
  %vm189 = vcmp.gt.f32.partialorder %v177, 0.0
  %vm190 = vcmp.gt.f32.partialorder %v180, 0.0
  %v191 = vmul.f32 %v153, 0.2
  %v192 = vmul.f32 %v156, 0.2
  %v193 = vmul.f32 %v161, 0.2
  %v194 = vmul.f32 %v164, 0.2
  %v195 = vmul.f32 %v169, 0.2
  %v196 = vmul.f32 %v172, 0.2
  %v197 = vmul.f32 %v177, 0.2
  %v198 = vmul.f32 %v180, 0.2
  %v199 = vsel %vm183, %v153, %v191
  %v200 = vsel %vm184, %v156, %v192
  %v201 = vsel %vm185, %v161, %v193
  %v202 = vsel %vm186, %v164, %v194
  %v203 = vsel %vm187, %v169, %v195
  %v204 = vsel %vm188, %v172, %v196
  %v205 = vsel %vm189, %v177, %v197
  %v206 = vsel %vm190, %v180, %v198
  %v207 = vpack.c.bf16 %v200, %v199
  %v208 = vpack.c.bf16 %v202, %v201
  %v209 = vpack.c.bf16 %v204, %v203
  %v210 = vpack.c.bf16 %v206, %v205
  %v215 = vunpack.c.l.b16 %v207
  %v216 = vunpack.c.h.b16 %v207
  %v217 = vunpack.c.l.b16 %v208
  %v218 = vunpack.c.h.b16 %v208
  %v219 = vunpack.c.l.b16 %v209
  %v220 = vunpack.c.h.b16 %v209
  %v221 = vunpack.c.l.b16 %v210
  %v222 = vunpack.c.h.b16 %v210
  %v223 = vpack.c.b16 %v215, %v215
  %v224 = vpack.c.b16 %v216, %v216
  %v225 = vpack.c.b16 %v217, %v217
  %v226 = vpack.c.b16 %v218, %v218
  %v227 = vpack.c.b16 %v219, %v219
  %v228 = vpack.c.b16 %v220, %v220
  %v229 = vpack.c.b16 %v221, %v221
  %v230 = vpack.c.b16 %v222, %v222
  %vm239 = vcmask 125952
  %240 = vst.msk [vmem:[%s3] sm:$0xf] %vm239, %v223
  %241 = vst.msk [vmem:[%s3 + $0x4] sm:$0xf] %vm239, %v224
  %242 = vst.msk [vmem:[%s3 + $0x8] sm:$0xf] %vm239, %v225
  %243 = vst.msk [vmem:[%s3 + $0xc] sm:$0xf] %vm239, %v226
  %244 = vst.msk [vmem:[%s3 + $0x10] sm:$0xf] %vm239, %v227
  %245 = vst.msk [vmem:[%s3 + $0x14] sm:$0xf] %vm239, %v228
  %246 = vst.msk [vmem:[%s3 + $0x18] sm:$0xf] %vm239, %v229
  %247 = vst.msk [vmem:[%s3 + $0x1c] sm:$0xf] %vm239, %v230
  // Predicated region
  $region14: #{multiscale_discriminator_forward.18} parent=0 // pred_check
    _
  $region15: #{multiscale_discriminator_forward.18} parent=0 // pred_check_branch
    %249 = sbr.rel (0) target = $region17
  $region16: #{multiscale_discriminator_forward.18} parent=0 // pred_region
    _
  $region17: #{multiscale_discriminator_forward.18} parent=0 // pred_fallthru
    _
  // Predicated region
  $region18: #{multiscale_discriminator_forward.18} parent=0 // pred_check
    _
  $region19: #{multiscale_discriminator_forward.18} parent=0 // pred_check_branch
    %251 = sbr.rel (0) target = $region21
  $region20: #{multiscale_discriminator_forward.18} parent=0 // pred_region
    _
  $region21: #{multiscale_discriminator_forward.18} parent=0 // pred_fallthru
    _

// kernel: multiscale_discriminator_forward.19
$region0: #{multiscale_discriminator_forward.19}
  #allocation0 [shape = 'u32[]', space=smem, size = 0x4, offset = 0x4, fixed_abs, tag = 'smem constant byte address 0x4 - core index']
  #allocation1 [shape = 'u32[144,128]{1,0:T(1,128)}', space=vmem, size = 0x12000, scoped, tag = 'internal scratch']
  %s0 = inlined_call_operand.vmem [shape: bf16[32,256], index: 0, kind: input, shape index: {}]
  %s1 = inlined_call_operand.vmem [shape: bf16[256,32], index: 1, kind: input, shape index: {}]
  %s2 = inlined_call_operand.vmem [shape: f32[1,32], index: 2, kind: input, shape index: {}]
  %s3 = inlined_call_operand.vmem [shape: bf16[32,32], index: 3, kind: output, shape index: {}]
  %s4 = sld [smem:[#allocation0]]
  $region22: #{multiscale_discriminator_forward.19} parent=0
    _
  %s6 = ssub.s32 1, %s4
  %s7 = scalar_select 0, %s6, %s4
  // Predicated region
  $region2: #{multiscale_discriminator_forward.19} parent=0 // pred_check
    _
  $region3: #{multiscale_discriminator_forward.19} parent=0 // pred_check_branch
    %9 = sbr.rel (0) target = $region5
  $region4: #{multiscale_discriminator_forward.19} parent=0 // pred_region
    _
  $region5: #{multiscale_discriminator_forward.19} parent=0 // pred_fallthru
    _
  // Predicated region
  $region6: #{multiscale_discriminator_forward.19} parent=0 // pred_check
    _
  $region7: #{multiscale_discriminator_forward.19} parent=0 // pred_check_branch
    %11 = sbr.rel (0) target = $region9
  $region8: #{multiscale_discriminator_forward.19} parent=0 // pred_region
    _
  $region9: #{multiscale_discriminator_forward.19} parent=0 // pred_fallthru
    _
  // Predicated region
  $region10: #{multiscale_discriminator_forward.19} parent=0 // pred_check
    _
  $region11: #{multiscale_discriminator_forward.19} parent=0 // pred_check_branch
    %13 = sbr.rel (0) target = $region13
  $region12: #{multiscale_discriminator_forward.19} parent=0 // pred_region
    _
  $region13: #{multiscale_discriminator_forward.19} parent=0 // pred_fallthru
    _
  %v15 = vld [vmem:[%s0] sm:$0xff]
  %v16 = vld [vmem:[%s0 + $0x8] sm:$0xff]
  %v17 = vld [vmem:[%s0 + $0x10] sm:$0xff]
  %v18 = vld [vmem:[%s0 + $0x18] sm:$0xff]
  %v19 = vld [vmem:[%s1] sm:$0xf]
  %v20 = vld [vmem:[%s1 + $0x4] sm:$0xf]
  %v21 = vld [vmem:[%s1 + $0x8] sm:$0xf]
  %v22 = vld [vmem:[%s1 + $0xc] sm:$0xf]
  %v23 = vld [vmem:[%s1 + $0x10] sm:$0xf]
  %v24 = vld [vmem:[%s1 + $0x14] sm:$0xf]
  %v25 = vld [vmem:[%s1 + $0x18] sm:$0xf]
  %v26 = vld [vmem:[%s1 + $0x1c] sm:$0xf]
  %v27 = vld [vmem:[%s1 + $0x20] sm:$0xf]
  %v28 = vld [vmem:[%s1 + $0x24] sm:$0xf]
  %v29 = vld [vmem:[%s1 + $0x28] sm:$0xf]
  %v30 = vld [vmem:[%s1 + $0x2c] sm:$0xf]
  %v31 = vld [vmem:[%s1 + $0x30] sm:$0xf]
  %v32 = vld [vmem:[%s1 + $0x34] sm:$0xf]
  %v33 = vld [vmem:[%s1 + $0x38] sm:$0xf]
  %v34 = vld [vmem:[%s1 + $0x3c] sm:$0xf]
  %v35 = vld [vmem:[%s1 + $0x40] sm:$0xf]
  %v36 = vld [vmem:[%s1 + $0x44] sm:$0xf]
  %v37 = vld [vmem:[%s1 + $0x48] sm:$0xf]
  %v38 = vld [vmem:[%s1 + $0x4c] sm:$0xf]
  %v39 = vld [vmem:[%s1 + $0x50] sm:$0xf]
  %v40 = vld [vmem:[%s1 + $0x54] sm:$0xf]
  %v41 = vld [vmem:[%s1 + $0x58] sm:$0xf]
  %v42 = vld [vmem:[%s1 + $0x5c] sm:$0xf]
  %v43 = vld [vmem:[%s1 + $0x60] sm:$0xf]
  %v44 = vld [vmem:[%s1 + $0x64] sm:$0xf]
  %v45 = vld [vmem:[%s1 + $0x68] sm:$0xf]
  %v46 = vld [vmem:[%s1 + $0x6c] sm:$0xf]
  %v47 = vld [vmem:[%s1 + $0x70] sm:$0xf]
  %v48 = vld [vmem:[%s1 + $0x74] sm:$0xf]
  %v49 = vld [vmem:[%s1 + $0x78] sm:$0xf]
  %v50 = vld [vmem:[%s1 + $0x7c] sm:$0xf]
  %v51 = vld [vmem:[%s2] sm:$0x1]
  %v53 = vlaneseq
  %v54 = vshrl.u32 %v53, 7
  %v55 = vsub.s32 0, %v54
  %v56 = vrot.slane %v51, %v55
  %v62 = vunpack.c.l.b16 %v15
  %v63 = vunpack.c.h.b16 %v15
  %v64 = vunpack.c.l.b16 %v16
  %v65 = vunpack.c.h.b16 %v16
  %v66 = vunpack.c.l.b16 %v17
  %v67 = vunpack.c.h.b16 %v17
  %v68 = vunpack.c.l.b16 %v18
  %v69 = vunpack.c.h.b16 %v18
  %v70 = vpack.c.b16 %v64, %v62
  %v71 = vpack.c.b16 %v65, %v63
  %v72 = vpack.c.b16 %v68, %v66
  %v73 = vpack.c.b16 %v69, %v67
  %v110 = vunpack.c.l.b16 %v19
  %v111 = vunpack.c.l.b16 %v20
  %v112 = vunpack.c.l.b16 %v21
  %v113 = vunpack.c.l.b16 %v22
  %v114 = vunpack.c.l.b16 %v23
  %v115 = vunpack.c.l.b16 %v24
  %v116 = vunpack.c.l.b16 %v25
  %v117 = vunpack.c.l.b16 %v26
  %v118 = vunpack.c.l.b16 %v27
  %v119 = vunpack.c.l.b16 %v28
  %v120 = vunpack.c.l.b16 %v29
  %v121 = vunpack.c.l.b16 %v30
  %v122 = vunpack.c.l.b16 %v31
  %v123 = vunpack.c.l.b16 %v32
  %v124 = vunpack.c.l.b16 %v33
  %v125 = vunpack.c.l.b16 %v34
  %v126 = vunpack.c.l.b16 %v35
  %v127 = vunpack.c.l.b16 %v36
  %v128 = vunpack.c.l.b16 %v37
  %v129 = vunpack.c.l.b16 %v38
  %v130 = vunpack.c.l.b16 %v39
  %v131 = vunpack.c.l.b16 %v40
  %v132 = vunpack.c.l.b16 %v41
  %v133 = vunpack.c.l.b16 %v42
  %v134 = vunpack.c.l.b16 %v43
  %v135 = vunpack.c.l.b16 %v44
  %v136 = vunpack.c.l.b16 %v45
  %v137 = vunpack.c.l.b16 %v46
  %v138 = vunpack.c.l.b16 %v47
  %v139 = vunpack.c.l.b16 %v48
  %v140 = vunpack.c.l.b16 %v49
  %v141 = vunpack.c.l.b16 %v50
  %v142 = vpack.c.b16 %v111, %v110
  %v143 = vpack.c.b16 %v113, %v112
  %v144 = vpack.c.b16 %v115, %v114
  %v145 = vpack.c.b16 %v117, %v116
  %v146 = vpack.c.b16 %v119, %v118
  %v147 = vpack.c.b16 %v121, %v120
  %v148 = vpack.c.b16 %v123, %v122
  %v149 = vpack.c.b16 %v125, %v124
  %v150 = vpack.c.b16 %v127, %v126
  %v151 = vpack.c.b16 %v129, %v128
  %v152 = vpack.c.b16 %v131, %v130
  %v153 = vpack.c.b16 %v133, %v132
  %v154 = vpack.c.b16 %v135, %v134
  %v155 = vpack.c.b16 %v137, %v136
  %v156 = vpack.c.b16 %v139, %v138
  %v157 = vpack.c.b16 %v141, %v140
  %174 = vmatprep.subr.bf16.mxu0 0
  %175 = vmatpush1.bf16.msra.mxu0 %v149
  %176 = vmatprep.subr.bf16.mxu0 0
  %177 = vmatpush1.bf16.msra.mxu0 %v148
  %178 = vmatprep.subr.bf16.mxu0 0
  %179 = vmatpush1.bf16.msra.mxu0 %v147
  %180 = vmatprep.subr.bf16.mxu0 0
  %181 = vmatpush1.bf16.msra.mxu0 %v146
  %182 = vmatprep.subr.bf16.mxu0 0
  %183 = vmatpush1.bf16.msra.mxu0 %v145
  %184 = vmatprep.subr.bf16.mxu0 0
  %185 = vmatpush1.bf16.msra.mxu0 %v144
  %186 = vmatprep.subr.bf16.mxu0 0
  %187 = vmatpush1.bf16.msra.mxu0 %v143
  %188 = vmatprep.subr.bf16.mxu0 0
  %189 = vmatpush1.bf16.msra.mxu0 %v142
  %190 = vmatprep.subr.bf16.mxu0 0
  %191 = vmatpush2.bf16.msra.mxu0 %v157
  %192 = vmatprep.subr.bf16.mxu0 0
  %193 = vmatpush2.bf16.msra.mxu0 %v156
  %194 = vmatprep.subr.bf16.mxu0 0
  %195 = vmatpush2.bf16.msra.mxu0 %v155
  %196 = vmatprep.subr.bf16.mxu0 0
  %197 = vmatpush2.bf16.msra.mxu0 %v154
  %198 = vmatprep.subr.bf16.mxu0 0
  %199 = vmatpush2.bf16.msra.mxu0 %v153
  %200 = vmatprep.subr.bf16.mxu0 0
  %201 = vmatpush2.bf16.msra.mxu0 %v152
  %202 = vmatprep.subr.bf16.mxu0 0
  %203 = vmatpush2.bf16.msra.mxu0 %v151
  %204 = vmatprep.subr.bf16.mxu0 0
  %205 = vmatpush2.bf16.msra.mxu0 %v150
  %206 = vmatprep.mubr.bf16.mxu0 %v71
  %207 = vmatmul.mubr.bf16.gmra.mxu0 %v70
  %v208 = vpop.f32.mrf.mxu0
  %v209 = vadd.f32 %v56, %v208
  %v210 = vpop.f32.mrf.mxu0
  %v211 = vpop.f32.mrf.mxu0
  %v212 = vadd.f32 %v56, %v211
  %v213 = vpop.f32.mrf.mxu0
  %214 = vmatprep.mubr.bf16.mxu0 %v73
  %215 = vmatmul.mubr.bf16.gmra.mxu0 %v72
  %v216 = vpop.f32.mrf.mxu0
  %v217 = vadd.f32 %v56, %v216
  %v218 = vpop.f32.mrf.mxu0
  %v219 = vpop.f32.mrf.mxu0
  %v220 = vadd.f32 %v56, %v219
  %v221 = vpop.f32.mrf.mxu0
  %222 = vdwg.mxu0
  %vm223 = vcmp.gt.f32.partialorder %v209, 0.0
  %vm224 = vcmp.gt.f32.partialorder %v212, 0.0
  %vm225 = vcmp.gt.f32.partialorder %v217, 0.0
  %vm226 = vcmp.gt.f32.partialorder %v220, 0.0
  %v227 = vmul.f32 %v209, 0.2
  %v228 = vmul.f32 %v212, 0.2
  %v229 = vmul.f32 %v217, 0.2
  %v230 = vmul.f32 %v220, 0.2
  %v231 = vsel %vm223, %v209, %v227
  %v232 = vsel %vm224, %v212, %v228
  %v233 = vsel %vm225, %v217, %v229
  %v234 = vsel %vm226, %v220, %v230
  %v235 = vpack.c.bf16 %v232, %v231
  %v236 = vpack.c.bf16 %v234, %v233
  %v239 = vunpack.c.l.b16 %v235
  %v240 = vunpack.c.h.b16 %v235
  %v241 = vunpack.c.l.b16 %v236
  %v242 = vunpack.c.h.b16 %v236
  %v243 = vpack.c.b16 %v239, %v239
  %v244 = vpack.c.b16 %v240, %v240
  %v245 = vpack.c.b16 %v241, %v241
  %v246 = vpack.c.b16 %v242, %v242
  %vm251 = vcmask 257024
  %252 = vst.msk [vmem:[%s3] sm:$0xf] %vm251, %v243
  %253 = vst.msk [vmem:[%s3 + $0x4] sm:$0xf] %vm251, %v244
  %254 = vst.msk [vmem:[%s3 + $0x8] sm:$0xf] %vm251, %v245
  %255 = vst.msk [vmem:[%s3 + $0xc] sm:$0xf] %vm251, %v246
  // Predicated region
  $region14: #{multiscale_discriminator_forward.19} parent=0 // pred_check
    _
  $region15: #{multiscale_discriminator_forward.19} parent=0 // pred_check_branch
    %257 = sbr.rel (0) target = $region17
  $region16: #{multiscale_discriminator_forward.19} parent=0 // pred_region
    _
  $region17: #{multiscale_discriminator_forward.19} parent=0 // pred_fallthru
    _
  // Predicated region
  $region18: #{multiscale_discriminator_forward.19} parent=0 // pred_check
    _
  $region19: #{multiscale_discriminator_forward.19} parent=0 // pred_check_branch
    %259 = sbr.rel (0) target = $region21
  $region20: #{multiscale_discriminator_forward.19} parent=0 // pred_region
    _
  $region21: #{multiscale_discriminator_forward.19} parent=0 // pred_fallthru
    _

// kernel: multiscale_discriminator_forward.21
$region0: #{multiscale_discriminator_forward.21}
  #allocation0 [shape = 'u32[]', space=smem, size = 0x4, offset = 0x4, fixed_abs, tag = 'smem constant byte address 0x4 - core index']
  #allocation1 [shape = 'u32[144,128]{1,0:T(1,128)}', space=vmem, size = 0x12000, scoped, tag = 'internal scratch']
  %s0 = inlined_call_operand.vmem [shape: bf16[64,1024], index: 0, kind: input, shape index: {}]
  %s1 = inlined_call_operand.vmem [shape: bf16[1024,8], index: 1, kind: input, shape index: {}]
  %s2 = inlined_call_operand.vmem [shape: f32[1,8], index: 2, kind: input, shape index: {}]
  %s3 = inlined_call_operand.vmem [shape: f32[64,8], index: 3, kind: output, shape index: {}]
  %s4 = sld [smem:[#allocation0]]
  $region22: #{multiscale_discriminator_forward.21} parent=0
    _
  %s6 = ssub.s32 1, %s4
  %s7 = scalar_select 0, %s6, %s4
  // Predicated region
  $region2: #{multiscale_discriminator_forward.21} parent=0 // pred_check
    _
  $region3: #{multiscale_discriminator_forward.21} parent=0 // pred_check_branch
    %9 = sbr.rel (0) target = $region5
  $region4: #{multiscale_discriminator_forward.21} parent=0 // pred_region
    _
  $region5: #{multiscale_discriminator_forward.21} parent=0 // pred_fallthru
    _
  // Predicated region
  $region6: #{multiscale_discriminator_forward.21} parent=0 // pred_check
    _
  $region7: #{multiscale_discriminator_forward.21} parent=0 // pred_check_branch
    %11 = sbr.rel (0) target = $region9
  $region8: #{multiscale_discriminator_forward.21} parent=0 // pred_region
    _
  $region9: #{multiscale_discriminator_forward.21} parent=0 // pred_fallthru
    _
  // Predicated region
  $region10: #{multiscale_discriminator_forward.21} parent=0 // pred_check
    _
  $region11: #{multiscale_discriminator_forward.21} parent=0 // pred_check_branch
    %13 = sbr.rel (0) target = $region13
  $region12: #{multiscale_discriminator_forward.21} parent=0 // pred_region
    _
  $region13: #{multiscale_discriminator_forward.21} parent=0 // pred_fallthru
    _
  %v15 = vld [vmem:[%s0] sm:$0xff]
  %v16 = vld [vmem:[%s0 + $0x8] sm:$0xff]
  %v17 = vld [vmem:[%s0 + $0x10] sm:$0xff]
  %v18 = vld [vmem:[%s0 + $0x18] sm:$0xff]
  %v19 = vld [vmem:[%s0 + $0x20] sm:$0xff]
  %v20 = vld [vmem:[%s0 + $0x28] sm:$0xff]
  %v21 = vld [vmem:[%s0 + $0x30] sm:$0xff]
  %v22 = vld [vmem:[%s0 + $0x38] sm:$0xff]
  %v23 = vld [vmem:[%s0 + $0x40] sm:$0xff]
  %v24 = vld [vmem:[%s0 + $0x48] sm:$0xff]
  %v25 = vld [vmem:[%s0 + $0x50] sm:$0xff]
  %v26 = vld [vmem:[%s0 + $0x58] sm:$0xff]
  %v27 = vld [vmem:[%s0 + $0x60] sm:$0xff]
  %v28 = vld [vmem:[%s0 + $0x68] sm:$0xff]
  %v29 = vld [vmem:[%s0 + $0x70] sm:$0xff]
  %v30 = vld [vmem:[%s0 + $0x78] sm:$0xff]
  %v31 = vld [vmem:[%s0 + $0x80] sm:$0xff]
  %v32 = vld [vmem:[%s0 + $0x88] sm:$0xff]
  %v33 = vld [vmem:[%s0 + $0x90] sm:$0xff]
  %v34 = vld [vmem:[%s0 + $0x98] sm:$0xff]
  %v35 = vld [vmem:[%s0 + $0xa0] sm:$0xff]
  %v36 = vld [vmem:[%s0 + $0xa8] sm:$0xff]
  %v37 = vld [vmem:[%s0 + $0xb0] sm:$0xff]
  %v38 = vld [vmem:[%s0 + $0xb8] sm:$0xff]
  %v39 = vld [vmem:[%s0 + $0xc0] sm:$0xff]
  %v40 = vld [vmem:[%s0 + $0xc8] sm:$0xff]
  %v41 = vld [vmem:[%s0 + $0xd0] sm:$0xff]
  %v42 = vld [vmem:[%s0 + $0xd8] sm:$0xff]
  %v43 = vld [vmem:[%s0 + $0xe0] sm:$0xff]
  %v44 = vld [vmem:[%s0 + $0xe8] sm:$0xff]
  %v45 = vld [vmem:[%s0 + $0xf0] sm:$0xff]
  %v46 = vld [vmem:[%s0 + $0xf8] sm:$0xff]
  %v47 = vld [vmem:[%s1] sm:$0xf]
  %v48 = vld [vmem:[%s1 + $0x4] sm:$0xf]
  %v49 = vld [vmem:[%s1 + $0x8] sm:$0xf]
  %v50 = vld [vmem:[%s1 + $0xc] sm:$0xf]
  %v51 = vld [vmem:[%s1 + $0x10] sm:$0xf]
  %v52 = vld [vmem:[%s1 + $0x14] sm:$0xf]
  %v53 = vld [vmem:[%s1 + $0x18] sm:$0xf]
  %v54 = vld [vmem:[%s1 + $0x1c] sm:$0xf]
  %v55 = vld [vmem:[%s1 + $0x20] sm:$0xf]
  %v56 = vld [vmem:[%s1 + $0x24] sm:$0xf]
  %v57 = vld [vmem:[%s1 + $0x28] sm:$0xf]
  %v58 = vld [vmem:[%s1 + $0x2c] sm:$0xf]
  %v59 = vld [vmem:[%s1 + $0x30] sm:$0xf]
  %v60 = vld [vmem:[%s1 + $0x34] sm:$0xf]
  %v61 = vld [vmem:[%s1 + $0x38] sm:$0xf]
  %v62 = vld [vmem:[%s1 + $0x3c] sm:$0xf]
  %v63 = vld [vmem:[%s1 + $0x40] sm:$0xf]
  %v64 = vld [vmem:[%s1 + $0x44] sm:$0xf]
  %v65 = vld [vmem:[%s1 + $0x48] sm:$0xf]
  %v66 = vld [vmem:[%s1 + $0x4c] sm:$0xf]
  %v67 = vld [vmem:[%s1 + $0x50] sm:$0xf]
  %v68 = vld [vmem:[%s1 + $0x54] sm:$0xf]
  %v69 = vld [vmem:[%s1 + $0x58] sm:$0xf]
  %v70 = vld [vmem:[%s1 + $0x5c] sm:$0xf]
  %v71 = vld [vmem:[%s1 + $0x60] sm:$0xf]
  %v72 = vld [vmem:[%s1 + $0x64] sm:$0xf]
  %v73 = vld [vmem:[%s1 + $0x68] sm:$0xf]
  %v74 = vld [vmem:[%s1 + $0x6c] sm:$0xf]
  %v75 = vld [vmem:[%s1 + $0x70] sm:$0xf]
  %v76 = vld [vmem:[%s1 + $0x74] sm:$0xf]
  %v77 = vld [vmem:[%s1 + $0x78] sm:$0xf]
  %v78 = vld [vmem:[%s1 + $0x7c] sm:$0xf]
  %v79 = vld [vmem:[%s1 + $0x80] sm:$0xf]
  %v80 = vld [vmem:[%s1 + $0x84] sm:$0xf]
  %v81 = vld [vmem:[%s1 + $0x88] sm:$0xf]
  %v82 = vld [vmem:[%s1 + $0x8c] sm:$0xf]
  %v83 = vld [vmem:[%s1 + $0x90] sm:$0xf]
  %v84 = vld [vmem:[%s1 + $0x94] sm:$0xf]
  %v85 = vld [vmem:[%s1 + $0x98] sm:$0xf]
  %v86 = vld [vmem:[%s1 + $0x9c] sm:$0xf]
  %v87 = vld [vmem:[%s1 + $0xa0] sm:$0xf]
  %v88 = vld [vmem:[%s1 + $0xa4] sm:$0xf]
  %v89 = vld [vmem:[%s1 + $0xa8] sm:$0xf]
  %v90 = vld [vmem:[%s1 + $0xac] sm:$0xf]
  %v91 = vld [vmem:[%s1 + $0xb0] sm:$0xf]
  %v92 = vld [vmem:[%s1 + $0xb4] sm:$0xf]
  %v93 = vld [vmem:[%s1 + $0xb8] sm:$0xf]
  %v94 = vld [vmem:[%s1 + $0xbc] sm:$0xf]
  %v95 = vld [vmem:[%s1 + $0xc0] sm:$0xf]
  %v96 = vld [vmem:[%s1 + $0xc4] sm:$0xf]
  %v97 = vld [vmem:[%s1 + $0xc8] sm:$0xf]
  %v98 = vld [vmem:[%s1 + $0xcc] sm:$0xf]
  %v99 = vld [vmem:[%s1 + $0xd0] sm:$0xf]
  %v100 = vld [vmem:[%s1 + $0xd4] sm:$0xf]
  %v101 = vld [vmem:[%s1 + $0xd8] sm:$0xf]
  %v102 = vld [vmem:[%s1 + $0xdc] sm:$0xf]
  %v103 = vld [vmem:[%s1 + $0xe0] sm:$0xf]
  %v104 = vld [vmem:[%s1 + $0xe4] sm:$0xf]
  %v105 = vld [vmem:[%s1 + $0xe8] sm:$0xf]
  %v106 = vld [vmem:[%s1 + $0xec] sm:$0xf]
  %v107 = vld [vmem:[%s1 + $0xf0] sm:$0xf]
  %v108 = vld [vmem:[%s1 + $0xf4] sm:$0xf]
  %v109 = vld [vmem:[%s1 + $0xf8] sm:$0xf]
  %v110 = vld [vmem:[%s1 + $0xfc] sm:$0xf]
  %v111 = vld [vmem:[%s1 + $0x100] sm:$0xf]
  %v112 = vld [vmem:[%s1 + $0x104] sm:$0xf]
  %v113 = vld [vmem:[%s1 + $0x108] sm:$0xf]
  %v114 = vld [vmem:[%s1 + $0x10c] sm:$0xf]
  %v115 = vld [vmem:[%s1 + $0x110] sm:$0xf]
  %v116 = vld [vmem:[%s1 + $0x114] sm:$0xf]
  %v117 = vld [vmem:[%s1 + $0x118] sm:$0xf]
  %v118 = vld [vmem:[%s1 + $0x11c] sm:$0xf]
  %v119 = vld [vmem:[%s1 + $0x120] sm:$0xf]
  %v120 = vld [vmem:[%s1 + $0x124] sm:$0xf]
  %v121 = vld [vmem:[%s1 + $0x128] sm:$0xf]
  %v122 = vld [vmem:[%s1 + $0x12c] sm:$0xf]
  %v123 = vld [vmem:[%s1 + $0x130] sm:$0xf]
  %v124 = vld [vmem:[%s1 + $0x134] sm:$0xf]
  %v125 = vld [vmem:[%s1 + $0x138] sm:$0xf]
  %v126 = vld [vmem:[%s1 + $0x13c] sm:$0xf]
  %v127 = vld [vmem:[%s1 + $0x140] sm:$0xf]
  %v128 = vld [vmem:[%s1 + $0x144] sm:$0xf]
  %v129 = vld [vmem:[%s1 + $0x148] sm:$0xf]
  %v130 = vld [vmem:[%s1 + $0x14c] sm:$0xf]
  %v131 = vld [vmem:[%s1 + $0x150] sm:$0xf]
  %v132 = vld [vmem:[%s1 + $0x154] sm:$0xf]
  %v133 = vld [vmem:[%s1 + $0x158] sm:$0xf]
  %v134 = vld [vmem:[%s1 + $0x15c] sm:$0xf]
  %v135 = vld [vmem:[%s1 + $0x160] sm:$0xf]
  %v136 = vld [vmem:[%s1 + $0x164] sm:$0xf]
  %v137 = vld [vmem:[%s1 + $0x168] sm:$0xf]
  %v138 = vld [vmem:[%s1 + $0x16c] sm:$0xf]
  %v139 = vld [vmem:[%s1 + $0x170] sm:$0xf]
  %v140 = vld [vmem:[%s1 + $0x174] sm:$0xf]
  %v141 = vld [vmem:[%s1 + $0x178] sm:$0xf]
  %v142 = vld [vmem:[%s1 + $0x17c] sm:$0xf]
  %v143 = vld [vmem:[%s1 + $0x180] sm:$0xf]
  %v144 = vld [vmem:[%s1 + $0x184] sm:$0xf]
  %v145 = vld [vmem:[%s1 + $0x188] sm:$0xf]
  %v146 = vld [vmem:[%s1 + $0x18c] sm:$0xf]
  %v147 = vld [vmem:[%s1 + $0x190] sm:$0xf]
  %v148 = vld [vmem:[%s1 + $0x194] sm:$0xf]
  %v149 = vld [vmem:[%s1 + $0x198] sm:$0xf]
  %v150 = vld [vmem:[%s1 + $0x19c] sm:$0xf]
  %v151 = vld [vmem:[%s1 + $0x1a0] sm:$0xf]
  %v152 = vld [vmem:[%s1 + $0x1a4] sm:$0xf]
  %v153 = vld [vmem:[%s1 + $0x1a8] sm:$0xf]
  %v154 = vld [vmem:[%s1 + $0x1ac] sm:$0xf]
  %v155 = vld [vmem:[%s1 + $0x1b0] sm:$0xf]
  %v156 = vld [vmem:[%s1 + $0x1b4] sm:$0xf]
  %v157 = vld [vmem:[%s1 + $0x1b8] sm:$0xf]
  %v158 = vld [vmem:[%s1 + $0x1bc] sm:$0xf]
  %v159 = vld [vmem:[%s1 + $0x1c0] sm:$0xf]
  %v160 = vld [vmem:[%s1 + $0x1c4] sm:$0xf]
  %v161 = vld [vmem:[%s1 + $0x1c8] sm:$0xf]
  %v162 = vld [vmem:[%s1 + $0x1cc] sm:$0xf]
  %v163 = vld [vmem:[%s1 + $0x1d0] sm:$0xf]
  %v164 = vld [vmem:[%s1 + $0x1d4] sm:$0xf]
  %v165 = vld [vmem:[%s1 + $0x1d8] sm:$0xf]
  %v166 = vld [vmem:[%s1 + $0x1dc] sm:$0xf]
  %v167 = vld [vmem:[%s1 + $0x1e0] sm:$0xf]
  %v168 = vld [vmem:[%s1 + $0x1e4] sm:$0xf]
  %v169 = vld [vmem:[%s1 + $0x1e8] sm:$0xf]
  %v170 = vld [vmem:[%s1 + $0x1ec] sm:$0xf]
  %v171 = vld [vmem:[%s1 + $0x1f0] sm:$0xf]
  %v172 = vld [vmem:[%s1 + $0x1f4] sm:$0xf]
  %v173 = vld [vmem:[%s1 + $0x1f8] sm:$0xf]
  %v174 = vld [vmem:[%s1 + $0x1fc] sm:$0xf]
  %v175 = vld [vmem:[%s2] sm:$0x1]
  %v177 = vlaneseq
  %v178 = vshrl.u32 %v177, 7
  %v179 = vsub.s32 0, %v178
  %v180 = vrot.slane %v175, %v179
  %v214 = vunpack.c.l.b16 %v15
  %v215 = vunpack.c.h.b16 %v15
  %v216 = vunpack.c.l.b16 %v16
  %v217 = vunpack.c.h.b16 %v16
  %v218 = vunpack.c.l.b16 %v17
  %v219 = vunpack.c.h.b16 %v17
  %v220 = vunpack.c.l.b16 %v18
  %v221 = vunpack.c.h.b16 %v18
  %v222 = vunpack.c.l.b16 %v19
  %v223 = vunpack.c.h.b16 %v19
  %v224 = vunpack.c.l.b16 %v20
  %v225 = vunpack.c.h.b16 %v20
  %v226 = vunpack.c.l.b16 %v21
  %v227 = vunpack.c.h.b16 %v21
  %v228 = vunpack.c.l.b16 %v22
  %v229 = vunpack.c.h.b16 %v22
  %v230 = vunpack.c.l.b16 %v23
  %v231 = vunpack.c.h.b16 %v23
  %v232 = vunpack.c.l.b16 %v24
  %v233 = vunpack.c.h.b16 %v24
  %v234 = vunpack.c.l.b16 %v25
  %v235 = vunpack.c.h.b16 %v25
  %v236 = vunpack.c.l.b16 %v26
  %v237 = vunpack.c.h.b16 %v26
  %v238 = vunpack.c.l.b16 %v27
  %v239 = vunpack.c.h.b16 %v27
  %v240 = vunpack.c.l.b16 %v28
  %v241 = vunpack.c.h.b16 %v28
  %v242 = vunpack.c.l.b16 %v29
  %v243 = vunpack.c.h.b16 %v29
  %v244 = vunpack.c.l.b16 %v30
  %v245 = vunpack.c.h.b16 %v30
  %v246 = vunpack.c.l.b16 %v31
  %v247 = vunpack.c.h.b16 %v31
  %v248 = vunpack.c.l.b16 %v32
  %v249 = vunpack.c.h.b16 %v32
  %v250 = vunpack.c.l.b16 %v33
  %v251 = vunpack.c.h.b16 %v33
  %v252 = vunpack.c.l.b16 %v34
  %v253 = vunpack.c.h.b16 %v34
  %v254 = vunpack.c.l.b16 %v35
  %v255 = vunpack.c.h.b16 %v35
  %v256 = vunpack.c.l.b16 %v36
  %v257 = vunpack.c.h.b16 %v36
  %v258 = vunpack.c.l.b16 %v37
  %v259 = vunpack.c.h.b16 %v37
  %v260 = vunpack.c.l.b16 %v38
  %v261 = vunpack.c.h.b16 %v38
  %v262 = vunpack.c.l.b16 %v39
  %v263 = vunpack.c.h.b16 %v39
  %v264 = vunpack.c.l.b16 %v40
  %v265 = vunpack.c.h.b16 %v40
  %v266 = vunpack.c.l.b16 %v41
  %v267 = vunpack.c.h.b16 %v41
  %v268 = vunpack.c.l.b16 %v42
  %v269 = vunpack.c.h.b16 %v42
  %v270 = vunpack.c.l.b16 %v43
  %v271 = vunpack.c.h.b16 %v43
  %v272 = vunpack.c.l.b16 %v44
  %v273 = vunpack.c.h.b16 %v44
  %v274 = vunpack.c.l.b16 %v45
  %v275 = vunpack.c.h.b16 %v45
  %v276 = vunpack.c.l.b16 %v46
  %v277 = vunpack.c.h.b16 %v46
  %v278 = vpack.c.b16 %v222, %v214
  %v279 = vpack.c.b16 %v223, %v215
  %v280 = vpack.c.b16 %v224, %v216
  %v281 = vpack.c.b16 %v225, %v217
  %v282 = vpack.c.b16 %v226, %v218
  %v283 = vpack.c.b16 %v227, %v219
  %v284 = vpack.c.b16 %v228, %v220
  %v285 = vpack.c.b16 %v229, %v221
  %v286 = vpack.c.b16 %v238, %v230
  %v287 = vpack.c.b16 %v239, %v231
  %v288 = vpack.c.b16 %v240, %v232
  %v289 = vpack.c.b16 %v241, %v233
  %v290 = vpack.c.b16 %v242, %v234
  %v291 = vpack.c.b16 %v243, %v235
  %v292 = vpack.c.b16 %v244, %v236
  %v293 = vpack.c.b16 %v245, %v237
  %v294 = vpack.c.b16 %v254, %v246
  %v295 = vpack.c.b16 %v255, %v247
  %v296 = vpack.c.b16 %v256, %v248
  %v297 = vpack.c.b16 %v257, %v249
  %v298 = vpack.c.b16 %v258, %v250
  %v299 = vpack.c.b16 %v259, %v251
  %v300 = vpack.c.b16 %v260, %v252
  %v301 = vpack.c.b16 %v261, %v253
  %v302 = vpack.c.b16 %v270, %v262
  %v303 = vpack.c.b16 %v271, %v263
  %v304 = vpack.c.b16 %v272, %v264
  %v305 = vpack.c.b16 %v273, %v265
  %v306 = vpack.c.b16 %v274, %v266
  %v307 = vpack.c.b16 %v275, %v267
  %v308 = vpack.c.b16 %v276, %v268
  %v309 = vpack.c.b16 %v277, %v269
  %v470 = vunpack.c.l.b16 %v47
  %v471 = vunpack.c.l.b16 %v48
  %v472 = vunpack.c.l.b16 %v49
  %v473 = vunpack.c.l.b16 %v50
  %v474 = vunpack.c.l.b16 %v51
  %v475 = vunpack.c.l.b16 %v52
  %v476 = vunpack.c.l.b16 %v53
  %v477 = vunpack.c.l.b16 %v54
  %v478 = vunpack.c.l.b16 %v55
  %v479 = vunpack.c.l.b16 %v56
  %v480 = vunpack.c.l.b16 %v57
  %v481 = vunpack.c.l.b16 %v58
  %v482 = vunpack.c.l.b16 %v59
  %v483 = vunpack.c.l.b16 %v60
  %v484 = vunpack.c.l.b16 %v61
  %v485 = vunpack.c.l.b16 %v62
  %v486 = vunpack.c.l.b16 %v63
  %v487 = vunpack.c.l.b16 %v64
  %v488 = vunpack.c.l.b16 %v65
  %v489 = vunpack.c.l.b16 %v66
  %v490 = vunpack.c.l.b16 %v67
  %v491 = vunpack.c.l.b16 %v68
  %v492 = vunpack.c.l.b16 %v69
  %v493 = vunpack.c.l.b16 %v70
  %v494 = vunpack.c.l.b16 %v71
  %v495 = vunpack.c.l.b16 %v72
  %v496 = vunpack.c.l.b16 %v73
  %v497 = vunpack.c.l.b16 %v74
  %v498 = vunpack.c.l.b16 %v75
  %v499 = vunpack.c.l.b16 %v76
  %v500 = vunpack.c.l.b16 %v77
  %v501 = vunpack.c.l.b16 %v78
  %v502 = vunpack.c.l.b16 %v79
  %v503 = vunpack.c.l.b16 %v80
  %v504 = vunpack.c.l.b16 %v81
  %v505 = vunpack.c.l.b16 %v82
  %v506 = vunpack.c.l.b16 %v83
  %v507 = vunpack.c.l.b16 %v84
  %v508 = vunpack.c.l.b16 %v85
  %v509 = vunpack.c.l.b16 %v86
  %v510 = vunpack.c.l.b16 %v87
  %v511 = vunpack.c.l.b16 %v88
  %v512 = vunpack.c.l.b16 %v89
  %v513 = vunpack.c.l.b16 %v90
  %v514 = vunpack.c.l.b16 %v91
  %v515 = vunpack.c.l.b16 %v92
  %v516 = vunpack.c.l.b16 %v93
  %v517 = vunpack.c.l.b16 %v94
  %v518 = vunpack.c.l.b16 %v95
  %v519 = vunpack.c.l.b16 %v96
  %v520 = vunpack.c.l.b16 %v97
  %v521 = vunpack.c.l.b16 %v98
  %v522 = vunpack.c.l.b16 %v99
  %v523 = vunpack.c.l.b16 %v100
  %v524 = vunpack.c.l.b16 %v101
  %v525 = vunpack.c.l.b16 %v102
  %v526 = vunpack.c.l.b16 %v103
  %v527 = vunpack.c.l.b16 %v104
  %v528 = vunpack.c.l.b16 %v105
  %v529 = vunpack.c.l.b16 %v106
  %v530 = vunpack.c.l.b16 %v107
  %v531 = vunpack.c.l.b16 %v108
  %v532 = vunpack.c.l.b16 %v109
  %v533 = vunpack.c.l.b16 %v110
  %v534 = vunpack.c.l.b16 %v111
  %v535 = vunpack.c.l.b16 %v112
  %v536 = vunpack.c.l.b16 %v113
  %v537 = vunpack.c.l.b16 %v114
  %v538 = vunpack.c.l.b16 %v115
  %v539 = vunpack.c.l.b16 %v116
  %v540 = vunpack.c.l.b16 %v117
  %v541 = vunpack.c.l.b16 %v118
  %v542 = vunpack.c.l.b16 %v119
  %v543 = vunpack.c.l.b16 %v120
  %v544 = vunpack.c.l.b16 %v121
  %v545 = vunpack.c.l.b16 %v122
  %v546 = vunpack.c.l.b16 %v123
  %v547 = vunpack.c.l.b16 %v124
  %v548 = vunpack.c.l.b16 %v125
  %v549 = vunpack.c.l.b16 %v126
  %v550 = vunpack.c.l.b16 %v127
  %v551 = vunpack.c.l.b16 %v128
  %v552 = vunpack.c.l.b16 %v129
  %v553 = vunpack.c.l.b16 %v130
  %v554 = vunpack.c.l.b16 %v131
  %v555 = vunpack.c.l.b16 %v132
  %v556 = vunpack.c.l.b16 %v133
  %v557 = vunpack.c.l.b16 %v134
  %v558 = vunpack.c.l.b16 %v135
  %v559 = vunpack.c.l.b16 %v136
  %v560 = vunpack.c.l.b16 %v137
  %v561 = vunpack.c.l.b16 %v138
  %v562 = vunpack.c.l.b16 %v139
  %v563 = vunpack.c.l.b16 %v140
  %v564 = vunpack.c.l.b16 %v141
  %v565 = vunpack.c.l.b16 %v142
  %v566 = vunpack.c.l.b16 %v143
  %v567 = vunpack.c.l.b16 %v144
  %v568 = vunpack.c.l.b16 %v145
  %v569 = vunpack.c.l.b16 %v146
  %v570 = vunpack.c.l.b16 %v147
  %v571 = vunpack.c.l.b16 %v148
  %v572 = vunpack.c.l.b16 %v149
  %v573 = vunpack.c.l.b16 %v150
  %v574 = vunpack.c.l.b16 %v151
  %v575 = vunpack.c.l.b16 %v152
  %v576 = vunpack.c.l.b16 %v153
  %v577 = vunpack.c.l.b16 %v154
  %v578 = vunpack.c.l.b16 %v155
  %v579 = vunpack.c.l.b16 %v156
  %v580 = vunpack.c.l.b16 %v157
  %v581 = vunpack.c.l.b16 %v158
  %v582 = vunpack.c.l.b16 %v159
  %v583 = vunpack.c.l.b16 %v160
  %v584 = vunpack.c.l.b16 %v161
  %v585 = vunpack.c.l.b16 %v162
  %v586 = vunpack.c.l.b16 %v163
  %v587 = vunpack.c.l.b16 %v164
  %v588 = vunpack.c.l.b16 %v165
  %v589 = vunpack.c.l.b16 %v166
  %v590 = vunpack.c.l.b16 %v167
  %v591 = vunpack.c.l.b16 %v168
  %v592 = vunpack.c.l.b16 %v169
  %v593 = vunpack.c.l.b16 %v170
  %v594 = vunpack.c.l.b16 %v171
  %v595 = vunpack.c.l.b16 %v172
  %v596 = vunpack.c.l.b16 %v173
  %v597 = vunpack.c.l.b16 %v174
  %v598 = vpack.c.b16 %v471, %v470
  %v599 = vpack.c.b16 %v473, %v472
  %v600 = vpack.c.b16 %v475, %v474
  %v601 = vpack.c.b16 %v477, %v476
  %v602 = vpack.c.b16 %v479, %v478
  %v603 = vpack.c.b16 %v481, %v480
  %v604 = vpack.c.b16 %v483, %v482
  %v605 = vpack.c.b16 %v485, %v484
  %v606 = vpack.c.b16 %v487, %v486
  %v607 = vpack.c.b16 %v489, %v488
  %v608 = vpack.c.b16 %v491, %v490
  %v609 = vpack.c.b16 %v493, %v492
  %v610 = vpack.c.b16 %v495, %v494
  %v611 = vpack.c.b16 %v497, %v496
  %v612 = vpack.c.b16 %v499, %v498
  %v613 = vpack.c.b16 %v501, %v500
  %v614 = vpack.c.b16 %v503, %v502
  %v615 = vpack.c.b16 %v505, %v504
  %v616 = vpack.c.b16 %v507, %v506
  %v617 = vpack.c.b16 %v509, %v508
  %v618 = vpack.c.b16 %v511, %v510
  %v619 = vpack.c.b16 %v513, %v512
  %v620 = vpack.c.b16 %v515, %v514
  %v621 = vpack.c.b16 %v517, %v516
  %v622 = vpack.c.b16 %v519, %v518
  %v623 = vpack.c.b16 %v521, %v520
  %v624 = vpack.c.b16 %v523, %v522
  %v625 = vpack.c.b16 %v525, %v524
  %v626 = vpack.c.b16 %v527, %v526
  %v627 = vpack.c.b16 %v529, %v528
  %v628 = vpack.c.b16 %v531, %v530
  %v629 = vpack.c.b16 %v533, %v532
  %v630 = vpack.c.b16 %v535, %v534
  %v631 = vpack.c.b16 %v537, %v536
  %v632 = vpack.c.b16 %v539, %v538
  %v633 = vpack.c.b16 %v541, %v540
  %v634 = vpack.c.b16 %v543, %v542
  %v635 = vpack.c.b16 %v545, %v544
  %v636 = vpack.c.b16 %v547, %v546
  %v637 = vpack.c.b16 %v549, %v548
  %v638 = vpack.c.b16 %v551, %v550
  %v639 = vpack.c.b16 %v553, %v552
  %v640 = vpack.c.b16 %v555, %v554
  %v641 = vpack.c.b16 %v557, %v556
  %v642 = vpack.c.b16 %v559, %v558
  %v643 = vpack.c.b16 %v561, %v560
  %v644 = vpack.c.b16 %v563, %v562
  %v645 = vpack.c.b16 %v565, %v564
  %v646 = vpack.c.b16 %v567, %v566
  %v647 = vpack.c.b16 %v569, %v568
  %v648 = vpack.c.b16 %v571, %v570
  %v649 = vpack.c.b16 %v573, %v572
  %v650 = vpack.c.b16 %v575, %v574
  %v651 = vpack.c.b16 %v577, %v576
  %v652 = vpack.c.b16 %v579, %v578
  %v653 = vpack.c.b16 %v581, %v580
  %v654 = vpack.c.b16 %v583, %v582
  %v655 = vpack.c.b16 %v585, %v584
  %v656 = vpack.c.b16 %v587, %v586
  %v657 = vpack.c.b16 %v589, %v588
  %v658 = vpack.c.b16 %v591, %v590
  %v659 = vpack.c.b16 %v593, %v592
  %v660 = vpack.c.b16 %v595, %v594
  %v661 = vpack.c.b16 %v597, %v596
  %726 = vmatprep.subr.bf16.mxu0 0
  %727 = vmatpush1.bf16.msra.mxu0 %v605
  %728 = vmatprep.subr.bf16.mxu0 0
  %729 = vmatpush1.bf16.msra.mxu0 %v604
  %730 = vmatprep.subr.bf16.mxu0 0
  %731 = vmatpush1.bf16.msra.mxu0 %v603
  %732 = vmatprep.subr.bf16.mxu0 0
  %733 = vmatpush1.bf16.msra.mxu0 %v602
  %734 = vmatprep.subr.bf16.mxu0 0
  %735 = vmatpush1.bf16.msra.mxu0 %v601
  %736 = vmatprep.subr.bf16.mxu0 0
  %737 = vmatpush1.bf16.msra.mxu0 %v600
  %738 = vmatprep.subr.bf16.mxu0 0
  %739 = vmatpush1.bf16.msra.mxu0 %v599
  %740 = vmatprep.subr.bf16.mxu0 0
  %741 = vmatpush1.bf16.msra.mxu0 %v598
  %742 = vmatprep.subr.bf16.mxu0 0
  %743 = vmatpush2.bf16.msra.mxu0 %v613
  %744 = vmatprep.subr.bf16.mxu0 0
  %745 = vmatpush2.bf16.msra.mxu0 %v612
  %746 = vmatprep.subr.bf16.mxu0 0
  %747 = vmatpush2.bf16.msra.mxu0 %v611
  %748 = vmatprep.subr.bf16.mxu0 0
  %749 = vmatpush2.bf16.msra.mxu0 %v610
  %750 = vmatprep.subr.bf16.mxu0 0
  %751 = vmatpush2.bf16.msra.mxu0 %v609
  %752 = vmatprep.subr.bf16.mxu0 0
  %753 = vmatpush2.bf16.msra.mxu0 %v608
  %754 = vmatprep.subr.bf16.mxu0 0
  %755 = vmatpush2.bf16.msra.mxu0 %v607
  %756 = vmatprep.subr.bf16.mxu0 0
  %757 = vmatpush2.bf16.msra.mxu0 %v606
  %758 = vmatprep.mubr.bf16.mxu0 %v279
  %759 = vmatmul.mubr.bf16.gmra.mxu0 %v278
  %v760 = vpop.f32.mrf.mxu0
  %v761 = vadd.f32 %v180, %v760
  %v762 = vpop.f32.mrf.mxu0
  %v763 = vpop.f32.mrf.mxu0
  %v764 = vadd.f32 %v180, %v763
  %v765 = vpop.f32.mrf.mxu0
  %766 = vmatprep.mubr.bf16.mxu0 %v287
  %767 = vmatmul.mubr.bf16.gmra.mxu0 %v286
  %v768 = vpop.f32.mrf.mxu0
  %v769 = vadd.f32 %v180, %v768
  %v770 = vpop.f32.mrf.mxu0
  %v771 = vpop.f32.mrf.mxu0
  %v772 = vadd.f32 %v180, %v771
  %v773 = vpop.f32.mrf.mxu0
  %774 = vmatprep.mubr.bf16.mxu0 %v295
  %775 = vmatmul.mubr.bf16.gmra.mxu0 %v294
  %v776 = vpop.f32.mrf.mxu0
  %v777 = vadd.f32 %v180, %v776
  %v778 = vpop.f32.mrf.mxu0
  %v779 = vpop.f32.mrf.mxu0
  %v780 = vadd.f32 %v180, %v779
  %v781 = vpop.f32.mrf.mxu0
  %782 = vmatprep.mubr.bf16.mxu0 %v303
  %783 = vmatmul.mubr.bf16.gmra.mxu0 %v302
  %v784 = vpop.f32.mrf.mxu0
  %v785 = vadd.f32 %v180, %v784
  %v786 = vpop.f32.mrf.mxu0
  %v787 = vpop.f32.mrf.mxu0
  %v788 = vadd.f32 %v180, %v787
  %v789 = vpop.f32.mrf.mxu0
  %790 = vdwg.mxu0
  %791 = vmatprep.subr.bf16.mxu0 0
  %792 = vmatpush1.bf16.msra.mxu0 %v621
  %793 = vmatprep.subr.bf16.mxu0 0
  %794 = vmatpush1.bf16.msra.mxu0 %v620
  %795 = vmatprep.subr.bf16.mxu0 0
  %796 = vmatpush1.bf16.msra.mxu0 %v619
  %797 = vmatprep.subr.bf16.mxu0 0
  %798 = vmatpush1.bf16.msra.mxu0 %v618
  %799 = vmatprep.subr.bf16.mxu0 0
  %800 = vmatpush1.bf16.msra.mxu0 %v617
  %801 = vmatprep.subr.bf16.mxu0 0
  %802 = vmatpush1.bf16.msra.mxu0 %v616
  %803 = vmatprep.subr.bf16.mxu0 0
  %804 = vmatpush1.bf16.msra.mxu0 %v615
  %805 = vmatprep.subr.bf16.mxu0 0
  %806 = vmatpush1.bf16.msra.mxu0 %v614
  %807 = vmatprep.subr.bf16.mxu0 0
  %808 = vmatpush2.bf16.msra.mxu0 %v629
  %809 = vmatprep.subr.bf16.mxu0 0
  %810 = vmatpush2.bf16.msra.mxu0 %v628
  %811 = vmatprep.subr.bf16.mxu0 0
  %812 = vmatpush2.bf16.msra.mxu0 %v627
  %813 = vmatprep.subr.bf16.mxu0 0
  %814 = vmatpush2.bf16.msra.mxu0 %v626
  %815 = vmatprep.subr.bf16.mxu0 0
  %816 = vmatpush2.bf16.msra.mxu0 %v625
  %817 = vmatprep.subr.bf16.mxu0 0
  %818 = vmatpush2.bf16.msra.mxu0 %v624
  %819 = vmatprep.subr.bf16.mxu0 0
  %820 = vmatpush2.bf16.msra.mxu0 %v623
  %821 = vmatprep.subr.bf16.mxu0 0
  %822 = vmatpush2.bf16.msra.mxu0 %v622
  %823 = vmatprep.mubr.bf16.mxu0 %v281
  %824 = vmatmul.mubr.bf16.gmra.mxu0 %v280
  %v825 = vpop.f32.mrf.mxu0
  %v826 = vadd.f32 %v761, %v825
  %v827 = vpop.f32.mrf.mxu0
  %v828 = vpop.f32.mrf.mxu0
  %v829 = vadd.f32 %v764, %v828
  %v830 = vpop.f32.mrf.mxu0
  %831 = vmatprep.mubr.bf16.mxu0 %v289
  %832 = vmatmul.mubr.bf16.gmra.mxu0 %v288
  %v833 = vpop.f32.mrf.mxu0
  %v834 = vadd.f32 %v769, %v833
  %v835 = vpop.f32.mrf.mxu0
  %v836 = vpop.f32.mrf.mxu0
  %v837 = vadd.f32 %v772, %v836
  %v838 = vpop.f32.mrf.mxu0
  %839 = vmatprep.mubr.bf16.mxu0 %v297
  %840 = vmatmul.mubr.bf16.gmra.mxu0 %v296
  %v841 = vpop.f32.mrf.mxu0
  %v842 = vadd.f32 %v777, %v841
  %v843 = vpop.f32.mrf.mxu0
  %v844 = vpop.f32.mrf.mxu0
  %v845 = vadd.f32 %v780, %v844
  %v846 = vpop.f32.mrf.mxu0
  %847 = vmatprep.mubr.bf16.mxu0 %v305
  %848 = vmatmul.mubr.bf16.gmra.mxu0 %v304
  %v849 = vpop.f32.mrf.mxu0
  %v850 = vadd.f32 %v785, %v849
  %v851 = vpop.f32.mrf.mxu0
  %v852 = vpop.f32.mrf.mxu0
  %v853 = vadd.f32 %v788, %v852
  %v854 = vpop.f32.mrf.mxu0
  %855 = vdwg.mxu0
  %856 = vmatprep.subr.bf16.mxu0 0
  %857 = vmatpush1.bf16.msra.mxu0 %v637
  %858 = vmatprep.subr.bf16.mxu0 0
  %859 = vmatpush1.bf16.msra.mxu0 %v636
  %860 = vmatprep.subr.bf16.mxu0 0
  %861 = vmatpush1.bf16.msra.mxu0 %v635
  %862 = vmatprep.subr.bf16.mxu0 0
  %863 = vmatpush1.bf16.msra.mxu0 %v634
  %864 = vmatprep.subr.bf16.mxu0 0
  %865 = vmatpush1.bf16.msra.mxu0 %v633
  %866 = vmatprep.subr.bf16.mxu0 0
  %867 = vmatpush1.bf16.msra.mxu0 %v632
  %868 = vmatprep.subr.bf16.mxu0 0
  %869 = vmatpush1.bf16.msra.mxu0 %v631
  %870 = vmatprep.subr.bf16.mxu0 0
  %871 = vmatpush1.bf16.msra.mxu0 %v630
  %872 = vmatprep.subr.bf16.mxu0 0
  %873 = vmatpush2.bf16.msra.mxu0 %v645
  %874 = vmatprep.subr.bf16.mxu0 0
  %875 = vmatpush2.bf16.msra.mxu0 %v644
  %876 = vmatprep.subr.bf16.mxu0 0
  %877 = vmatpush2.bf16.msra.mxu0 %v643
  %878 = vmatprep.subr.bf16.mxu0 0
  %879 = vmatpush2.bf16.msra.mxu0 %v642
  %880 = vmatprep.subr.bf16.mxu0 0
  %881 = vmatpush2.bf16.msra.mxu0 %v641
  %882 = vmatprep.subr.bf16.mxu0 0
  %883 = vmatpush2.bf16.msra.mxu0 %v640
  %884 = vmatprep.subr.bf16.mxu0 0
  %885 = vmatpush2.bf16.msra.mxu0 %v639
  %886 = vmatprep.subr.bf16.mxu0 0
  %887 = vmatpush2.bf16.msra.mxu0 %v638
  %888 = vmatprep.mubr.bf16.mxu0 %v283
  %889 = vmatmul.mubr.bf16.gmra.mxu0 %v282
  %v890 = vpop.f32.mrf.mxu0
  %v891 = vadd.f32 %v826, %v890
  %v892 = vpop.f32.mrf.mxu0
  %v893 = vpop.f32.mrf.mxu0
  %v894 = vadd.f32 %v829, %v893
  %v895 = vpop.f32.mrf.mxu0
  %896 = vmatprep.mubr.bf16.mxu0 %v291
  %897 = vmatmul.mubr.bf16.gmra.mxu0 %v290
  %v898 = vpop.f32.mrf.mxu0
  %v899 = vadd.f32 %v834, %v898
  %v900 = vpop.f32.mrf.mxu0
  %v901 = vpop.f32.mrf.mxu0
  %v902 = vadd.f32 %v837, %v901
  %v903 = vpop.f32.mrf.mxu0
  %904 = vmatprep.mubr.bf16.mxu0 %v299
  %905 = vmatmul.mubr.bf16.gmra.mxu0 %v298
  %v906 = vpop.f32.mrf.mxu0
  %v907 = vadd.f32 %v842, %v906
  %v908 = vpop.f32.mrf.mxu0
  %v909 = vpop.f32.mrf.mxu0
  %v910 = vadd.f32 %v845, %v909
  %v911 = vpop.f32.mrf.mxu0
  %912 = vmatprep.mubr.bf16.mxu0 %v307
  %913 = vmatmul.mubr.bf16.gmra.mxu0 %v306
  %v914 = vpop.f32.mrf.mxu0
  %v915 = vadd.f32 %v850, %v914
  %v916 = vpop.f32.mrf.mxu0
  %v917 = vpop.f32.mrf.mxu0
  %v918 = vadd.f32 %v853, %v917
  %v919 = vpop.f32.mrf.mxu0
  %920 = vdwg.mxu0
  %921 = vmatprep.subr.bf16.mxu0 0
  %922 = vmatpush1.bf16.msra.mxu0 %v653
  %923 = vmatprep.subr.bf16.mxu0 0
  %924 = vmatpush1.bf16.msra.mxu0 %v652
  %925 = vmatprep.subr.bf16.mxu0 0
  %926 = vmatpush1.bf16.msra.mxu0 %v651
  %927 = vmatprep.subr.bf16.mxu0 0
  %928 = vmatpush1.bf16.msra.mxu0 %v650
  %929 = vmatprep.subr.bf16.mxu0 0
  %930 = vmatpush1.bf16.msra.mxu0 %v649
  %931 = vmatprep.subr.bf16.mxu0 0
  %932 = vmatpush1.bf16.msra.mxu0 %v648
  %933 = vmatprep.subr.bf16.mxu0 0
  %934 = vmatpush1.bf16.msra.mxu0 %v647
  %935 = vmatprep.subr.bf16.mxu0 0
  %936 = vmatpush1.bf16.msra.mxu0 %v646
  %937 = vmatprep.subr.bf16.mxu0 0
  %938 = vmatpush2.bf16.msra.mxu0 %v661
  %939 = vmatprep.subr.bf16.mxu0 0
  %940 = vmatpush2.bf16.msra.mxu0 %v660
  %941 = vmatprep.subr.bf16.mxu0 0
  %942 = vmatpush2.bf16.msra.mxu0 %v659
  %943 = vmatprep.subr.bf16.mxu0 0
  %944 = vmatpush2.bf16.msra.mxu0 %v658
  %945 = vmatprep.subr.bf16.mxu0 0
  %946 = vmatpush2.bf16.msra.mxu0 %v657
  %947 = vmatprep.subr.bf16.mxu0 0
  %948 = vmatpush2.bf16.msra.mxu0 %v656
  %949 = vmatprep.subr.bf16.mxu0 0
  %950 = vmatpush2.bf16.msra.mxu0 %v655
  %951 = vmatprep.subr.bf16.mxu0 0
  %952 = vmatpush2.bf16.msra.mxu0 %v654
  %953 = vmatprep.mubr.bf16.mxu0 %v285
  %954 = vmatmul.mubr.bf16.gmra.mxu0 %v284
  %v955 = vpop.f32.mrf.mxu0
  %v956 = vadd.f32 %v891, %v955
  %v957 = vpop.f32.mrf.mxu0
  %v958 = vpop.f32.mrf.mxu0
  %v959 = vadd.f32 %v894, %v958
  %v960 = vpop.f32.mrf.mxu0
  %961 = vmatprep.mubr.bf16.mxu0 %v293
  %962 = vmatmul.mubr.bf16.gmra.mxu0 %v292
  %v963 = vpop.f32.mrf.mxu0
  %v964 = vadd.f32 %v899, %v963
  %v965 = vpop.f32.mrf.mxu0
  %v966 = vpop.f32.mrf.mxu0
  %v967 = vadd.f32 %v902, %v966
  %v968 = vpop.f32.mrf.mxu0
  %969 = vmatprep.mubr.bf16.mxu0 %v301
  %970 = vmatmul.mubr.bf16.gmra.mxu0 %v300
  %v971 = vpop.f32.mrf.mxu0
  %v972 = vadd.f32 %v907, %v971
  %v973 = vpop.f32.mrf.mxu0
  %v974 = vpop.f32.mrf.mxu0
  %v975 = vadd.f32 %v910, %v974
  %v976 = vpop.f32.mrf.mxu0
  %977 = vmatprep.mubr.bf16.mxu0 %v309
  %978 = vmatmul.mubr.bf16.gmra.mxu0 %v308
  %v979 = vpop.f32.mrf.mxu0
  %v980 = vadd.f32 %v915, %v979
  %v981 = vpop.f32.mrf.mxu0
  %v982 = vpop.f32.mrf.mxu0
  %v983 = vadd.f32 %v918, %v982
  %v984 = vpop.f32.mrf.mxu0
  %985 = vdwg.mxu0
  %vm986 = vcmask 64512
  %987 = vst.msk [vmem:[%s3] sm:$0xff] %vm986, %v956
  %988 = vst.msk [vmem:[%s3 + $0x8] sm:$0xff] %vm986, %v959
  %989 = vst.msk [vmem:[%s3 + $0x10] sm:$0xff] %vm986, %v964
  %990 = vst.msk [vmem:[%s3 + $0x18] sm:$0xff] %vm986, %v967
  %991 = vst.msk [vmem:[%s3 + $0x20] sm:$0xff] %vm986, %v972
  %992 = vst.msk [vmem:[%s3 + $0x28] sm:$0xff] %vm986, %v975
  %993 = vst.msk [vmem:[%s3 + $0x30] sm:$0xff] %vm986, %v980
  %994 = vst.msk [vmem:[%s3 + $0x38] sm:$0xff] %vm986, %v983
  // Predicated region
  $region14: #{multiscale_discriminator_forward.21} parent=0 // pred_check
    _
  $region15: #{multiscale_discriminator_forward.21} parent=0 // pred_check_branch
    %996 = sbr.rel (0) target = $region17
  $region16: #{multiscale_discriminator_forward.21} parent=0 // pred_region
    _
  $region17: #{multiscale_discriminator_forward.21} parent=0 // pred_fallthru
    _
  // Predicated region
  $region18: #{multiscale_discriminator_forward.21} parent=0 // pred_check
    _
  $region19: #{multiscale_discriminator_forward.21} parent=0 // pred_check_branch
    %998 = sbr.rel (0) target = $region21
  $region20: #{multiscale_discriminator_forward.21} parent=0 // pred_region
    _
  $region21: #{multiscale_discriminator_forward.21} parent=0 // pred_fallthru
    _

</llo_original>
